<compile_context>
chip_gen: v7x
topology: tpu7x:2x2x1
jax: 0.10.0
libtpu: 0.0.40
codegen_flags: <defaults>
</compile_context>

<pallas_src>
import functools

import jax
import jax.numpy as jnp
from jax.experimental import pallas as pl
from jax.experimental.pallas import tpu as pltpu

EPS = 1e-2          # projection z-clamp (SynSin convention)
OFFSCREEN = 1e6     # xy sentinel for behind-camera points -> splat weight 0


# --------------------------------------------------------------------------
# Tile-size helpers (device aware)
# --------------------------------------------------------------------------
def _vmem_capacity_bytes():
    try:
        return int(pltpu.get_tpu_info().vmem_capacity_bytes)
    except Exception:
        return 128 << 20   # v5e / v6e default


def _round_tile(t, full):
    """Clamp a requested tile to a lane-friendly divisor of `full`."""
    t = min(int(t), full)
    if t >= full:
        return full
    t = max(128, (t // 128) * 128)
    if full % t != 0:
        # TODO(synk): pad N/P to a tile multiple for arbitrary H*W instead of
        #             falling back to a single full-size tile.
        return full
    return t


def _splat_tiles(N, P, n_tile, p_tile):
    if n_tile is None or p_tile is None:
        if _vmem_capacity_bytes() <= (64 << 20):   # v7x-class: 64 MiB VMEM / TC
            dn, dp = 1024, 512
        else:                                      # v5e / v6e: 128 MiB VMEM
            dn, dp = 2048, 1024
        n_tile = dn if n_tile is None else n_tile
        p_tile = dp if p_tile is None else p_tile
    return _round_tile(n_tile, N), _round_tile(p_tile, P)


# --------------------------------------------------------------------------
# Pallas kernels
# --------------------------------------------------------------------------
def _conv1x1_kernel(x_ref, w_ref, b_ref, o_ref):
    # x: (1, Cin, Nt), w: (Cout, Cin), b: (Cout, 1) -> o: (1, Cout, Nt)
    o_ref[0] = jnp.dot(w_ref[...], x_ref[0],
                       preferred_element_type=jnp.float32) + b_ref[...]


def conv1x1(x, w, b, n_tile=4096):
    """1x1 conv over the channel dim.  x: (G, Cin, N) -> (G, Cout, N)."""
    G, Cin, N = x.shape
    Cout = w.shape[0]
    nt = _round_tile(n_tile, N)
    return pl.pallas_call(
        _conv1x1_kernel,
        out_shape=jax.ShapeDtypeStruct((G, Cout, N), jnp.float32),
        grid_spec=pltpu.PrefetchScalarGridSpec(
            num_scalar_prefetch=0,
            grid=(G, N // nt),
            in_specs=[
                pl.BlockSpec((1, Cin, nt), lambda g, n: (g, 0, n)),
                pl.BlockSpec((Cout, Cin), lambda g, n: (0, 0)),
                pl.BlockSpec((Cout, 1), lambda g, n: (0, 0)),
            ],
            out_specs=pl.BlockSpec((1, Cout, nt), lambda g, n: (g, 0, n)),
        ),
        compiler_params=pltpu.CompilerParams(
            dimension_semantics=("parallel", "parallel")),
    )(x, w, b)


def _warp_kernel(grid_ref, depth_ref, a_ref, t_ref, sampler_ref):
    # grid: (3, Nt) rows [x, y, 1]   depth: (1, 1, Nt)
    # a: (1, 3, 3) = M[:3,:3]        t: (1, 3, 1) = M[:3,3]
    pts = grid_ref[...] * depth_ref[0]                       # (3, Nt): [xd, yd, d]
    proj = jnp.dot(a_ref[0], pts,
                   preferred_element_type=jnp.float32) + t_ref[0]   # (3, Nt)
    z = proj[2:3, :]                                         # (1, Nt)
    zsafe = jnp.where(jnp.abs(z) < EPS, EPS, z)
    xy = proj[0:2, :] / zsafe
    # Behind-camera / near-plane points: push xy far outside any splat radius so
    # their weights vanish downstream (replaces the per-(N,P) valid mask).
    xy = jnp.where(z <= EPS, OFFSCREEN, xy)
    sampler_ref[0] = jnp.concatenate([xy, z], axis=0)        # (3, Nt)


def warp_points(depths, A, t, grid3, n_tile=4096):
    """Per-(b,v) unproject + reproject.  depths: (G,1,N) -> sampler (G,3,N)."""
    G, _, N = depths.shape
    nt = _round_tile(n_tile, N)
    return pl.pallas_call(
        _warp_kernel,
        out_shape=jax.ShapeDtypeStruct((G, 3, N), jnp.float32),
        grid_spec=pltpu.PrefetchScalarGridSpec(
            num_scalar_prefetch=0,
            grid=(G, N // nt),
            in_specs=[
                pl.BlockSpec((3, nt), lambda g, n: (0, n)),
                pl.BlockSpec((1, 1, nt), lambda g, n: (g, 0, n)),
                pl.BlockSpec((1, 3, 3), lambda g, n: (g, 0, 0)),
                pl.BlockSpec((1, 3, 1), lambda g, n: (g, 0, 0)),
            ],
            out_specs=pl.BlockSpec((1, 3, nt), lambda g, n: (g, 0, n)),
        ),
        compiler_params=pltpu.CompilerParams(
            dimension_semantics=("parallel", "parallel")),
    )(grid3, depths, A, t)


def _splat_kernel(sampler_ref, featz_ref, pixs_ref, out_ref, acc_ref, *, inv_r):
    # grid = (g, p_tile, n_tile); n_tile is the reduction axis (innermost).
    n_idx = pl.program_id(2)

    @pl.when(n_idx == 0)
    def _init():
        acc_ref[...] = jnp.zeros_like(acc_ref)

    s = sampler_ref[0]                       # (3, Nt) rows [x, y, z]
    # Point coords scaled by 1/radius here (O(Nt)); pixel coords were scaled once
    # per call in the wrapper (O(P)).  This removes the per-(Nt,Pt) d2*inv_r2
    # multiply from the VALU-bound inner loop.
    xs = s[0:1, :].T * inv_r                 # (Nt, 1)
    ys = s[1:2, :].T * inv_r
    pxs = pixs_ref[0:1, :]                   # (1, Pt), pre-scaled
    pys = pixs_ref[1:2, :]
    dx = xs - pxs                            # (Nt, Pt)
    dy = ys - pys
    t = 1.0 - (dx * dx + dy * dy)            # 1 - d^2/r^2: no sqrt, no divide
    w = jnp.maximum(t, 0.0)
    w = w * w                                # squared-distance falloff
    # One MXU pass accumulates weighted features, weighted depth AND the
    # per-pixel weight sum (last featz row is all-ones).
    acc_ref[...] += jnp.dot(featz_ref[0], w, preferred_element_type=jnp.float32)

    @pl.when(n_idx == pl.num_programs(2) - 1)
    def _finalize():
        acc = acc_ref[...]                   # (Cz, Pt)
        cz = acc.shape[0]
        inv = pl.reciprocal(acc[cz - 1:cz, :] + 1e-8, approx=True)   # (1, Pt), EUP
        out_ref[0] = acc[:cz - 1, :] * inv


def splat(sampler, payload_parts, pix, radius, *, n_tile=None, p_tile=None):
    """Soft point splatting.

    sampler: (G, 3, N) rows [x, y, z];  payload_parts: sequence of (G, Ci, N)
    channel rows to splat (features and/or depth);  pix: (2, P) target-pixel
    NDC coords.  Returns the weight-normalized splat (G, sum(Ci), P).
    """
    parts = list(payload_parts)
    G, _, N = sampler.shape
    C = sum(int(p.shape[1]) for p in parts)
    P = pix.shape[1]
    n_tile, p_tile = _splat_tiles(N, P, n_tile, p_tile)

    # Single concat: payload channels + all-ones row (weight-sum rides the MXU).
    ones = jnp.ones((G, 1, N), jnp.float32)
    featz = jnp.concatenate(parts + [ones], axis=1)      # (G, C+1, N)
    cz = C + 1

    inv_r = 1.0 / float(radius)
    pixs = pix * inv_r                                    # pre-scaled pixel coords

    # Scoped-VMEM budget: ~8 live (Nt,Pt) f32 temporaries + double-buffered I/O
    # tiles + accumulator + Mosaic scratch headroom.
    need = 4 * (8 * n_tile * p_tile
                + 2 * (3 + cz) * n_tile
                + 2 * (8 + cz) * p_tile
                + cz * p_tile) + (4 << 20)
    phys = _vmem_capacity_bytes()
    vmem_limit = int(min(max(need, 32 << 20), phys - (16 << 20)))

    kern = functools.partial(_splat_kernel, inv_r=inv_r)
    return pl.pallas_call(
        kern,
        out_shape=jax.ShapeDtypeStruct((G, C, P), jnp.float32),
        grid_spec=pltpu.PrefetchScalarGridSpec(
            num_scalar_prefetch=0,
            grid=(G, P // p_tile, N // n_tile),
            in_specs=[
                pl.BlockSpec((1, 3, n_tile), lambda g, p, n: (g, 0, n)),
                pl.BlockSpec((1, cz, n_tile), lambda g, p, n: (g, 0, n)),
                pl.BlockSpec((2, p_tile), lambda g, p, n: (0, p)),
            ],
            out_specs=pl.BlockSpec((1, C, p_tile), lambda g, p, n: (g, 0, p)),
            scratch_shapes=[pltpu.VMEM((cz, p_tile), jnp.float32)],
        ),
        compiler_params=pltpu.CompilerParams(
            dimension_semantics=("parallel", "parallel", "arbitrary"),
            vmem_limit_bytes=vmem_limit),
    )(sampler, featz, pixs)


# --------------------------------------------------------------------------
# Plain-JAX glue reproducing BaseModule's control flow
# --------------------------------------------------------------------------
def make_grids(H, W):
    xs = (jnp.arange(W, dtype=jnp.float32) + 0.5) / W * 2.0 - 1.0
    ys = (jnp.arange(H, dtype=jnp.float32) + 0.5) / H * 2.0 - 1.0
    gx, gy = jnp.meshgrid(xs, ys)
    x = gx.reshape(1, -1)
    y = gy.reshape(1, -1)
    one = jnp.ones_like(x)
    grid3 = jnp.concatenate([x, y, one], axis=0)   # (3, N): [x, y, 1] (x depth)
    pix = grid3[:2]                                # (2, N): target-pixel coords
    return grid3, pix


def compute_K(K, ori_shape, fs_shape):
    hc, wc = ori_shape
    hf, wf = fs_shape
    sh, sw = hf / hc, wf / wc
    sK = K
    sK = sK.at[:, 0, :].multiply(sw)
    sK = sK.at[:, 1, :].multiply(sh)
    return sK


def base_module_forward(params, depths, colors, K, src_RTs, src_RTinvs,
                        dst_RTs, dst_RTinvs, opt, visualize=False):
    del src_RTs, dst_RTinvs   # unused by the projection math (kept for API parity)
    B, V, Cc, H, W = colors.shape
    G, N = B * V, H * W
    hi = jax.lax.Precision.HIGHEST
    grid3, pix = make_grids(H, W)

    # ---- encoder (ColorFeats stand-in: frozen 1x1 conv) ----
    colors_flat = colors.reshape(G, Cc, N)
    feats_flat = conv1x1(colors_flat, params["enc_w"], params["enc_b"])
    Cf = feats_flat.shape[1]

    # depth nearest-resize to the feature resolution is identity here (same H,W)
    depths_flat = depths.reshape(G, 1, N)

    # ---- compute_K + combined projection matrix  M = K @ RT_dst @ RTinv_src @ K^-1
    sK = compute_K(K, (H, W), (H, W))
    sK_inv = jnp.linalg.inv(sK)
    m_dst = jnp.einsum("bij,bjk->bik", sK, dst_RTs.reshape(B, 4, 4), precision=hi)
    m_src = jnp.einsum("bvij,bjk->bvik", src_RTinvs, sK_inv, precision=hi)
    M = jnp.einsum("bij,bvjk->bvik", m_dst, m_src, precision=hi).reshape(G, 4, 4)
    A, t = M[:, :3, :3], M[:, :3, 3:4]

    # ---- warp once; shared by every splat pass (depends only on depth/cameras)
    sampler = warp_points(depths_flat, A, t, grid3)          # (G, 3, N)
    z = sampler[:, 2:3, :]

    radius, fradius = float(opt["radius"]), float(opt["fradius"])
    nt, pt = opt.get("splat_n_tile"), opt.get("splat_p_tile")

    if not visualize:
        # forward() never consumes the colors splat when visualize=False.
        out = splat(sampler, (feats_flat, z), pix, fradius, n_tile=nt, p_tile=pt)
        pf1 = out[:, :Cf].reshape(B, V, Cf, H, W)
        pd1 = out[:, Cf:Cf + 1].reshape(B, V, 1, H, W)
        pd0 = pc0 = None
    elif radius == fradius:
        # Shared weight matrix: splat colors + features + depth in one pass.
        out = splat(sampler, (colors_flat, feats_flat, z), pix, fradius,
                    n_tile=nt, p_tile=pt)
        pc0 = out[:, :Cc].reshape(B, V, Cc, H, W)
        pf1 = out[:, Cc:Cc + Cf].reshape(B, V, Cf, H, W)
        pd1 = out[:, Cc + Cf:Cc + Cf + 1].reshape(B, V, 1, H, W)
        pd0 = pd1
    else:
        out0 = splat(sampler, (colors_flat, z), pix, radius, n_tile=nt, p_tile=pt)
        pc0 = out0[:, :Cc].reshape(B, V, Cc, H, W)
        pd0 = out0[:, Cc:Cc + 1].reshape(B, V, 1, H, W)
        out1 = splat(sampler, (feats_flat, z), pix, fradius, n_tile=nt, p_tile=pt)
        pf1 = out1[:, :Cf].reshape(B, V, Cf, H, W)
        pd1 = out1[:, Cf:Cf + 1].reshape(B, V, 1, H, W)

    # ---- merge_net stand-in: visibility-weighted mean over source views ----
    # TODO(synk): merge_net is a subclass hook (init_fusion_module is `pass`).
    vis = (pd1 > 0.0).astype(jnp.float32)
    merged = jnp.sum(pf1 * vis, axis=1) / (jnp.sum(vis, axis=1) + 1e-8)  # (B,Cf,H,W)

    # ---- out stand-in: 1x1 conv to RGB ----
    # TODO(synk): self.out is a subclass hook (init_decoder is `pass`).
    final = conv1x1(merged.reshape(B, Cf, N),
                    params["out_w"], params["out_b"]).reshape(B, 3, H, W)

    if visualize:
        mask = (jnp.sum(pd0, axis=1) > 0.0).astype(jnp.float32)   # (B,1,H,W)
        return final, mask, pc0
    return final


# --------------------------------------------------------------------------
# Pure-JAX reference (for correctness check at toy size)
# --------------------------------------------------------------------------
def base_module_forward_ref(params, depths, colors, K, src_RTs, src_RTinvs,
                            dst_RTs, dst_RTinvs, opt):
    hi = jax.lax.Precision.HIGHEST
    B, V, Cc, H, W = colors.shape
    G, N = B * V, H * W
    grid3, pix = make_grids(H, W)

    x = colors.reshape(G, Cc, N)
    feats = jnp.einsum("oc,gcn->gon", params["enc_w"], x,
                       precision=hi) + params["enc_b"][None]
    Cf = feats.shape[1]
    d = depths.reshape(G, 1, N)

    sK = compute_K(K, (H, W), (H, W))
    sK_inv = jnp.linalg.inv(sK)
    m_dst = jnp.einsum("bij,bjk->bik", sK, dst_RTs.reshape(B, 4, 4), precision=hi)
    m_src = jnp.einsum("bvij,bjk->bvik", src_RTinvs, sK_inv, precision=hi)
    M = jnp.einsum("bij,bvjk->bvik", m_dst, m_src, precision=hi).reshape(G, 4, 4)

    pts = grid3[None] * d
    proj = jnp.einsum("gij,gjn->gin", M[:, :3, :3], pts,
                      precision=hi) + M[:, :3, 3:4]
    z = proj[:, 2:3]
    zsafe = jnp.where(jnp.abs(z) < EPS, EPS, z)
    xy = jnp.where(z <= EPS, OFFSCREEN, proj[:, :2] / zsafe)

    dx = xy[:, 0, :, None] - pix[0][None, None, :]       # (G, N, P)
    dy = xy[:, 1, :, None] - pix[1][None, None, :]
    d2 = dx * dx + dy * dy
    r = float(opt["fradius"])
    w = jnp.maximum(1.0 - d2 / (r * r), 0.0) ** 2

    payload = jnp.concatenate([feats, z], axis=1)        # (G, Cf+1, N)
    num = jnp.einsum("gcn,gnp->gcp", payload, w, precision=hi)
    den = jnp.sum(w, axis=1)[:, None, :] + 1e-8
    out = num / den
    pf = out[:, :Cf].reshape(B, V, Cf, H, W)
    pd = out[:, Cf:].reshape(B, V, 1, H, W)

    vis = (pd > 0.0).astype(jnp.float32)
    merged = jnp.sum(pf * vis, axis=1) / (jnp.sum(vis, axis=1) + 1e-8)
    final = jnp.einsum("oc,bcn->bon", params["out_w"],
                       merged.reshape(B, Cf, N), precision=hi) + params["out_b"][None]
    return final.reshape(B, 3, H, W)


# --------------------------------------------------------------------------
if __name__ == "__main__":
    B, V, H, W = 2, 2, 16, 16
    Cc, Cf = 3, 8

    key = jax.random.PRNGKey(0)
    k1, k2, k3, k4, k5, k6 = jax.random.split(key, 6)

    colors = jax.random.uniform(k1, (B, V, Cc, H, W), jnp.float32)
    depths = jax.random.uniform(k2, (B, V, 1, H, W), jnp.float32,
                                minval=1.0, maxval=3.0)

    # Intrinsics expressed in the NDC convention used by the pixel grid.
    K = jnp.tile(jnp.array([[1.2, 0.0, 0.0, 0.0],
                            [0.0, 1.2, 0.0, 0.0],
                            [0.0, 0.0, 1.0, 0.0],
                            [0.0, 0.0, 0.0, 1.0]], jnp.float32)[None], (B, 1, 1))

    def make_rts(k, n):
        tvec = 0.05 * jax.random.normal(k, (n, 3), jnp.float32)
        rt = jnp.tile(jnp.eye(4, dtype=jnp.float32)[None], (n, 1, 1))
        return rt.at[:, :3, 3].set(tvec)

    src_RTs = make_rts(k3, B * V).reshape(B, V, 4, 4)
    src_RTinvs = jnp.linalg.inv(src_RTs)
    dst_RTs = make_rts(k4, B).reshape(B, 1, 4, 4)
    dst_RTinvs = jnp.linalg.inv(dst_RTs)

    params = dict(
        enc_w=0.02 * jax.random.normal(k5, (Cf, Cc), jnp.float32),
        enc_b=jnp.zeros((Cf, 1), jnp.float32),
        out_w=0.02 * jax.random.normal(k6, (3, Cf), jnp.float32),
        out_b=jnp.zeros((3, 1), jnp.float32),
    )
    # Small splat tiles so the toy run exercises the multi-tile accumulation path
    # (grid = (4, 2, 2)); at real resolutions leave them None for auto-sizing.
    opt = dict(radius=0.25, fradius=0.25, splat_n_tile=128, splat_p_tile=128)

    fwd = jax.jit(lambda p, d, c, k_, srt, srti, drt, drti:
                  base_module_forward(p, d, c, k_, srt, srti, drt, drti, opt))
    final = fwd(params, depths, colors, K, src_RTs, src_RTinvs, dst_RTs, dst_RTinvs)
    jax.block_until_ready(final)
    assert final.shape == (B, 3, H, W) and final.dtype == jnp.float32

    # Pure-JAX reference check (loose tolerance: approx reciprocal + MXU rounding).
    final_ref = base_module_forward_ref(params, depths, colors, K, src_RTs,
                                        src_RTinvs, dst_RTs, dst_RTinvs, opt)
    err = float(jnp.max(jnp.abs(final - final_ref)))
    scale = float(jnp.max(jnp.abs(final_ref)))
    assert err <= 2e-3 + 5e-2 * scale, f"kernel/ref mismatch: {err} (scale {scale})"

    # Coverage: visualize=True path (combined colors+feats splat, radius==fradius).
    final_v, mask_v, prj_colors = base_module_forward(
        params, depths, colors, K, src_RTs, src_RTinvs, dst_RTs, dst_RTinvs, opt,
        visualize=True)
    jax.block_until_ready((final_v, mask_v, prj_colors))
    assert final_v.shape == (B, 3, H, W)
    assert mask_v.shape == (B, 1, H, W)
    assert prj_colors.shape == (B, V, Cc, H, W)
    assert bool(jnp.all(jnp.isfinite(final_v)))

    print("KERNEL_OK")
</pallas_src>

<mosaic_0001>
module attributes {stable_mosaic.version = 11 : i64} {
  func.func @_warp_kernel(%arg0: i32, %arg1: i32, %arg2: memref<3x256xf32, #tpu.memory_space<vmem>>, %arg3: memref<1x1x256xf32, #tpu.memory_space<vmem>>, %arg4: memref<1x3x3xf32, #tpu.memory_space<vmem>>, %arg5: memref<1x3x1xf32, #tpu.memory_space<vmem>>, %arg6: memref<1x3x256xf32, #tpu.memory_space<vmem>>) attributes {dimension_semantics = [#tpu.dimension_semantics<parallel>, #tpu.dimension_semantics<parallel>], iteration_bounds = array<i64: 4, 1>, scalar_prefetch = 0 : i64, scratch_operands = 0 : i64, tpu.core_type = #tpu.core_type<tc>, window_params = [{transform_indices = @transform_0, window_bounds = array<i64: 3, 256>}, {transform_indices = @transform_1, window_bounds = array<i64: 1, 1, 256>}, {transform_indices = @transform_2, window_bounds = array<i64: 1, 3, 3>}, {transform_indices = @transform_3, window_bounds = array<i64: 1, 3, 1>}, {transform_indices = @transform_4, window_bounds = array<i64: 1, 3, 256>}]} {
    %c0 = arith.constant 0 : index
    %c0_0 = arith.constant 0 : index
    %0 = vector.load %arg2[%c0, %c0_0] : memref<3x256xf32, #tpu.memory_space<vmem>>, vector<3x256xf32>
    %c0_1 = arith.constant 0 : index
    %c0_2 = arith.constant 0 : index
    %c0_3 = arith.constant 0 : index
    %1 = vector.load %arg3[%c0_1, %c0_2, %c0_3] : memref<1x1x256xf32, #tpu.memory_space<vmem>>, vector<1x1x256xf32>
    %2 = vector.shape_cast %1 : vector<1x1x256xf32> to vector<1x256xf32>
    %3 = vector.broadcast %2 : vector<1x256xf32> to vector<3x256xf32>
    %4 = arith.mulf %0, %3 : vector<3x256xf32>
    %c0_4 = arith.constant 0 : index
    %c0_5 = arith.constant 0 : index
    %c0_6 = arith.constant 0 : index
    %5 = vector.load %arg4[%c0_4, %c0_5, %c0_6] : memref<1x3x3xf32, #tpu.memory_space<vmem>>, vector<1x3x3xf32>
    %6 = vector.shape_cast %5 : vector<1x3x3xf32> to vector<3x3xf32>
    %cst = arith.constant dense<0.000000e+00> : vector<3x256xf32>
    %7 = tpu.matmul %6, %4, %cst {dimension_numbers = #tpu.dot_dimension_numbers<[1], [0], [0], [1], [0, 0, 1, 1], [], []>} : vector<3x3xf32>, vector<3x256xf32>, vector<3x256xf32> -> vector<3x256xf32>
    %c0_7 = arith.constant 0 : index
    %c0_8 = arith.constant 0 : index
    %c0_9 = arith.constant 0 : index
    %8 = vector.load %arg5[%c0_7, %c0_8, %c0_9] : memref<1x3x1xf32, #tpu.memory_space<vmem>>, vector<1x3x1xf32>
    %9 = vector.shape_cast %8 : vector<1x3x1xf32> to vector<3x1xf32>
    %10 = vector.broadcast %9 : vector<3x1xf32> to vector<3x256xf32>
    %11 = arith.addf %7, %10 : vector<3x256xf32>
    %12 = vector.extract_strided_slice %11 {offsets = [2, 0], sizes = [1, 256], strides = [1, 1]} : vector<3x256xf32> to vector<1x256xf32>
    %13 = math.absf %12 : vector<1x256xf32>
    %cst_10 = arith.constant 0.00999999977 : f32
    %14 = vector.broadcast %cst_10 : f32 to vector<1x256xf32>
    %15 = arith.cmpf olt, %13, %14 : vector<1x256xf32>
    %cst_11 = arith.constant 0.00999999977 : f32
    %16 = vector.broadcast %cst_11 : f32 to vector<1x256xf32>
    %17 = arith.select %15, %16, %12 : vector<1x256xi1>, vector<1x256xf32>
    %18 = vector.extract_strided_slice %11 {offsets = [0, 0], sizes = [2, 256], strides = [1, 1]} : vector<3x256xf32> to vector<2x256xf32>
    %19 = vector.broadcast %17 : vector<1x256xf32> to vector<2x256xf32>
    %20 = arith.divf %18, %19 : vector<2x256xf32>
    %cst_12 = arith.constant 0.00999999977 : f32
    %21 = vector.broadcast %cst_12 : f32 to vector<1x256xf32>
    %22 = arith.cmpf ole, %12, %21 : vector<1x256xf32>
    %cst_13 = arith.constant 1.000000e+06 : f32
    %23 = vector.shape_cast %22 : vector<1x256xi1> to vector<1x256xi1>
    %24 = vector.broadcast %23 : vector<1x256xi1> to vector<2x256xi1>
    %25 = vector.broadcast %cst_13 : f32 to vector<2x256xf32>
    %26 = arith.select %24, %25, %20 : vector<2x256xi1>, vector<2x256xf32>
    %27 = tpu.concatenate %26, %12 in 0 : vector<2x256xf32>, vector<1x256xf32> -> vector<3x256xf32>
    %c0_14 = arith.constant 0 : index
    %c0_15 = arith.constant 0 : index
    %c0_16 = arith.constant 0 : index
    %28 = vector.load %arg6[%c0_14, %c0_15, %c0_16] : memref<1x3x256xf32, #tpu.memory_space<vmem>>, vector<1x3x256xf32>
    %29 = vector.shape_cast %28 : vector<1x3x256xf32> to vector<3x256xf32>
    %30 = vector.shape_cast %27 : vector<3x256xf32> to vector<1x3x256xf32>
    tpu.vector_store %arg6[%c0_14, %c0_15, %c0_16], %30 {strides = array<i32>} : memref<1x3x256xf32, #tpu.memory_space<vmem>>, vector<1x3x256xf32>,
    return
  }
  func.func @transform_0(%arg0: i32, %arg1: i32) -> (i32, i32) {
    %c0_i32 = arith.constant 0 : i32
    %c0_i32_0 = arith.constant 0 : i32
    return %c0_i32, %arg1 : i32, i32
  }
  func.func @transform_1(%arg0: i32, %arg1: i32) -> (i32, i32, i32) {
    %c0_i32 = arith.constant 0 : i32
    %c0_i32_0 = arith.constant 0 : i32
    return %arg0, %c0_i32, %arg1 : i32, i32, i32
  }
  func.func @transform_2(%arg0: i32, %arg1: i32) -> (i32, i32, i32) {
    %c0_i32 = arith.constant 0 : i32
    %c0_i32_0 = arith.constant 0 : i32
    %c0_i32_1 = arith.constant 0 : i32
    return %arg0, %c0_i32, %c0_i32_0 : i32, i32, i32
  }
  func.func @transform_3(%arg0: i32, %arg1: i32) -> (i32, i32, i32) {
    %c0_i32 = arith.constant 0 : i32
    %c0_i32_0 = arith.constant 0 : i32
    %c0_i32_1 = arith.constant 0 : i32
    return %arg0, %c0_i32, %c0_i32_0 : i32, i32, i32
  }
  func.func @transform_4(%arg0: i32, %arg1: i32) -> (i32, i32, i32) {
    %c0_i32 = arith.constant 0 : i32
    %c0_i32_0 = arith.constant 0 : i32
    return %arg0, %c0_i32, %arg1 : i32, i32, i32
  }
}

module attributes {stable_mosaic.version = 11 : i64} {
  func.func @_conv1x1_kernel(%arg0: i32, %arg1: i32, %arg2: memref<1x3x256xf32, #tpu.memory_space<vmem>>, %arg3: memref<8x3xf32, #tpu.memory_space<vmem>>, %arg4: memref<8x1xf32, #tpu.memory_space<vmem>>, %arg5: memref<1x8x256xf32, #tpu.memory_space<vmem>>) attributes {dimension_semantics = [#tpu.dimension_semantics<parallel>, #tpu.dimension_semantics<parallel>], iteration_bounds = array<i64: 4, 1>, scalar_prefetch = 0 : i64, scratch_operands = 0 : i64, tpu.core_type = #tpu.core_type<tc>, window_params = [{transform_indices = @transform_0, window_bounds = array<i64: 1, 3, 256>}, {pipeline_mode = #tpu.pipeline_mode<synchronous>, transform_indices = @transform_1, window_bounds = array<i64: 8, 3>}, {pipeline_mode = #tpu.pipeline_mode<synchronous>, transform_indices = @transform_2, window_bounds = array<i64: 8, 1>}, {transform_indices = @transform_3, window_bounds = array<i64: 1, 8, 256>}]} {
    %c0 = arith.constant 0 : index
    %c0_0 = arith.constant 0 : index
    %0 = vector.load %arg3[%c0, %c0_0] : memref<8x3xf32, #tpu.memory_space<vmem>>, vector<8x3xf32>
    %c0_1 = arith.constant 0 : index
    %c0_2 = arith.constant 0 : index
    %c0_3 = arith.constant 0 : index
    %1 = vector.load %arg2[%c0_1, %c0_2, %c0_3] : memref<1x3x256xf32, #tpu.memory_space<vmem>>, vector<1x3x256xf32>
    %2 = vector.shape_cast %1 : vector<1x3x256xf32> to vector<3x256xf32>
    %cst = arith.constant dense<0.000000e+00> : vector<8x256xf32>
    %3 = tpu.matmul %0, %2, %cst {dimension_numbers = #tpu.dot_dimension_numbers<[1], [0], [0], [1], [0, 0, 1, 1], [], []>} : vector<8x3xf32>, vector<3x256xf32>, vector<8x256xf32> -> vector<8x256xf32>
    %c0_4 = arith.constant 0 : index
    %c0_5 = arith.constant 0 : index
    %4 = vector.load %arg4[%c0_4, %c0_5] : memref<8x1xf32, #tpu.memory_space<vmem>>, vector<8x1xf32>
    %5 = vector.broadcast %4 : vector<8x1xf32> to vector<8x256xf32>
    %6 = arith.addf %3, %5 : vector<8x256xf32>
    %c0_6 = arith.constant 0 : index
    %c0_7 = arith.constant 0 : index
    %c0_8 = arith.constant 0 : index
    %7 = vector.load %arg5[%c0_6, %c0_7, %c0_8] : memref<1x8x256xf32, #tpu.memory_space<vmem>>, vector<1x8x256xf32>
    %8 = vector.shape_cast %7 : vector<1x8x256xf32> to vector<8x256xf32>
    %9 = vector.shape_cast %6 : vector<8x256xf32> to vector<1x8x256xf32>
    tpu.vector_store %arg5[%c0_6, %c0_7, %c0_8], %9 {strides = array<i32>} : memref<1x8x256xf32, #tpu.memory_space<vmem>>, vector<1x8x256xf32>,
    return
  }
  func.func @transform_0(%arg0: i32, %arg1: i32) -> (i32, i32, i32) {
    %c0_i32 = arith.constant 0 : i32
    %c0_i32_0 = arith.constant 0 : i32
    return %arg0, %c0_i32, %arg1 : i32, i32, i32
  }
  func.func @transform_1(%arg0: i32, %arg1: i32) -> (i32, i32) {
    %c0_i32 = arith.constant 0 : i32
    %c0_i32_0 = arith.constant 0 : i32
    %c0_i32_1 = arith.constant 0 : i32
    return %c0_i32, %c0_i32_0 : i32, i32
  }
  func.func @transform_2(%arg0: i32, %arg1: i32) -> (i32, i32) {
    %c0_i32 = arith.constant 0 : i32
    %c0_i32_0 = arith.constant 0 : i32
    %c0_i32_1 = arith.constant 0 : i32
    return %c0_i32, %c0_i32_0 : i32, i32
  }
  func.func @transform_3(%arg0: i32, %arg1: i32) -> (i32, i32, i32) {
    %c0_i32 = arith.constant 0 : i32
    %c0_i32_0 = arith.constant 0 : i32
    return %arg0, %c0_i32, %arg1 : i32, i32, i32
  }
}

module attributes {stable_mosaic.version = 11 : i64} {
  func.func @_splat_kernel(%arg0: i32, %arg1: i32, %arg2: i32, %arg3: memref<1x3x128xf32, #tpu.memory_space<vmem>>, %arg4: memref<1x10x128xf32, #tpu.memory_space<vmem>>, %arg5: memref<2x128xf32, #tpu.memory_space<vmem>>, %arg6: memref<1x9x128xf32, #tpu.memory_space<vmem>>, %arg7: memref<10x128xf32, #tpu.memory_space<vmem>>) attributes {dimension_semantics = [#tpu.dimension_semantics<parallel>, #tpu.dimension_semantics<parallel>, #tpu.dimension_semantics<arbitrary>], iteration_bounds = array<i64: 4, 2, 2>, scalar_prefetch = 0 : i64, scratch_operands = 1 : i64, tpu.core_type = #tpu.core_type<tc>, window_params = [{transform_indices = @transform_0, window_bounds = array<i64: 1, 3, 128>}, {transform_indices = @transform_1, window_bounds = array<i64: 1, 10, 128>}, {transform_indices = @transform_2, window_bounds = array<i64: 2, 128>}, {transform_indices = @transform_3, window_bounds = array<i64: 1, 9, 128>}]} {
    %c0_i32 = arith.constant 0 : i32
    %0 = arith.cmpi eq, %arg2, %c0_i32 : i32
    %1 = arith.extui %0 : i1 to i32
    %c0_i32_0 = arith.constant 0 : i32
    %2 = arith.cmpi ne, %1, %c0_i32_0 : i32
    scf.if %2 {
      %cst_18 = arith.constant 0.000000e+00 : f32
      %38 = vector.broadcast %cst_18 : f32 to vector<10x128xf32>
      %c0_19 = arith.constant 0 : index
      %c0_20 = arith.constant 0 : index
      %39 = vector.load %arg7[%c0_19, %c0_20] : memref<10x128xf32, #tpu.memory_space<vmem>>, vector<10x128xf32>
      tpu.vector_store %arg7[%c0_19, %c0_20], %38 {strides = array<i32>} : memref<10x128xf32, #tpu.memory_space<vmem>>, vector<10x128xf32>,
    } else {
    }
    %c0 = arith.constant 0 : index
    %c0_1 = arith.constant 0 : index
    %c0_2 = arith.constant 0 : index
    %3 = vector.load %arg3[%c0, %c0_1, %c0_2] : memref<1x3x128xf32, #tpu.memory_space<vmem>>, vector<1x3x128xf32>
    %4 = vector.shape_cast %3 : vector<1x3x128xf32> to vector<3x128xf32>
    %5 = vector.extract_strided_slice %4 {offsets = [0, 0], sizes = [1, 128], strides = [1, 1]} : vector<3x128xf32> to vector<1x128xf32>
    %6 = tpu.transpose %5, [1, 0] : vector<1x128xf32> -> vector<128x1xf32>
    %cst = arith.constant 4.000000e+00 : f32
    %7 = vector.broadcast %cst : f32 to vector<128x1xf32>
    %8 = arith.mulf %6, %7 : vector<128x1xf32>
    %9 = vector.extract_strided_slice %4 {offsets = [1, 0], sizes = [1, 128], strides = [1, 1]} : vector<3x128xf32> to vector<1x128xf32>
    %10 = tpu.transpose %9, [1, 0] : vector<1x128xf32> -> vector<128x1xf32>
    %cst_3 = arith.constant 4.000000e+00 : f32
    %11 = vector.broadcast %cst_3 : f32 to vector<128x1xf32>
    %12 = arith.mulf %10, %11 : vector<128x1xf32>
    %c0_4 = arith.constant 0 : index
    %c0_5 = arith.constant 0 : index
    %13 = vector.load %arg5[%c0_4, %c0_5] : memref<2x128xf32, #tpu.memory_space<vmem>>, vector<1x128xf32>
    %c1 = arith.constant 1 : index
    %c0_6 = arith.constant 0 : index
    %14 = vector.load %arg5[%c1, %c0_6] : memref<2x128xf32, #tpu.memory_space<vmem>>, vector<1x128xf32>
    %15 = vector.broadcast %8 : vector<128x1xf32> to vector<128x128xf32>
    %16 = vector.broadcast %13 : vector<1x128xf32> to vector<128x128xf32>
    %17 = arith.subf %15, %16 : vector<128x128xf32>
    %18 = vector.broadcast %12 : vector<128x1xf32> to vector<128x128xf32>
    %19 = vector.broadcast %14 : vector<1x128xf32> to vector<128x128xf32>
    %20 = arith.subf %18, %19 : vector<128x128xf32>
    %21 = arith.mulf %17, %17 : vector<128x128xf32>
    %22 = arith.mulf %20, %20 : vector<128x128xf32>
    %23 = arith.addf %21, %22 : vector<128x128xf32>
    %cst_7 = arith.constant 1.000000e+00 : f32
    %24 = vector.broadcast %cst_7 : f32 to vector<128x128xf32>
    %25 = arith.subf %24, %23 : vector<128x128xf32>
    %cst_8 = arith.constant 0.000000e+00 : f32
    %26 = vector.broadcast %cst_8 : f32 to vector<128x128xf32>
    %27 = arith.maximumf %25, %26 : vector<128x128xf32>
    %28 = arith.mulf %27, %27 : vector<128x128xf32>
    %c0_9 = arith.constant 0 : index
    %c0_10 = arith.constant 0 : index
    %29 = vector.load %arg7[%c0_9, %c0_10] : memref<10x128xf32, #tpu.memory_space<vmem>>, vector<10x128xf32>
    %c0_11 = arith.constant 0 : index
    %c0_12 = arith.constant 0 : index
    %c0_13 = arith.constant 0 : index
    %30 = vector.load %arg4[%c0_11, %c0_12, %c0_13] : memref<1x10x128xf32, #tpu.memory_space<vmem>>, vector<1x10x128xf32>
    %31 = vector.shape_cast %30 : vector<1x10x128xf32> to vector<10x128xf32>
    %cst_14 = arith.constant dense<0.000000e+00> : vector<10x128xf32>
    %32 = tpu.matmul %31, %28, %cst_14 {dimension_numbers = #tpu.dot_dimension_numbers<[1], [0], [0], [1], [0, 0, 1, 1], [], []>} : vector<10x128xf32>, vector<128x128xf32>, vector<10x128xf32> -> vector<10x128xf32>
    %33 = arith.addf %29, %32 : vector<10x128xf32>
    %c0_15 = arith.constant 0 : index
    %c0_16 = arith.constant 0 : index
    %34 = vector.load %arg7[%c0_15, %c0_16] : memref<10x128xf32, #tpu.memory_space<vmem>>, vector<10x128xf32>
    tpu.vector_store %arg7[%c0_15, %c0_16], %33 {strides = array<i32>} : memref<10x128xf32, #tpu.memory_space<vmem>>, vector<10x128xf32>,
    %c1_i32 = arith.constant 1 : i32
    %35 = arith.cmpi eq, %arg2, %c1_i32 : i32
    %36 = arith.extui %35 : i1 to i32
    %c0_i32_17 = arith.constant 0 : i32
    %37 = arith.cmpi ne, %36, %c0_i32_17 : i32
    scf.if %37 {
      %c0_18 = arith.constant 0 : index
      %c0_19 = arith.constant 0 : index
      %38 = vector.load %arg7[%c0_18, %c0_19] : memref<10x128xf32, #tpu.memory_space<vmem>>, vector<10x128xf32>
      %39 = vector.extract_strided_slice %38 {offsets = [9, 0], sizes = [1, 128], strides = [1, 1]} : vector<10x128xf32> to vector<1x128xf32>
      %cst_20 = arith.constant 9.99999993E-9 : f32
      %40 = vector.broadcast %cst_20 : f32 to vector<1x128xf32>
      %41 = arith.addf %39, %40 : vector<1x128xf32>
      %42 = tpu.reciprocal %41 {approx = true} : vector<1x128xf32> -> vector<1x128xf32>
      %43 = vector.extract_strided_slice %38 {offsets = [0, 0], sizes = [9, 128], strides = [1, 1]} : vector<10x128xf32> to vector<9x128xf32>
      %44 = vector.broadcast %42 : vector<1x128xf32> to vector<9x128xf32>
      %45 = arith.mulf %43, %44 : vector<9x128xf32>
      %c0_21 = arith.constant 0 : index
      %c0_22 = arith.constant 0 : index
      %c0_23 = arith.constant 0 : index
      %46 = vector.load %arg6[%c0_21, %c0_22, %c0_23] : memref<1x9x128xf32, #tpu.memory_space<vmem>>, vector<1x9x128xf32>
      %47 = vector.shape_cast %46 : vector<1x9x128xf32> to vector<9x128xf32>
      %48 = vector.shape_cast %45 : vector<9x128xf32> to vector<1x9x128xf32>
      tpu.vector_store %arg6[%c0_21, %c0_22, %c0_23], %48 {strides = array<i32>} : memref<1x9x128xf32, #tpu.memory_space<vmem>>, vector<1x9x128xf32>,
    } else {
    }
    return
  }
  func.func @transform_0(%arg0: i32, %arg1: i32, %arg2: i32) -> (i32, i32, i32) {
    %c0_i32 = arith.constant 0 : i32
    %c0_i32_0 = arith.constant 0 : i32
    return %arg0, %c0_i32, %arg2 : i32, i32, i32
  }
  func.func @transform_1(%arg0: i32, %arg1: i32, %arg2: i32) -> (i32, i32, i32) {
    %c0_i32 = arith.constant 0 : i32
    %c0_i32_0 = arith.constant 0 : i32
    return %arg0, %c0_i32, %arg2 : i32, i32, i32
  }
  func.func @transform_2(%arg0: i32, %arg1: i32, %arg2: i32) -> (i32, i32) {
    %c0_i32 = arith.constant 0 : i32
    %c0_i32_0 = arith.constant 0 : i32
    return %c0_i32, %arg1 : i32, i32
  }
  func.func @transform_3(%arg0: i32, %arg1: i32, %arg2: i32) -> (i32, i32, i32) {
    %c0_i32 = arith.constant 0 : i32
    %c0_i32_0 = arith.constant 0 : i32
    return %arg0, %c0_i32, %arg1 : i32, i32, i32
  }
}

module attributes {stable_mosaic.version = 11 : i64} {
  func.func @_conv1x1_kernel(%arg0: i32, %arg1: i32, %arg2: memref<1x8x256xf32, #tpu.memory_space<vmem>>, %arg3: memref<3x8xf32, #tpu.memory_space<vmem>>, %arg4: memref<3x1xf32, #tpu.memory_space<vmem>>, %arg5: memref<1x3x256xf32, #tpu.memory_space<vmem>>) attributes {dimension_semantics = [#tpu.dimension_semantics<parallel>, #tpu.dimension_semantics<parallel>], iteration_bounds = array<i64: 2, 1>, scalar_prefetch = 0 : i64, scratch_operands = 0 : i64, tpu.core_type = #tpu.core_type<tc>, window_params = [{transform_indices = @transform_0, window_bounds = array<i64: 1, 8, 256>}, {pipeline_mode = #tpu.pipeline_mode<synchronous>, transform_indices = @transform_1, window_bounds = array<i64: 3, 8>}, {pipeline_mode = #tpu.pipeline_mode<synchronous>, transform_indices = @transform_2, window_bounds = array<i64: 3, 1>}, {transform_indices = @transform_3, window_bounds = array<i64: 1, 3, 256>}]} {
    %c0 = arith.constant 0 : index
    %c0_0 = arith.constant 0 : index
    %0 = vector.load %arg3[%c0, %c0_0] : memref<3x8xf32, #tpu.memory_space<vmem>>, vector<3x8xf32>
    %c0_1 = arith.constant 0 : index
    %c0_2 = arith.constant 0 : index
    %c0_3 = arith.constant 0 : index
    %1 = vector.load %arg2[%c0_1, %c0_2, %c0_3] : memref<1x8x256xf32, #tpu.memory_space<vmem>>, vector<1x8x256xf32>
    %2 = vector.shape_cast %1 : vector<1x8x256xf32> to vector<8x256xf32>
    %cst = arith.constant dense<0.000000e+00> : vector<3x256xf32>
    %3 = tpu.matmul %0, %2, %cst {dimension_numbers = #tpu.dot_dimension_numbers<[1], [0], [0], [1], [0, 0, 1, 1], [], []>} : vector<3x8xf32>, vector<8x256xf32>, vector<3x256xf32> -> vector<3x256xf32>
    %c0_4 = arith.constant 0 : index
    %c0_5 = arith.constant 0 : index
    %4 = vector.load %arg4[%c0_4, %c0_5] : memref<3x1xf32, #tpu.memory_space<vmem>>, vector<3x1xf32>
    %5 = vector.broadcast %4 : vector<3x1xf32> to vector<3x256xf32>
    %6 = arith.addf %3, %5 : vector<3x256xf32>
    %c0_6 = arith.constant 0 : index
    %c0_7 = arith.constant 0 : index
    %c0_8 = arith.constant 0 : index
    %7 = vector.load %arg5[%c0_6, %c0_7, %c0_8] : memref<1x3x256xf32, #tpu.memory_space<vmem>>, vector<1x3x256xf32>
    %8 = vector.shape_cast %7 : vector<1x3x256xf32> to vector<3x256xf32>
    %9 = vector.shape_cast %6 : vector<3x256xf32> to vector<1x3x256xf32>
    tpu.vector_store %arg5[%c0_6, %c0_7, %c0_8], %9 {strides = array<i32>} : memref<1x3x256xf32, #tpu.memory_space<vmem>>, vector<1x3x256xf32>,
    return
  }
  func.func @transform_0(%arg0: i32, %arg1: i32) -> (i32, i32, i32) {
    %c0_i32 = arith.constant 0 : i32
    %c0_i32_0 = arith.constant 0 : i32
    return %arg0, %c0_i32, %arg1 : i32, i32, i32
  }
  func.func @transform_1(%arg0: i32, %arg1: i32) -> (i32, i32) {
    %c0_i32 = arith.constant 0 : i32
    %c0_i32_0 = arith.constant 0 : i32
    %c0_i32_1 = arith.constant 0 : i32
    return %c0_i32, %c0_i32_0 : i32, i32
  }
  func.func @transform_2(%arg0: i32, %arg1: i32) -> (i32, i32) {
    %c0_i32 = arith.constant 0 : i32
    %c0_i32_0 = arith.constant 0 : i32
    %c0_i32_1 = arith.constant 0 : i32
    return %c0_i32, %c0_i32_0 : i32, i32
  }
  func.func @transform_3(%arg0: i32, %arg1: i32) -> (i32, i32, i32) {
    %c0_i32 = arith.constant 0 : i32
    %c0_i32_0 = arith.constant 0 : i32
    return %arg0, %c0_i32, %arg1 : i32, i32, i32
  }
}

</mosaic_0001>

<llo_original>
// kernel: custom-call.11
$region0: #{custom-call.11}
  %s0 = inlined_call_operand.vmem [shape: f32[2,4,4], index: 0, kind: input, shape index: {}]
  %s1 = inlined_call_operand.vmem [shape: f32[2,4,4], index: 1, kind: output, shape index: {0}]
  %s2 = inlined_call_operand.hbm [shape: s32[2,4], index: 2, kind: output, shape index: {1}]
  %s3 = inlined_call_operand.vmem [shape: s32[2,4], index: 3, kind: output, shape index: {2}]
  %4 = xla_tuple %s1, %s2, %s3
  $region1: #{custom-call.11} parent=0
    #allocation0 [shape = 'u8[4096]{0}', space=vmem, size = 0x1000, scoped, tag = 'operand span for operand 0']
    #allocation1 [shape = 'u8[4096]{0}', space=vmem, size = 0x1000, scoped, tag = 'packed  for operand 0']
    #allocation2 [shape = 'u8[4096]{0}', space=vmem, size = 0x1000, scoped, tag = 'operand span for operand 1']
    #allocation3 [shape = 'u8[4096]{0}', space=vmem, size = 0x1000, scoped, tag = 'packed  for operand 1']
    #allocation4 [shape = 'u8[4096]{0}', space=vmem, size = 0x1000, scoped, tag = 'operand span for operand 2']
    #allocation5 [shape = 'u8[2048]{0}', space=vmem, size = 0x800, scoped, tag = 'packed  for operand 2']
    #allocation6 [shape = 's32[2]{0}', space=sflag, size = 0x8, scoped, tag = 'scoped memory for custom-call.11']
    #allocation7 [shape = 'u8[4096]{0}', space=vmem, size = 0x1000, scoped, tag = 'operand span for operand 3']
    #allocation8 [shape = 'u8[2048]{0}', space=vmem, size = 0x800, scoped, tag = 'packed  for operand 3']
    %5 = vsyncpa [#allocation6], 0
    %s6 = scalar_lea.sflag [#allocation6], 1
    %7 = vsyncpa %s6, 0
    loop: start=0, step=1, limit=4
    $region2: #{custom-call.11} parent=1 // loop_pre_header
      _
    $region3: #{custom-call.11} parent=1 // loop_header
      %s9 = sphi 0, %s13
      %p10 = scmp.ge.s32.totalorder %s9, 4
      %s21 = sphi 0, %s23
      %s24 = sphi 0, %s21
      %s25 = sphi 0, %s24
      %s41 = sphi 0, %s25
      %s49 = sphi 0, %s51
      %s52 = sphi 0, %s49
      %s53 = sphi 0, %s52
      %s69 = sphi 0, %s53
    $region4: #{custom-call.11} parent=1 // loop_header_branch
      %12 = sbr.rel (%p10) target = $region8
    $region5: #{custom-call.11} parent=1 // loop_body
      %s14 = ssub.s32 %s9, 1
      %s15 = ssub.s32 %s9, 2
      %s16 = sadd.s32 %s9, 1
      %s17 = sshrl.u32 %s9, 3
      %s18 = sshrl.u32 %s16, 3
      %s19 = ssub.s32 %s17, %s18
      %p20 = scmp.eq.s32.totalorder %s19, 0
      %s22 = sadd.s32 %s21, 1
      %s23 = scalar_select %p20, %s21, %s22
      %p26 = pneg %p20
      %p27 = scmp.eq.s32.totalorder %s9, 1
      %p28 = por %p26, %p27
      %p29 = scmp.ne.s32.totalorder %s21, %s24
      %p30 = scmp.eq.s32.totalorder %s9, 0
      %p31 = por %p29, %p30
      %p32 = scmp.ne.s32.totalorder %s21, %s24
      %p33 = scmp.eq.s32.totalorder %s14, 1
      %p34 = por %p32, %p33
      %p35 = scmp.ne.s32.totalorder %s24, %s25
      %p36 = scmp.eq.s32.totalorder %s14, 0
      %p37 = por %p35, %p36
      %p38 = scmp.ne.s32.totalorder %s24, %s25
      %p39 = scmp.eq.s32.totalorder %s15, 1
      %p40 = por %p38, %p39
      %p42 = scmp.ne.s32.totalorder %s25, %s41
      %p43 = scmp.eq.s32.totalorder %s15, 0
      %p44 = por %p42, %p43
      %s45 = sshrl.u32 %s9, 3
      %s46 = sshrl.u32 %s16, 3
      %s47 = ssub.s32 %s45, %s46
      %p48 = scmp.eq.s32.totalorder %s47, 0
      %s50 = sadd.s32 %s49, 1
      %s51 = scalar_select %p48, %s49, %s50
      %p54 = pneg %p48
      %p55 = scmp.eq.s32.totalorder %s9, 1
      %p56 = por %p54, %p55
      %p57 = scmp.ne.s32.totalorder %s49, %s52
      %p58 = scmp.eq.s32.totalorder %s9, 0
      %p59 = por %p57, %p58
      %p60 = scmp.ne.s32.totalorder %s49, %s52
      %p61 = scmp.eq.s32.totalorder %s14, 1
      %p62 = por %p60, %p61
      %p63 = scmp.ne.s32.totalorder %s52, %s53
      %p64 = scmp.eq.s32.totalorder %s14, 0
      %p65 = por %p63, %p64
      %p66 = scmp.ne.s32.totalorder %s52, %s53
      %p67 = scmp.eq.s32.totalorder %s15, 1
      %p68 = por %p66, %p67
      %p70 = scmp.ne.s32.totalorder %s53, %s69
      %p71 = scmp.eq.s32.totalorder %s15, 0
      %p72 = por %p70, %p71
      %p73 = scmp.le.s32.totalorder 1, %s9
      %p74 = scmp.lt.s32.totalorder %s9, 3
      %p75 = pnand %p73, %p74
      %p76 = pneg %p75
      // Predicated region
      $region9: #{custom-call.11} parent=5 // pred_check
        _
      $region10: #{custom-call.11} parent=5 // pred_check_branch
        %78 = sbr.rel (%p75) target = $region12
      $region11: #{custom-call.11} parent=5 // pred_region
        %s79 = ssub.s32 %s9, 1
      $region12: #{custom-call.11} parent=5 // pred_fallthru
        _
      %p80 = scmp.lt.s32.totalorder %s9, 2
      // Predicated region
      $region13: #{custom-call.11} parent=5 // pred_check
        %p81 = pneg %p80
      $region14: #{custom-call.11} parent=5 // pred_check_branch
        %83 = sbr.rel (%p81) target = $region16
      $region15: #{custom-call.11} parent=5 // pred_region
        %s84 = sand.u32 %s9, 1
        %s85 = sand.u32 %s9, 1
        %s86 = smul.addr %s85, 4
        %s87 = scalar_lea.vmem [#allocation1], %s86
        %s88 = smul.addr %s9, 4
        %s89 = scalar_lea.vmem %s0, %s88
        // Predicated region
        $region17: #{custom-call.11} parent=15 // pred_check
          _
        $region18: #{custom-call.11} parent=15 // pred_check_branch
          %91 = sbr.rel (0) target = $region20
        $region19: #{custom-call.11} parent=15 // pred_region
          // Predicated region
          $region21: #{custom-call.11} parent=19 // pred_check
            _
          $region22: #{custom-call.11} parent=19 // pred_check_branch
            %93 = sbr.rel target = $region24
          $region23: #{custom-call.11} parent=19 // pred_region
            // Predicated region
            $region36: #{custom-call.11} parent=23 // pred_check
              _
            $region37: #{custom-call.11} parent=23 // pred_check_branch
              %108 = sbr.rel (0) target = $region39
            $region38: #{custom-call.11} parent=23 // pred_region
              loop: start=0, step=1, limit=1
              $region40: #{custom-call.11} parent=38 // loop_pre_header
                _
              $region41: #{custom-call.11} parent=38 // loop_header
                %s111 = sphi 0, %s115
                %p112 = scmp.ge.s32.totalorder %s111, 1
                %s116 = sphi %s89, %s89
                %s117 = sphi %s87, %s87
              $region42: #{custom-call.11} parent=38 // loop_header_branch
                %114 = sbr.rel (%p112) target = $region46
              $region43: #{custom-call.11} parent=38 // loop_body
                %v118 = vld [vmem:[%s116] sm:$0xf]
                %119 = vst [vmem:[%s117] sm:$0xf] %v118
              $region44: #{custom-call.11} parent=38 // loop_footer
                %s115 = sadd.s32 1, %s111
              $region45: #{custom-call.11} parent=38 // loop_footer_branch
                %110 = sbr.rel target = $region41
              $region46: #{custom-call.11} parent=38 // loop_exit
                _
            $region39: #{custom-call.11} parent=23 // pred_fallthru
              _
          $region24: #{custom-call.11} parent=19 // pred_fallthru
            _
          // Predicated region
          $region25: #{custom-call.11} parent=19 // pred_check
            _
          $region26: #{custom-call.11} parent=19 // pred_check_branch
            %95 = sbr.rel (0) target = $region28
          $region27: #{custom-call.11} parent=19 // pred_region
            loop: start=0, step=1, limit=1
            $region29: #{custom-call.11} parent=27 // loop_pre_header
              _
            $region30: #{custom-call.11} parent=27 // loop_header
              %s98 = sphi 0, %s102
              %p99 = scmp.ge.s32.totalorder %s98, 1
              %s103 = sphi %s89, %s89
              %s104 = sphi %s87, %s87
            $region31: #{custom-call.11} parent=27 // loop_header_branch
              %101 = sbr.rel (%p99) target = $region35
            $region32: #{custom-call.11} parent=27 // loop_body
              %v105 = vld [vmem:[%s103] sm:$0xf]
              %106 = vst [vmem:[%s104] sm:$0xf] %v105
            $region33: #{custom-call.11} parent=27 // loop_footer
              %s102 = sadd.s32 1, %s98
            $region34: #{custom-call.11} parent=27 // loop_footer_branch
              %97 = sbr.rel target = $region30
            $region35: #{custom-call.11} parent=27 // loop_exit
              _
          $region28: #{custom-call.11} parent=19 // pred_fallthru
            _
        $region20: #{custom-call.11} parent=15 // pred_fallthru
          _
        %120 = vnop
      $region16: #{custom-call.11} parent=5 // pred_fallthru
        _
      %p121 = scmp.le.s32.totalorder 1, %s9
      %p122 = scmp.lt.s32.totalorder %s9, 3
      %p123 = pnand %p121, %p122
      %p124 = pneg %p123
      // Predicated region
      $region47: #{custom-call.11} parent=5 // pred_check
        _
      $region48: #{custom-call.11} parent=5 // pred_check_branch
        %126 = sbr.rel (%p123) target = $region50
      $region49: #{custom-call.11} parent=5 // pred_region
        #allocation9 [shape = 's32[4,128]{1,0}', space=vmem, size = 0x1000, scoped, tag = 'scratch for permutations']
        %s127 = ssub.s32 %s9, 1
        %s128 = sand.u32 %s14, 1
        %s129 = sand.u32 %s14, 1
        %s130 = smul.addr %s129, 4
        %s131 = scalar_lea.vmem [#allocation1], %s130
        %s132 = sand.u32 %s14, 1
        %s133 = sand.u32 %s14, 1
        %s134 = smul.addr %s133, 4
        %s135 = scalar_lea.vmem [#allocation1], %s134
        %s136 = sand.u32 %s14, 1
        %s137 = sand.u32 %s14, 1
        %s138 = smul.addr %s137, 4
        %s139 = scalar_lea.vmem [#allocation3], %s138
        %p140 = pneg %p37
        %p141 = pneg %p34
        %s142 = sand.u32 %s24, 1
        %s143 = scalar_lea.sflag [#allocation6], %s142
        %s144 = sand.u32 %s24, 1
        %s145 = smul.addr %s144, 2
        %s146 = scalar_lea.vmem [#allocation5], %s145
        %p147 = pneg %p65
        %p148 = pneg %p62
        %s149 = sand.u32 %s52, 1
        %s150 = sand.u32 %s52, 1
        %s151 = smul.addr %s150, 2
        %s152 = scalar_lea.vmem [#allocation8], %s151
        %s154 = sshllo.u32 0, 4
        %v155 = vld [vmem:[%s135] sm:%s154]
        %156 = vst [vmem:[#allocation0] sm:%s154] %v155
        %s157 = sshrl.u32 %s14, 3
        %s158 = sshrl.u32 %s14, 3
        %v159 = vld [vmem:[#allocation0] sm:$0xff]
        %160 = vst [vmem:[#allocation2] sm:$0xff] %v159
        %s161 = sand.u32 %s14, 7
        %s162 = scalar_lea.vmem [#allocation4], %s161
        %s163 = sand.u32 %s14, 7
        %s164 = scalar_lea.vmem [#allocation7], %s163
        %165 = vst [vmem:[%s162] sm:$0x1] 0
        %v166 = vlaneseq
        %v167 = vshrl.u32 %v166, 7
        %v168 = vmov %v167
        %170 = vst [vmem:[#allocation9] sm:$0xff] %v168
        loop: start=0, step=1, limit=4
        $region52: #{custom-call.11} parent=49 // loop_pre_header
          _
        $region53: #{custom-call.11} parent=49 // loop_header
          %s172 = sphi 0, %s176
          %p173 = scmp.ge.s32.totalorder %s172, 4
        $region54: #{custom-call.11} parent=49 // loop_header_branch
          %175 = sbr.rel (%p173) target = $region58
        $region55: #{custom-call.11} parent=49 // loop_body
          %v177 = vstv %s172
          %v178 = vlaneseq
          %v179 = vshrl.u32 %v178, 7
          %v180 = vmov %v179
          %v181 = vld [vmem:[#allocation2] sm:$0xff]
          %v182 = vand.u32 2147483647, %v181
          %v184 = vstv %s172
          %vm185 = vcmp.ge.s32.totalorder %v180, %v184
          %vm186 = vcmp.lt.s32.totalorder %v180, 4
          %vm187 = vmand %vm185, %vm186
          %vm188 = vcmp.lt.f32.partialorder -inf, %v182
          %vm189 = vmand %vm187, %vm188
          %v190 = vsel %vm189, %v180, %v177
          %v191 = vsel %vm189, %v182, -inf
          %v192 = vrot.slane %v191, 1
          %v193 = vrot.slane %v190, 1
          %vm194 = vcmp.ge.f32.partialorder %v192, %v191
          %v195 = vsel %vm194, %v192, %v191
          %v196 = vsel %vm194, %v193, %v190
          %v197 = vrot.slane %v192, 1
          %v198 = vrot.slane %v193, 1
          %vm199 = vcmp.ge.f32.partialorder %v197, %v195
          %v200 = vsel %vm199, %v197, %v195
          %v201 = vsel %vm199, %v198, %v196
          %v202 = vrot.slane %v197, 1
          %v203 = vrot.slane %v198, 1
          %vm204 = vcmp.ge.f32.partialorder %v202, %v200
          %v205 = vsel %vm204, %v202, %v200
          %v206 = vsel %vm204, %v203, %v201
          %v207 = vrot.slane %v202, 1
          %v208 = vrot.slane %v203, 1
          %vm209 = vcmp.ge.f32.partialorder %v207, %v205
          %v210 = vsel %vm209, %v207, %v205
          %v211 = vsel %vm209, %v208, %v206
          %v212 = vrot.slane %v207, 1
          %v213 = vrot.slane %v208, 1
          %vm214 = vcmp.ge.f32.partialorder %v212, %v210
          %v215 = vsel %vm214, %v212, %v210
          %v216 = vsel %vm214, %v213, %v211
          %v217 = vrot.slane %v212, 1
          %v218 = vrot.slane %v213, 1
          %vm219 = vcmp.ge.f32.partialorder %v217, %v215
          %v220 = vsel %vm219, %v217, %v215
          %v221 = vsel %vm219, %v218, %v216
          %v222 = vrot.slane %v217, 1
          %v223 = vrot.slane %v218, 1
          %vm224 = vcmp.ge.f32.partialorder %v222, %v220
          %v225 = vsel %vm224, %v222, %v220
          %v226 = vsel %vm224, %v223, %v221
          %s227 = ssub.s32 128, %s172
          %228 = vrot.lane.b32.xlu0 %v226, %s227
          %v229 = vpop.permute.xlu0 %228
          %s230 = vtos %v229
          %v231 = vstv %s172
          %v232 = vlaneseq
          %v233 = vand.u32 %v232, 127
          %vm234 = vcmp.eq.s32.totalorder %v233, %v231
          %v235 = vstv %s230
          %v236 = vld [vmem:[%s162] ss:$0 sm:$0xff]
          %v237 = vsel %vm234, %v235, %v236
          %238 = vst [vmem:[%s162] sm:$0x1] %v237
          %s239 = scalar_lea.vmem [#allocation2], %s172
          %s240 = scalar_lea.vmem [#allocation2], %s230
          %v241 = vld [vmem:[%s239] ss:$0 sm:$0xff]
          %v242 = vld [vmem:[%s240] ss:$0 sm:$0xff]
          %243 = vst [vmem:[%s240] sm:$0x1] %v241
          %244 = vst [vmem:[%s239] sm:$0x1] %v242
          %s245 = scalar_lea.vmem [#allocation9], %s172
          %s246 = scalar_lea.vmem [#allocation9], %s230
          %v247 = vld [vmem:[%s245] ss:$0 sm:$0xff]
          %v248 = vld [vmem:[%s246] ss:$0 sm:$0xff]
          %249 = vst [vmem:[%s246] sm:$0x1] %v247
          %250 = vst [vmem:[%s245] sm:$0x1] %v248
          %vm251 = vcmp.ne.f32.partialorder %v242, 0.0
          %vm252 = vmand %vm234, %vm251
          %v253 = vsel %vm252, %v242, 1.0
          %v254 = vlaneseq
          %v255 = vand.u32 %v254, 127
          %v256 = vstv %s172
          %vm257 = vcmp.gt.s32.totalorder %v255, %v256
          %v258 = vsel %vm257, %v242, 0.0
          %v259 = vlaneseq
          %v260 = vshrl.u32 %v259, 7
          %v261 = vmov %v260
          %v262 = vld [vmem:[#allocation2] sm:$0xff]
          %v264 = vstv %s172
          %vm265 = vcmp.gt.s32.totalorder %v261, %v264
          %v266 = vsel %vm265, %v253, 1.0
          %v267 = vrcp.pop %v266
          %v268 = vmul.f32 %v262, %v267
          %vm269 = vmand %vm265, %vm234
          %v270 = vsel %vm269, %v268, 0.0
          %271 = vadd.xlane.f32.xlu0 %v270
          %v272 = vpop.xlane.xlu0 %271
          %v273 = vmul.f32 %v272, %v258
          %v274 = vsub.f32 %v268, %v273
          %275 = vst [vmem:[#allocation2] sm:$0xff] %v274
        $region56: #{custom-call.11} parent=49 // loop_footer
          %s176 = sadd.s32 1, %s172
        $region57: #{custom-call.11} parent=49 // loop_footer_branch
          %171 = sbr.rel target = $region53
        $region58: #{custom-call.11} parent=49 // loop_exit
          _
        %v276 = vld [vmem:[#allocation9] sm:$0xff]
        %s277 = scalar_lea.vmem [#allocation9], 8
        %s278 = scalar_lea.vmem [#allocation9], 16
        %s279 = scalar_lea.vmem [#allocation9], 24
        %s280 = scalar_lea.vmem [#allocation9], 32
        %s281 = scalar_lea.vmem [#allocation9], 40
        %s282 = scalar_lea.vmem [#allocation9], 48
        %s283 = scalar_lea.vmem [#allocation9], 56
        %s284 = scalar_lea.vmem [#allocation9], 64
        %s285 = scalar_lea.vmem [#allocation9], 72
        %s286 = scalar_lea.vmem [#allocation9], 80
        %s287 = scalar_lea.vmem [#allocation9], 88
        %s288 = scalar_lea.vmem [#allocation9], 96
        %s289 = scalar_lea.vmem [#allocation9], 104
        %s290 = scalar_lea.vmem [#allocation9], 112
        %s291 = scalar_lea.vmem [#allocation9], 120
        %292 = vxpose.xlu0.b32.start [1/16] %v276, 128
        %293 = vxpose.xlu0.b32.cont [2/16] 0, 128
        %294 = vxpose.xlu0.b32.cont [3/16] 0, 128
        %295 = vxpose.xlu0.b32.cont [4/16] 0, 128
        %296 = vxpose.xlu0.b32.cont [5/16] 0, 128
        %297 = vxpose.xlu0.b32.cont [6/16] 0, 128
        %298 = vxpose.xlu0.b32.cont [7/16] 0, 128
        %299 = vxpose.xlu0.b32.cont [8/16] 0, 128
        %300 = vxpose.xlu0.b32.cont [9/16] 0, 128
        %301 = vxpose.xlu0.b32.cont [10/16] 0, 128
        %302 = vxpose.xlu0.b32.cont [11/16] 0, 128
        %303 = vxpose.xlu0.b32.cont [12/16] 0, 128
        %304 = vxpose.xlu0.b32.cont [13/16] 0, 128
        %305 = vxpose.xlu0.b32.cont [14/16] 0, 128
        %306 = vxpose.xlu0.b32.cont [15/16] 0, 128
        %307 = vxpose.xlu0.b32.end [16/16] 0, 128
        %v308 = vpop.trf.xlu0
        %v309 = vpop.trf.xlu0
        %v310 = vpop.trf.xlu0
        %v311 = vpop.trf.xlu0
        %v312 = vpop.trf.xlu0
        %v313 = vpop.trf.xlu0
        %v314 = vpop.trf.xlu0
        %v315 = vpop.trf.xlu0
        %v316 = vpop.trf.xlu0
        %v317 = vpop.trf.xlu0
        %v318 = vpop.trf.xlu0
        %v319 = vpop.trf.xlu0
        %v320 = vpop.trf.xlu0
        %v321 = vpop.trf.xlu0
        %v322 = vpop.trf.xlu0
        %v323 = vpop.trf.xlu0
        %324 = vst [vmem:[%s164] sm:$0x1] %v308
        %s326 = sshllo.u32 0, 4
        %v328 = vld [vmem:[#allocation2] sm:%s326]
        %s329 = sshllo.u32 0, 4
        %330 = vst [vmem:[%s139] sm:%s329] %v328
        %s332 = sshllo.u32 0, 2
        %v334 = vld [vmem:[#allocation4] sm:%s332]
        %s335 = sshllo.u32 0, 2
        %336 = vst [vmem:[%s146] sm:%s335] %v334
        %s338 = sshllo.u32 0, 2
        %v340 = vld [vmem:[#allocation7] sm:%s338]
        %s341 = sshllo.u32 0, 2
        %342 = vst [vmem:[%s152] sm:%s341] %v340
        %s343 = sand.u32 %s14, 1
        %s344 = sand.u32 %s14, 1
        %s345 = smul.addr %s344, 4
        %s346 = scalar_lea.vmem [#allocation3], %s345
        %s347 = sand.u32 %s24, 1
        %s348 = scalar_lea.sflag [#allocation6], %s347
        %s349 = sand.u32 %s24, 1
        %s350 = smul.addr %s349, 2
        %s351 = scalar_lea.vmem [#allocation5], %s350
        %s352 = sand.u32 %s52, 1
        %s353 = sand.u32 %s52, 1
        %s354 = smul.addr %s353, 2
        %s355 = scalar_lea.vmem [#allocation8], %s354
        %s356 = smul.addr %s14, 4
        %s357 = scalar_lea.vmem %s1, %s356
        // Predicated region
        $region59: #{custom-call.11} parent=49 // pred_check
          _
        $region60: #{custom-call.11} parent=49 // pred_check_branch
          %359 = sbr.rel (0) target = $region62
        $region61: #{custom-call.11} parent=49 // pred_region
          // Predicated region
          $region63: #{custom-call.11} parent=61 // pred_check
            _
          $region64: #{custom-call.11} parent=61 // pred_check_branch
            %361 = sbr.rel target = $region66
          $region65: #{custom-call.11} parent=61 // pred_region
            // Predicated region
            $region78: #{custom-call.11} parent=65 // pred_check
              _
            $region79: #{custom-call.11} parent=65 // pred_check_branch
              %376 = sbr.rel (0) target = $region81
            $region80: #{custom-call.11} parent=65 // pred_region
              loop: start=0, step=1, limit=1
              $region82: #{custom-call.11} parent=80 // loop_pre_header
                _
              $region83: #{custom-call.11} parent=80 // loop_header
                %s379 = sphi 0, %s383
                %p380 = scmp.ge.s32.totalorder %s379, 1
                %s384 = sphi %s346, %s346
                %s385 = sphi %s357, %s357
              $region84: #{custom-call.11} parent=80 // loop_header_branch
                %382 = sbr.rel (%p380) target = $region88
              $region85: #{custom-call.11} parent=80 // loop_body
                %v386 = vld [vmem:[%s384] sm:$0xf]
                %387 = vst [vmem:[%s385] sm:$0xf] %v386
              $region86: #{custom-call.11} parent=80 // loop_footer
                %s383 = sadd.s32 1, %s379
              $region87: #{custom-call.11} parent=80 // loop_footer_branch
                %378 = sbr.rel target = $region83
              $region88: #{custom-call.11} parent=80 // loop_exit
                _
            $region81: #{custom-call.11} parent=65 // pred_fallthru
              _
          $region66: #{custom-call.11} parent=61 // pred_fallthru
            _
          // Predicated region
          $region67: #{custom-call.11} parent=61 // pred_check
            _
          $region68: #{custom-call.11} parent=61 // pred_check_branch
            %363 = sbr.rel (0) target = $region70
          $region69: #{custom-call.11} parent=61 // pred_region
            loop: start=0, step=1, limit=1
            $region71: #{custom-call.11} parent=69 // loop_pre_header
              _
            $region72: #{custom-call.11} parent=69 // loop_header
              %s366 = sphi 0, %s370
              %p367 = scmp.ge.s32.totalorder %s366, 1
              %s371 = sphi %s346, %s346
              %s372 = sphi %s357, %s357
            $region73: #{custom-call.11} parent=69 // loop_header_branch
              %369 = sbr.rel (%p367) target = $region77
            $region74: #{custom-call.11} parent=69 // loop_body
              %v373 = vld [vmem:[%s371] sm:$0xf]
              %374 = vst [vmem:[%s372] sm:$0xf] %v373
            $region75: #{custom-call.11} parent=69 // loop_footer
              %s370 = sadd.s32 1, %s366
            $region76: #{custom-call.11} parent=69 // loop_footer_branch
              %365 = sbr.rel target = $region72
            $region77: #{custom-call.11} parent=69 // loop_exit
              _
          $region70: #{custom-call.11} parent=61 // pred_fallthru
            _
        $region62: #{custom-call.11} parent=49 // pred_fallthru
          _
        %388 = vnop
        // Predicated region
        $region89: #{custom-call.11} parent=49 // pred_check
          %p389 = pneg %p34
        $region90: #{custom-call.11} parent=49 // pred_check_branch
          %391 = sbr.rel (%p389) target = $region92
        $region91: #{custom-call.11} parent=49 // pred_region
          %s392 = sshrl.u32 %s14, 3
          %s394 = ssub.s32 32, 32
          %395 = vsyncadd %s348, %s394
          %s396 = smul.addr %s392, 32
          %s397 = scalar_lea.hbm %s2, %s396
          %s399 = sshll.u32 %s351, 4
          %s400 = int_to_ptr.vmem [resolvable:$true] %s399
          %402 = dma.vmem_to_hbm [thread:$0]  %s400, 32, %s397, %s348
        $region92: #{custom-call.11} parent=49 // pred_fallthru
          _
        // Predicated region
        $region93: #{custom-call.11} parent=49 // pred_check
          %p403 = pneg %p62
        $region94: #{custom-call.11} parent=49 // pred_check_branch
          %405 = sbr.rel (%p403) target = $region96
        $region95: #{custom-call.11} parent=49 // pred_region
          %s406 = sshrl.u32 %s14, 3
          %s407 = smul.addr %s406, 2
          %s408 = scalar_lea.vmem %s3, %s407
          // Predicated region
          $region97: #{custom-call.11} parent=95 // pred_check
            _
          $region98: #{custom-call.11} parent=95 // pred_check_branch
            %410 = sbr.rel (0) target = $region100
          $region99: #{custom-call.11} parent=95 // pred_region
            // Predicated region
            $region101: #{custom-call.11} parent=99 // pred_check
              _
            $region102: #{custom-call.11} parent=99 // pred_check_branch
              %412 = sbr.rel target = $region104
            $region103: #{custom-call.11} parent=99 // pred_region
              // Predicated region
              $region116: #{custom-call.11} parent=103 // pred_check
                _
              $region117: #{custom-call.11} parent=103 // pred_check_branch
                %427 = sbr.rel (0) target = $region119
              $region118: #{custom-call.11} parent=103 // pred_region
                loop: start=0, step=1, limit=1
                $region120: #{custom-call.11} parent=118 // loop_pre_header
                  _
                $region121: #{custom-call.11} parent=118 // loop_header
                  %s430 = sphi 0, %s434
                  %p431 = scmp.ge.s32.totalorder %s430, 1
                  %s435 = sphi %s355, %s355
                  %s436 = sphi %s408, %s408
                $region122: #{custom-call.11} parent=118 // loop_header_branch
                  %433 = sbr.rel (%p431) target = $region126
                $region123: #{custom-call.11} parent=118 // loop_body
                  %v437 = vld [vmem:[%s435] sm:$0x3]
                  %438 = vst [vmem:[%s436] sm:$0x3] %v437
                $region124: #{custom-call.11} parent=118 // loop_footer
                  %s434 = sadd.s32 1, %s430
                $region125: #{custom-call.11} parent=118 // loop_footer_branch
                  %429 = sbr.rel target = $region121
                $region126: #{custom-call.11} parent=118 // loop_exit
                  _
              $region119: #{custom-call.11} parent=103 // pred_fallthru
                _
            $region104: #{custom-call.11} parent=99 // pred_fallthru
              _
            // Predicated region
            $region105: #{custom-call.11} parent=99 // pred_check
              _
            $region106: #{custom-call.11} parent=99 // pred_check_branch
              %414 = sbr.rel (0) target = $region108
            $region107: #{custom-call.11} parent=99 // pred_region
              loop: start=0, step=1, limit=1
              $region109: #{custom-call.11} parent=107 // loop_pre_header
                _
              $region110: #{custom-call.11} parent=107 // loop_header
                %s417 = sphi 0, %s421
                %p418 = scmp.ge.s32.totalorder %s417, 1
                %s422 = sphi %s355, %s355
                %s423 = sphi %s408, %s408
              $region111: #{custom-call.11} parent=107 // loop_header_branch
                %420 = sbr.rel (%p418) target = $region115
              $region112: #{custom-call.11} parent=107 // loop_body
                %v424 = vld [vmem:[%s422] sm:$0x3]
                %425 = vst [vmem:[%s423] sm:$0x3] %v424
              $region113: #{custom-call.11} parent=107 // loop_footer
                %s421 = sadd.s32 1, %s417
              $region114: #{custom-call.11} parent=107 // loop_footer_branch
                %416 = sbr.rel target = $region110
              $region115: #{custom-call.11} parent=107 // loop_exit
                _
            $region108: #{custom-call.11} parent=99 // pred_fallthru
              _
          $region100: #{custom-call.11} parent=95 // pred_fallthru
            _
          %439 = vnop
        $region96: #{custom-call.11} parent=49 // pred_fallthru
          _
      $region50: #{custom-call.11} parent=5 // pred_fallthru
        _
      %p440 = scmp.le.s32.totalorder 2, %s9
      // Predicated region
      $region127: #{custom-call.11} parent=5 // pred_check
        %p441 = pneg %p440
      $region128: #{custom-call.11} parent=5 // pred_check_branch
        %443 = sbr.rel (%p441) target = $region130
      $region129: #{custom-call.11} parent=5 // pred_region
        %s444 = ssub.s32 %s9, 2
        %s445 = sand.u32 %s15, 1
        %s446 = sand.u32 %s15, 1
        %s447 = smul.addr %s446, 4
        %s448 = scalar_lea.vmem [#allocation3], %s447
        // Predicated region
        $region131: #{custom-call.11} parent=129 // pred_check
          %p449 = pneg %p40
        $region132: #{custom-call.11} parent=129 // pred_check_branch
          %451 = sbr.rel (%p449) target = $region134
        $region133: #{custom-call.11} parent=129 // pred_region
          %s452 = sand.u32 %s25, 1
          %s453 = scalar_lea.sflag [#allocation6], %s452
          %s454 = sand.u32 %s25, 1
          %s455 = smul.addr %s454, 2
          %s456 = scalar_lea.vmem [#allocation5], %s455
          %457 = dma.done %s453, 32
        $region134: #{custom-call.11} parent=129 // pred_fallthru
          _
        // Predicated region
        $region135: #{custom-call.11} parent=129 // pred_check
          %p458 = pneg %p68
        $region136: #{custom-call.11} parent=129 // pred_check_branch
          %460 = sbr.rel (%p458) target = $region138
        $region137: #{custom-call.11} parent=129 // pred_region
          %s461 = sand.u32 %s53, 1
          %s462 = sand.u32 %s53, 1
          %s463 = smul.addr %s462, 2
          %s464 = scalar_lea.vmem [#allocation8], %s463
        $region138: #{custom-call.11} parent=129 // pred_fallthru
          _
      $region130: #{custom-call.11} parent=5 // pred_fallthru
        _
    $region6: #{custom-call.11} parent=1 // loop_footer
      %s13 = sadd.s32 1, %s9
    $region7: #{custom-call.11} parent=1 // loop_footer_branch
      %8 = sbr.rel target = $region3
    $region8: #{custom-call.11} parent=1 // loop_exit
      _
    %465 = vsyncpa [#allocation6], 1
    %s466 = scalar_lea.sflag [#allocation6], 1
    %467 = vsyncpa %s466, 1

// kernel: custom-call.13
$region0: #{custom-call.13}
  %s0 = inlined_call_operand.vmem [shape: f32[2,1,4,4], index: 0, kind: input, shape index: {}]
  %s1 = inlined_call_operand.vmem [shape: f32[2,1,4,4], index: 1, kind: output, shape index: {}]
  $region1: #{custom-call.13} parent=0
    #allocation0 [shape = 'u8[4096]{0}', space=vmem, size = 0x1000, scoped, tag = 'operand span for operand 0']
    #allocation1 [shape = 'u8[4096]{0}', space=vmem, size = 0x1000, scoped, tag = 'packed  for operand 0']
    #allocation2 [shape = 'u8[4096]{0}', space=vmem, size = 0x1000, scoped, tag = 'operand span for operand 1']
    #allocation3 [shape = 'u8[4096]{0}', space=vmem, size = 0x1000, scoped, tag = 'packed  for operand 1']
    loop: start=0, step=1, limit=4
    $region2: #{custom-call.13} parent=1 // loop_pre_header
      _
    $region3: #{custom-call.13} parent=1 // loop_header
      %s3 = sphi 0, %s7
      %p4 = scmp.ge.s32.totalorder %s3, 4
      %s10 = sphi 0, %s36
      %s11 = sphi 0, %s32
      %s12 = sphi 0, %s28
      %s13 = sphi 0, %s24
      %s14 = sphi 0, %s10
      %s15 = sphi 0, %s11
      %s16 = sphi 0, %s12
      %s17 = sphi 0, %s13
      %s18 = sphi 0, %s14
      %s19 = sphi 0, %s15
      %s20 = sphi 0, %s16
      %s21 = sphi 0, %s17
    $region4: #{custom-call.13} parent=1 // loop_header_branch
      %6 = sbr.rel (%p4) target = $region8
    $region5: #{custom-call.13} parent=1 // loop_body
      %s8 = ssub.s32 %s3, 1
      %s9 = ssub.s32 %s3, 2
      %s22 = sadd.s32 1, %s13
      %p23 = scmp.ge.s32.totalorder %s22, 1
      %s24 = scalar_select %p23, 0, %s22
      %s25 = sadd.s32 1, %s12
      %s26 = scalar_select %p23, %s25, %s12
      %p27 = scmp.ge.s32.totalorder %s26, 1
      %s28 = scalar_select %p27, 0, %s26
      %s29 = sadd.s32 1, %s11
      %s30 = scalar_select %p27, %s29, %s11
      %p31 = scmp.ge.s32.totalorder %s30, 1
      %s32 = scalar_select %p31, 0, %s30
      %s33 = sadd.s32 1, %s10
      %s34 = scalar_select %p31, %s33, %s10
      %p35 = scmp.ge.s32.totalorder %s34, 2
      %s36 = scalar_select %p35, 0, %s34
      %p37 = scmp.le.s32.totalorder 1, %s3
      %p38 = scmp.lt.s32.totalorder %s3, 3
      %p39 = pnand %p37, %p38
      %p40 = pneg %p39
      // Predicated region
      $region9: #{custom-call.13} parent=5 // pred_check
        _
      $region10: #{custom-call.13} parent=5 // pred_check_branch
        %42 = sbr.rel (%p39) target = $region12
      $region11: #{custom-call.13} parent=5 // pred_region
        %s43 = ssub.s32 %s3, 1
      $region12: #{custom-call.13} parent=5 // pred_fallthru
        _
      %p44 = scmp.lt.s32.totalorder %s3, 2
      // Predicated region
      $region13: #{custom-call.13} parent=5 // pred_check
        %p45 = pneg %p44
      $region14: #{custom-call.13} parent=5 // pred_check_branch
        %47 = sbr.rel (%p45) target = $region16
      $region15: #{custom-call.13} parent=5 // pred_region
        %s48 = sand.u32 %s3, 1
        %s49 = sand.u32 %s3, 1
        %s50 = smul.addr %s49, 4
        %s51 = scalar_lea.vmem [#allocation1], %s50
        %s52 = sadd.s32 %s13, %s12
        %s53 = sadd.s32 %s52, %s11
        %s54 = sadd.s32 %s53, %s10
        %s55 = smul.addr %s54, 4
        %s56 = scalar_lea.vmem %s0, %s55
        // Predicated region
        $region17: #{custom-call.13} parent=15 // pred_check
          _
        $region18: #{custom-call.13} parent=15 // pred_check_branch
          %58 = sbr.rel (0) target = $region20
        $region19: #{custom-call.13} parent=15 // pred_region
          // Predicated region
          $region21: #{custom-call.13} parent=19 // pred_check
            _
          $region22: #{custom-call.13} parent=19 // pred_check_branch
            %60 = sbr.rel target = $region24
          $region23: #{custom-call.13} parent=19 // pred_region
            // Predicated region
            $region36: #{custom-call.13} parent=23 // pred_check
              _
            $region37: #{custom-call.13} parent=23 // pred_check_branch
              %75 = sbr.rel (0) target = $region39
            $region38: #{custom-call.13} parent=23 // pred_region
              loop: start=0, step=1, limit=1
              $region40: #{custom-call.13} parent=38 // loop_pre_header
                _
              $region41: #{custom-call.13} parent=38 // loop_header
                %s78 = sphi 0, %s82
                %p79 = scmp.ge.s32.totalorder %s78, 1
                %s83 = sphi %s56, %s56
                %s84 = sphi %s51, %s51
              $region42: #{custom-call.13} parent=38 // loop_header_branch
                %81 = sbr.rel (%p79) target = $region46
              $region43: #{custom-call.13} parent=38 // loop_body
                %v85 = vld [vmem:[%s83] sm:$0xf]
                %86 = vst [vmem:[%s84] sm:$0xf] %v85
              $region44: #{custom-call.13} parent=38 // loop_footer
                %s82 = sadd.s32 1, %s78
              $region45: #{custom-call.13} parent=38 // loop_footer_branch
                %77 = sbr.rel target = $region41
              $region46: #{custom-call.13} parent=38 // loop_exit
                _
            $region39: #{custom-call.13} parent=23 // pred_fallthru
              _
          $region24: #{custom-call.13} parent=19 // pred_fallthru
            _
          // Predicated region
          $region25: #{custom-call.13} parent=19 // pred_check
            _
          $region26: #{custom-call.13} parent=19 // pred_check_branch
            %62 = sbr.rel (0) target = $region28
          $region27: #{custom-call.13} parent=19 // pred_region
            loop: start=0, step=1, limit=1
            $region29: #{custom-call.13} parent=27 // loop_pre_header
              _
            $region30: #{custom-call.13} parent=27 // loop_header
              %s65 = sphi 0, %s69
              %p66 = scmp.ge.s32.totalorder %s65, 1
              %s70 = sphi %s56, %s56
              %s71 = sphi %s51, %s51
            $region31: #{custom-call.13} parent=27 // loop_header_branch
              %68 = sbr.rel (%p66) target = $region35
            $region32: #{custom-call.13} parent=27 // loop_body
              %v72 = vld [vmem:[%s70] sm:$0xf]
              %73 = vst [vmem:[%s71] sm:$0xf] %v72
            $region33: #{custom-call.13} parent=27 // loop_footer
              %s69 = sadd.s32 1, %s65
            $region34: #{custom-call.13} parent=27 // loop_footer_branch
              %64 = sbr.rel target = $region30
            $region35: #{custom-call.13} parent=27 // loop_exit
              _
          $region28: #{custom-call.13} parent=19 // pred_fallthru
            _
        $region20: #{custom-call.13} parent=15 // pred_fallthru
          _
        %87 = vnop
      $region16: #{custom-call.13} parent=5 // pred_fallthru
        _
      %p88 = scmp.le.s32.totalorder 1, %s3
      %p89 = scmp.lt.s32.totalorder %s3, 3
      %p90 = pnand %p88, %p89
      %p91 = pneg %p90
      // Predicated region
      $region47: #{custom-call.13} parent=5 // pred_check
        _
      $region48: #{custom-call.13} parent=5 // pred_check_branch
        %93 = sbr.rel (%p90) target = $region50
      $region49: #{custom-call.13} parent=5 // pred_region
        #allocation4 [shape = 'f32[4,4]{1,0}', space=vmem, size = 0x1000, scoped, tag = 'rescaled input a']
        %s94 = ssub.s32 %s3, 1
        %s95 = sand.u32 %s8, 1
        %s96 = sand.u32 %s8, 1
        %s97 = smul.addr %s96, 4
        %s98 = scalar_lea.vmem [#allocation1], %s97
        %s99 = sand.u32 %s8, 1
        %s100 = sand.u32 %s8, 1
        %s101 = smul.addr %s100, 4
        %s102 = scalar_lea.vmem [#allocation1], %s101
        %s103 = sand.u32 %s8, 1
        %s104 = sand.u32 %s8, 1
        %s105 = smul.addr %s104, 4
        %s106 = scalar_lea.vmem [#allocation3], %s105
        %s108 = sshllo.u32 0, 4
        %v109 = vld [vmem:[%s102] sm:%s108]
        %110 = vst [vmem:[#allocation0] sm:%s108] %v109
        %v111 = vlaneseq
        %v112 = vand.u32 %v111, 127
        %vm113 = vcmp.lt.s32.totalorder %v112, 4
        %v114 = vlaneseq
        %v115 = vshrl.u32 %v114, 7
        %vm117 = vcmp.eq.s32.totalorder %v115, %v112
        %v118 = vld [vmem:[#allocation0] sm:$0xff]
        %v119 = vsel %vm117, %v118, 0.0
        %120 = vadd.xlane.f32.xlu0 %v119
        %v121 = vpop.xlane.xlu0 %120
        %vm122 = vcmp.ge.s32.totalorder %v115, %v112
        %vm123 = vmand %vm122, %vm113
        %v124 = vsel %vm123, %v118, 0.0
        %v125 = vrcp.pop %v121
        %v126 = vmul.f32 %v124, %v125
        %127 = vst [vmem:[#allocation4] sm:$0xff] %v126
        %v128 = vlaneseq
        %v129 = vand.u32 %v128, 127
        %v130 = vlaneseq
        %v131 = vshrl.u32 %v130, 7
        %vm133 = vcmp.eq.s32.totalorder %v129, %v131
        %v134 = vlaneseq
        %v135 = vand.u32 %v134, 127
        %vm136 = vcmp.eq.s32.totalorder %v135, 0
        %v137 = vsel %vm136, 1.0, -1.0
        %v138 = vsel %vm133, %v137, 0.0
        %s139 = scalar_lea.vmem [#allocation4], 1
        %v140 = vld [vmem:[%s139] ss:$0 sm:$0xff]
        %v141 = vxor.u32 %v140, 2147483648
        %v142 = vlaneseq
        %v143 = vand.u32 %v142, 127
        %vm144 = vcmp.eq.s32.totalorder %v143, 1
        %v145 = vmul.f32 %v141, %v138
        %146 = vadd.xlane.f32.xlu0 %v145
        %v147 = vpop.xlane.xlu0 %146
        %v148 = vsel %vm144, %v147, %v138
        %s149 = scalar_lea.vmem [#allocation4], 2
        %v150 = vld [vmem:[%s149] ss:$0 sm:$0xff]
        %v151 = vxor.u32 %v150, 2147483648
        %v152 = vlaneseq
        %v153 = vand.u32 %v152, 127
        %vm154 = vcmp.eq.s32.totalorder %v153, 2
        %v155 = vmul.f32 %v151, %v148
        %156 = vadd.xlane.f32.xlu0 %v155
        %v157 = vpop.xlane.xlu0 %156
        %v158 = vsel %vm154, %v157, %v148
        %s159 = scalar_lea.vmem [#allocation4], 3
        %v160 = vld [vmem:[%s159] ss:$0 sm:$0xff]
        %v161 = vxor.u32 %v160, 2147483648
        %v162 = vlaneseq
        %v163 = vand.u32 %v162, 127
        %vm164 = vcmp.eq.s32.totalorder %v163, 3
        %v165 = vmul.f32 %v161, %v158
        %166 = vadd.xlane.f32.xlu0 %v165
        %v167 = vpop.xlane.xlu0 %166
        %v168 = vsel %vm164, %v167, %v158
        %v169 = vrcp.pop %v121
        %v170 = vmul.f32 %v168, %v169
        %vm171 = vweird.f32 %v121
        %v172 = vsel %vm171, %v168, %v170
        %173 = vst [vmem:[#allocation2] sm:$0xff] %v172
        %s175 = sshllo.u32 0, 4
        %v177 = vld [vmem:[#allocation2] sm:%s175]
        %s178 = sshllo.u32 0, 4
        %179 = vst [vmem:[%s106] sm:%s178] %v177
        %s180 = sand.u32 %s8, 1
        %s181 = sand.u32 %s8, 1
        %s182 = smul.addr %s181, 4
        %s183 = scalar_lea.vmem [#allocation3], %s182
        %s184 = sadd.s32 %s17, %s16
        %s185 = sadd.s32 %s184, %s15
        %s186 = sadd.s32 %s185, %s14
        %s187 = smul.addr %s186, 4
        %s188 = scalar_lea.vmem %s1, %s187
        // Predicated region
        $region51: #{custom-call.13} parent=49 // pred_check
          _
        $region52: #{custom-call.13} parent=49 // pred_check_branch
          %190 = sbr.rel (0) target = $region54
        $region53: #{custom-call.13} parent=49 // pred_region
          // Predicated region
          $region55: #{custom-call.13} parent=53 // pred_check
            _
          $region56: #{custom-call.13} parent=53 // pred_check_branch
            %192 = sbr.rel target = $region58
          $region57: #{custom-call.13} parent=53 // pred_region
            // Predicated region
            $region70: #{custom-call.13} parent=57 // pred_check
              _
            $region71: #{custom-call.13} parent=57 // pred_check_branch
              %207 = sbr.rel (0) target = $region73
            $region72: #{custom-call.13} parent=57 // pred_region
              loop: start=0, step=1, limit=1
              $region74: #{custom-call.13} parent=72 // loop_pre_header
                _
              $region75: #{custom-call.13} parent=72 // loop_header
                %s210 = sphi 0, %s214
                %p211 = scmp.ge.s32.totalorder %s210, 1
                %s215 = sphi %s183, %s183
                %s216 = sphi %s188, %s188
              $region76: #{custom-call.13} parent=72 // loop_header_branch
                %213 = sbr.rel (%p211) target = $region80
              $region77: #{custom-call.13} parent=72 // loop_body
                %v217 = vld [vmem:[%s215] sm:$0xf]
                %218 = vst [vmem:[%s216] sm:$0xf] %v217
              $region78: #{custom-call.13} parent=72 // loop_footer
                %s214 = sadd.s32 1, %s210
              $region79: #{custom-call.13} parent=72 // loop_footer_branch
                %209 = sbr.rel target = $region75
              $region80: #{custom-call.13} parent=72 // loop_exit
                _
            $region73: #{custom-call.13} parent=57 // pred_fallthru
              _
          $region58: #{custom-call.13} parent=53 // pred_fallthru
            _
          // Predicated region
          $region59: #{custom-call.13} parent=53 // pred_check
            _
          $region60: #{custom-call.13} parent=53 // pred_check_branch
            %194 = sbr.rel (0) target = $region62
          $region61: #{custom-call.13} parent=53 // pred_region
            loop: start=0, step=1, limit=1
            $region63: #{custom-call.13} parent=61 // loop_pre_header
              _
            $region64: #{custom-call.13} parent=61 // loop_header
              %s197 = sphi 0, %s201
              %p198 = scmp.ge.s32.totalorder %s197, 1
              %s202 = sphi %s183, %s183
              %s203 = sphi %s188, %s188
            $region65: #{custom-call.13} parent=61 // loop_header_branch
              %200 = sbr.rel (%p198) target = $region69
            $region66: #{custom-call.13} parent=61 // loop_body
              %v204 = vld [vmem:[%s202] sm:$0xf]
              %205 = vst [vmem:[%s203] sm:$0xf] %v204
            $region67: #{custom-call.13} parent=61 // loop_footer
              %s201 = sadd.s32 1, %s197
            $region68: #{custom-call.13} parent=61 // loop_footer_branch
              %196 = sbr.rel target = $region64
            $region69: #{custom-call.13} parent=61 // loop_exit
              _
          $region62: #{custom-call.13} parent=53 // pred_fallthru
            _
        $region54: #{custom-call.13} parent=49 // pred_fallthru
          _
        %219 = vnop
      $region50: #{custom-call.13} parent=5 // pred_fallthru
        _
      %p220 = scmp.le.s32.totalorder 2, %s3
      // Predicated region
      $region81: #{custom-call.13} parent=5 // pred_check
        %p221 = pneg %p220
      $region82: #{custom-call.13} parent=5 // pred_check_branch
        %223 = sbr.rel (%p221) target = $region84
      $region83: #{custom-call.13} parent=5 // pred_region
        %s224 = ssub.s32 %s3, 2
        %s225 = sand.u32 %s9, 1
        %s226 = sand.u32 %s9, 1
        %s227 = smul.addr %s226, 4
        %s228 = scalar_lea.vmem [#allocation3], %s227
      $region84: #{custom-call.13} parent=5 // pred_fallthru
        _
    $region6: #{custom-call.13} parent=1 // loop_footer
      %s7 = sadd.s32 1, %s3
    $region7: #{custom-call.13} parent=1 // loop_footer_branch
      %2 = sbr.rel target = $region3
    $region8: #{custom-call.13} parent=1 // loop_exit
      _

// kernel: custom-call.12
$region0: #{custom-call.12}
  %s0 = inlined_call_operand.vmem [shape: f32[2,1,4,4], index: 0, kind: input, shape index: {}]
  %s1 = inlined_call_operand.vmem [shape: f32[2,1,4,4], index: 1, kind: output, shape index: {}]
  $region1: #{custom-call.12} parent=0
    #allocation0 [shape = 'u8[4096]{0}', space=vmem, size = 0x1000, scoped, tag = 'operand span for operand 0']
    #allocation1 [shape = 'u8[4096]{0}', space=vmem, size = 0x1000, scoped, tag = 'packed  for operand 0']
    #allocation2 [shape = 'u8[4096]{0}', space=vmem, size = 0x1000, scoped, tag = 'operand span for operand 1']
    #allocation3 [shape = 'u8[4096]{0}', space=vmem, size = 0x1000, scoped, tag = 'packed  for operand 1']
    loop: start=0, step=1, limit=4
    $region2: #{custom-call.12} parent=1 // loop_pre_header
      _
    $region3: #{custom-call.12} parent=1 // loop_header
      %s3 = sphi 0, %s7
      %p4 = scmp.ge.s32.totalorder %s3, 4
      %s10 = sphi 0, %s36
      %s11 = sphi 0, %s32
      %s12 = sphi 0, %s28
      %s13 = sphi 0, %s24
      %s14 = sphi 0, %s10
      %s15 = sphi 0, %s11
      %s16 = sphi 0, %s12
      %s17 = sphi 0, %s13
      %s18 = sphi 0, %s14
      %s19 = sphi 0, %s15
      %s20 = sphi 0, %s16
      %s21 = sphi 0, %s17
    $region4: #{custom-call.12} parent=1 // loop_header_branch
      %6 = sbr.rel (%p4) target = $region8
    $region5: #{custom-call.12} parent=1 // loop_body
      %s8 = ssub.s32 %s3, 1
      %s9 = ssub.s32 %s3, 2
      %s22 = sadd.s32 1, %s13
      %p23 = scmp.ge.s32.totalorder %s22, 1
      %s24 = scalar_select %p23, 0, %s22
      %s25 = sadd.s32 1, %s12
      %s26 = scalar_select %p23, %s25, %s12
      %p27 = scmp.ge.s32.totalorder %s26, 1
      %s28 = scalar_select %p27, 0, %s26
      %s29 = sadd.s32 1, %s11
      %s30 = scalar_select %p27, %s29, %s11
      %p31 = scmp.ge.s32.totalorder %s30, 1
      %s32 = scalar_select %p31, 0, %s30
      %s33 = sadd.s32 1, %s10
      %s34 = scalar_select %p31, %s33, %s10
      %p35 = scmp.ge.s32.totalorder %s34, 2
      %s36 = scalar_select %p35, 0, %s34
      %p37 = scmp.le.s32.totalorder 1, %s3
      %p38 = scmp.lt.s32.totalorder %s3, 3
      %p39 = pnand %p37, %p38
      %p40 = pneg %p39
      // Predicated region
      $region9: #{custom-call.12} parent=5 // pred_check
        _
      $region10: #{custom-call.12} parent=5 // pred_check_branch
        %42 = sbr.rel (%p39) target = $region12
      $region11: #{custom-call.12} parent=5 // pred_region
        %s43 = ssub.s32 %s3, 1
      $region12: #{custom-call.12} parent=5 // pred_fallthru
        _
      %p44 = scmp.lt.s32.totalorder %s3, 2
      // Predicated region
      $region13: #{custom-call.12} parent=5 // pred_check
        %p45 = pneg %p44
      $region14: #{custom-call.12} parent=5 // pred_check_branch
        %47 = sbr.rel (%p45) target = $region16
      $region15: #{custom-call.12} parent=5 // pred_region
        %s48 = sand.u32 %s3, 1
        %s49 = sand.u32 %s3, 1
        %s50 = smul.addr %s49, 4
        %s51 = scalar_lea.vmem [#allocation1], %s50
        %s52 = sadd.s32 %s13, %s12
        %s53 = sadd.s32 %s52, %s11
        %s54 = sadd.s32 %s53, %s10
        %s55 = smul.addr %s54, 4
        %s56 = scalar_lea.vmem %s0, %s55
        // Predicated region
        $region17: #{custom-call.12} parent=15 // pred_check
          _
        $region18: #{custom-call.12} parent=15 // pred_check_branch
          %58 = sbr.rel (0) target = $region20
        $region19: #{custom-call.12} parent=15 // pred_region
          // Predicated region
          $region21: #{custom-call.12} parent=19 // pred_check
            _
          $region22: #{custom-call.12} parent=19 // pred_check_branch
            %60 = sbr.rel target = $region24
          $region23: #{custom-call.12} parent=19 // pred_region
            // Predicated region
            $region36: #{custom-call.12} parent=23 // pred_check
              _
            $region37: #{custom-call.12} parent=23 // pred_check_branch
              %75 = sbr.rel (0) target = $region39
            $region38: #{custom-call.12} parent=23 // pred_region
              loop: start=0, step=1, limit=1
              $region40: #{custom-call.12} parent=38 // loop_pre_header
                _
              $region41: #{custom-call.12} parent=38 // loop_header
                %s78 = sphi 0, %s82
                %p79 = scmp.ge.s32.totalorder %s78, 1
                %s83 = sphi %s56, %s56
                %s84 = sphi %s51, %s51
              $region42: #{custom-call.12} parent=38 // loop_header_branch
                %81 = sbr.rel (%p79) target = $region46
              $region43: #{custom-call.12} parent=38 // loop_body
                %v85 = vld [vmem:[%s83] sm:$0xf]
                %86 = vst [vmem:[%s84] sm:$0xf] %v85
              $region44: #{custom-call.12} parent=38 // loop_footer
                %s82 = sadd.s32 1, %s78
              $region45: #{custom-call.12} parent=38 // loop_footer_branch
                %77 = sbr.rel target = $region41
              $region46: #{custom-call.12} parent=38 // loop_exit
                _
            $region39: #{custom-call.12} parent=23 // pred_fallthru
              _
          $region24: #{custom-call.12} parent=19 // pred_fallthru
            _
          // Predicated region
          $region25: #{custom-call.12} parent=19 // pred_check
            _
          $region26: #{custom-call.12} parent=19 // pred_check_branch
            %62 = sbr.rel (0) target = $region28
          $region27: #{custom-call.12} parent=19 // pred_region
            loop: start=0, step=1, limit=1
            $region29: #{custom-call.12} parent=27 // loop_pre_header
              _
            $region30: #{custom-call.12} parent=27 // loop_header
              %s65 = sphi 0, %s69
              %p66 = scmp.ge.s32.totalorder %s65, 1
              %s70 = sphi %s56, %s56
              %s71 = sphi %s51, %s51
            $region31: #{custom-call.12} parent=27 // loop_header_branch
              %68 = sbr.rel (%p66) target = $region35
            $region32: #{custom-call.12} parent=27 // loop_body
              %v72 = vld [vmem:[%s70] sm:$0xf]
              %73 = vst [vmem:[%s71] sm:$0xf] %v72
            $region33: #{custom-call.12} parent=27 // loop_footer
              %s69 = sadd.s32 1, %s65
            $region34: #{custom-call.12} parent=27 // loop_footer_branch
              %64 = sbr.rel target = $region30
            $region35: #{custom-call.12} parent=27 // loop_exit
              _
          $region28: #{custom-call.12} parent=19 // pred_fallthru
            _
        $region20: #{custom-call.12} parent=15 // pred_fallthru
          _
        %87 = vnop
      $region16: #{custom-call.12} parent=5 // pred_fallthru
        _
      %p88 = scmp.le.s32.totalorder 1, %s3
      %p89 = scmp.lt.s32.totalorder %s3, 3
      %p90 = pnand %p88, %p89
      %p91 = pneg %p90
      // Predicated region
      $region47: #{custom-call.12} parent=5 // pred_check
        _
      $region48: #{custom-call.12} parent=5 // pred_check_branch
        %93 = sbr.rel (%p90) target = $region50
      $region49: #{custom-call.12} parent=5 // pred_region
        #allocation4 [shape = 'f32[4,4]{1,0}', space=vmem, size = 0x1000, scoped, tag = 'rescaled input a']
        %s94 = ssub.s32 %s3, 1
        %s95 = sand.u32 %s8, 1
        %s96 = sand.u32 %s8, 1
        %s97 = smul.addr %s96, 4
        %s98 = scalar_lea.vmem [#allocation1], %s97
        %s99 = sand.u32 %s8, 1
        %s100 = sand.u32 %s8, 1
        %s101 = smul.addr %s100, 4
        %s102 = scalar_lea.vmem [#allocation1], %s101
        %s103 = sand.u32 %s8, 1
        %s104 = sand.u32 %s8, 1
        %s105 = smul.addr %s104, 4
        %s106 = scalar_lea.vmem [#allocation3], %s105
        %s108 = sshllo.u32 0, 4
        %v109 = vld [vmem:[%s102] sm:%s108]
        %110 = vst [vmem:[#allocation0] sm:%s108] %v109
        %v111 = vlaneseq
        %v112 = vand.u32 %v111, 127
        %vm113 = vcmp.lt.s32.totalorder %v112, 4
        %v114 = vlaneseq
        %v115 = vshrl.u32 %v114, 7
        %vm117 = vcmp.eq.s32.totalorder %v115, %v112
        %v118 = vld [vmem:[#allocation0] sm:$0xff]
        %v119 = vsel %vm117, %v118, 0.0
        %120 = vadd.xlane.f32.xlu0 %v119
        %v121 = vpop.xlane.xlu0 %120
        %vm122 = vcmp.le.s32.totalorder %v115, %v112
        %vm123 = vmand %vm122, %vm113
        %v124 = vsel %vm123, %v118, 0.0
        %v125 = vrcp.pop %v121
        %v126 = vmul.f32 %v124, %v125
        %127 = vst [vmem:[#allocation4] sm:$0xff] %v126
        %v128 = vlaneseq
        %v129 = vand.u32 %v128, 127
        %v130 = vlaneseq
        %v131 = vshrl.u32 %v130, 7
        %vm133 = vcmp.eq.s32.totalorder %v129, %v131
        %v134 = vlaneseq
        %v135 = vand.u32 %v134, 127
        %vm136 = vcmp.eq.s32.totalorder %v135, 3
        %v137 = vsel %vm136, 1.0, -1.0
        %v138 = vsel %vm133, %v137, 0.0
        %s139 = scalar_lea.vmem [#allocation4], 2
        %v140 = vld [vmem:[%s139] ss:$0 sm:$0xff]
        %v141 = vxor.u32 %v140, 2147483648
        %v142 = vlaneseq
        %v143 = vand.u32 %v142, 127
        %vm144 = vcmp.eq.s32.totalorder %v143, 2
        %v145 = vmul.f32 %v141, %v138
        %146 = vadd.xlane.f32.xlu0 %v145
        %v147 = vpop.xlane.xlu0 %146
        %v148 = vsel %vm144, %v147, %v138
        %s149 = scalar_lea.vmem [#allocation4], 1
        %v150 = vld [vmem:[%s149] ss:$0 sm:$0xff]
        %v151 = vxor.u32 %v150, 2147483648
        %v152 = vlaneseq
        %v153 = vand.u32 %v152, 127
        %vm154 = vcmp.eq.s32.totalorder %v153, 1
        %v155 = vmul.f32 %v151, %v148
        %156 = vadd.xlane.f32.xlu0 %v155
        %v157 = vpop.xlane.xlu0 %156
        %v158 = vsel %vm154, %v157, %v148
        %v159 = vld [vmem:[#allocation4] ss:$0 sm:$0xff]
        %v160 = vxor.u32 %v159, 2147483648
        %v161 = vlaneseq
        %v162 = vand.u32 %v161, 127
        %vm163 = vcmp.eq.s32.totalorder %v162, 0
        %v164 = vmul.f32 %v160, %v158
        %165 = vadd.xlane.f32.xlu0 %v164
        %v166 = vpop.xlane.xlu0 %165
        %v167 = vsel %vm163, %v166, %v158
        %v168 = vrcp.pop %v121
        %v169 = vmul.f32 %v167, %v168
        %vm170 = vweird.f32 %v121
        %v171 = vsel %vm170, %v167, %v169
        %172 = vst [vmem:[#allocation2] sm:$0xff] %v171
        %s174 = sshllo.u32 0, 4
        %v176 = vld [vmem:[#allocation2] sm:%s174]
        %s177 = sshllo.u32 0, 4
        %178 = vst [vmem:[%s106] sm:%s177] %v176
        %s179 = sand.u32 %s8, 1
        %s180 = sand.u32 %s8, 1
        %s181 = smul.addr %s180, 4
        %s182 = scalar_lea.vmem [#allocation3], %s181
        %s183 = sadd.s32 %s17, %s16
        %s184 = sadd.s32 %s183, %s15
        %s185 = sadd.s32 %s184, %s14
        %s186 = smul.addr %s185, 4
        %s187 = scalar_lea.vmem %s1, %s186
        // Predicated region
        $region51: #{custom-call.12} parent=49 // pred_check
          _
        $region52: #{custom-call.12} parent=49 // pred_check_branch
          %189 = sbr.rel (0) target = $region54
        $region53: #{custom-call.12} parent=49 // pred_region
          // Predicated region
          $region55: #{custom-call.12} parent=53 // pred_check
            _
          $region56: #{custom-call.12} parent=53 // pred_check_branch
            %191 = sbr.rel target = $region58
          $region57: #{custom-call.12} parent=53 // pred_region
            // Predicated region
            $region70: #{custom-call.12} parent=57 // pred_check
              _
            $region71: #{custom-call.12} parent=57 // pred_check_branch
              %206 = sbr.rel (0) target = $region73
            $region72: #{custom-call.12} parent=57 // pred_region
              loop: start=0, step=1, limit=1
              $region74: #{custom-call.12} parent=72 // loop_pre_header
                _
              $region75: #{custom-call.12} parent=72 // loop_header
                %s209 = sphi 0, %s213
                %p210 = scmp.ge.s32.totalorder %s209, 1
                %s214 = sphi %s182, %s182
                %s215 = sphi %s187, %s187
              $region76: #{custom-call.12} parent=72 // loop_header_branch
                %212 = sbr.rel (%p210) target = $region80
              $region77: #{custom-call.12} parent=72 // loop_body
                %v216 = vld [vmem:[%s214] sm:$0xf]
                %217 = vst [vmem:[%s215] sm:$0xf] %v216
              $region78: #{custom-call.12} parent=72 // loop_footer
                %s213 = sadd.s32 1, %s209
              $region79: #{custom-call.12} parent=72 // loop_footer_branch
                %208 = sbr.rel target = $region75
              $region80: #{custom-call.12} parent=72 // loop_exit
                _
            $region73: #{custom-call.12} parent=57 // pred_fallthru
              _
          $region58: #{custom-call.12} parent=53 // pred_fallthru
            _
          // Predicated region
          $region59: #{custom-call.12} parent=53 // pred_check
            _
          $region60: #{custom-call.12} parent=53 // pred_check_branch
            %193 = sbr.rel (0) target = $region62
          $region61: #{custom-call.12} parent=53 // pred_region
            loop: start=0, step=1, limit=1
            $region63: #{custom-call.12} parent=61 // loop_pre_header
              _
            $region64: #{custom-call.12} parent=61 // loop_header
              %s196 = sphi 0, %s200
              %p197 = scmp.ge.s32.totalorder %s196, 1
              %s201 = sphi %s182, %s182
              %s202 = sphi %s187, %s187
            $region65: #{custom-call.12} parent=61 // loop_header_branch
              %199 = sbr.rel (%p197) target = $region69
            $region66: #{custom-call.12} parent=61 // loop_body
              %v203 = vld [vmem:[%s201] sm:$0xf]
              %204 = vst [vmem:[%s202] sm:$0xf] %v203
            $region67: #{custom-call.12} parent=61 // loop_footer
              %s200 = sadd.s32 1, %s196
            $region68: #{custom-call.12} parent=61 // loop_footer_branch
              %195 = sbr.rel target = $region64
            $region69: #{custom-call.12} parent=61 // loop_exit
              _
          $region62: #{custom-call.12} parent=53 // pred_fallthru
            _
        $region54: #{custom-call.12} parent=49 // pred_fallthru
          _
        %218 = vnop
      $region50: #{custom-call.12} parent=5 // pred_fallthru
        _
      %p219 = scmp.le.s32.totalorder 2, %s3
      // Predicated region
      $region81: #{custom-call.12} parent=5 // pred_check
        %p220 = pneg %p219
      $region82: #{custom-call.12} parent=5 // pred_check_branch
        %222 = sbr.rel (%p220) target = $region84
      $region83: #{custom-call.12} parent=5 // pred_region
        %s223 = ssub.s32 %s3, 2
        %s224 = sand.u32 %s9, 1
        %s225 = sand.u32 %s9, 1
        %s226 = smul.addr %s225, 4
        %s227 = scalar_lea.vmem [#allocation3], %s226
      $region84: #{custom-call.12} parent=5 // pred_fallthru
        _
    $region6: #{custom-call.12} parent=1 // loop_footer
      %s7 = sadd.s32 1, %s3
    $region7: #{custom-call.12} parent=1 // loop_footer_branch
      %2 = sbr.rel target = $region3
    $region8: #{custom-call.12} parent=1 // loop_exit
      _

// kernel: _lambda_.5
$region0: #{_lambda_.5}
  #allocation0 [shape = 'u32[]', space=smem, size = 0x4, offset = 0x4, fixed_abs, tag = 'smem constant byte address 0x4 - core index']
  #allocation1 [shape = 'u32[144,128]{1,0:T(1,128)}', space=vmem, size = 0x12000, scoped, tag = 'internal scratch']
  %s0 = inlined_call_operand.vmem [shape: f32[3,256], index: 0, kind: input, shape index: {}]
  %s1 = inlined_call_operand.vmem [shape: f32[4,1,256], index: 1, kind: input, shape index: {}]
  %s2 = inlined_call_operand.vmem [shape: f32[4,3,3], index: 2, kind: input, shape index: {}]
  %s3 = inlined_call_operand.vmem [shape: f32[4,3,1], index: 3, kind: input, shape index: {}]
  %s4 = inlined_call_operand.vmem [shape: f32[4,3,256], index: 4, kind: output, shape index: {}]
  %s5 = sld [smem:[#allocation0]]
  $region49: #{_lambda_.5} parent=0
    _
  %s7 = ssub.s32 1, %s5
  %s8 = scalar_select 0, %s7, %s5
  loop: start=0, step=1, limit=6
  $region2: #{_lambda_.5} parent=0 // loop_pre_header
    _
  $region3: #{_lambda_.5} parent=0 // loop_header
    %s10 = sphi 0, %s14
    %p11 = scmp.ge.s32.totalorder %s10, 6
    %s17 = sphi 0, %s29
    %s18 = sphi 0, %s25
    %s19 = sphi 0, %s17
    %s20 = sphi 0, %s18
    %s21 = sphi 0, %s19
    %s22 = sphi 0, %s20
    %s32 = sphi 0, %s34
    %s35 = sphi 0, %s32
    %s36 = sphi 0, %s35
    %s52 = sphi 0, %s36
    %s60 = sphi 0, %s62
    %s63 = sphi 0, %s60
    %s64 = sphi 0, %s63
    %s80 = sphi 0, %s64
    %s86 = sphi 0, %s88
    %s89 = sphi 0, %s86
    %s90 = sphi 0, %s89
    %s106 = sphi 0, %s90
    %s112 = sphi 0, %s114
    %s115 = sphi 0, %s112
    %s116 = sphi 0, %s115
    %s132 = sphi 0, %s116
    %s140 = sphi 0, %s142
    %s143 = sphi 0, %s140
    %s144 = sphi 0, %s143
    %s160 = sphi 0, %s144
  $region4: #{_lambda_.5} parent=0 // loop_header_branch
    %13 = sbr.rel (%p11) target = $region8
  $region5: #{_lambda_.5} parent=0 // loop_body
    %s15 = ssub.s32 %s10, 1
    %s16 = ssub.s32 %s10, 2
    %s23 = sadd.s32 1, %s18
    %p24 = scmp.ge.s32.totalorder %s23, 1
    %s25 = scalar_select %p24, 0, %s23
    %s26 = sadd.s32 1, %s17
    %s27 = scalar_select %p24, %s26, %s17
    %p28 = scmp.ge.s32.totalorder %s27, 4
    %s29 = scalar_select %p28, 0, %s27
    %s30 = ssub.s32 %s18, %s25
    %p31 = scmp.eq.s32.totalorder %s30, 0
    %s33 = sadd.s32 %s32, 1
    %s34 = scalar_select %p31, %s32, %s33
    %p37 = pneg %p31
    %p38 = scmp.eq.s32.totalorder %s10, 3
    %p39 = por %p37, %p38
    %p40 = scmp.ne.s32.totalorder %s32, %s35
    %p41 = scmp.eq.s32.totalorder %s10, 0
    %p42 = por %p40, %p41
    %p43 = scmp.ne.s32.totalorder %s32, %s35
    %p44 = scmp.eq.s32.totalorder %s15, 3
    %p45 = por %p43, %p44
    %p46 = scmp.ne.s32.totalorder %s35, %s36
    %p47 = scmp.eq.s32.totalorder %s15, 0
    %p48 = por %p46, %p47
    %p49 = scmp.ne.s32.totalorder %s35, %s36
    %p50 = scmp.eq.s32.totalorder %s16, 3
    %p51 = por %p49, %p50
    %p53 = scmp.ne.s32.totalorder %s36, %s52
    %p54 = scmp.eq.s32.totalorder %s16, 0
    %p55 = por %p53, %p54
    %s56 = ssub.s32 %s17, %s29
    %s57 = ssub.s32 %s18, %s25
    %s58 = sor.u32 %s56, %s57
    %p59 = scmp.eq.s32.totalorder %s58, 0
    %s61 = sadd.s32 %s60, 1
    %s62 = scalar_select %p59, %s60, %s61
    %p65 = pneg %p59
    %p66 = scmp.eq.s32.totalorder %s10, 3
    %p67 = por %p65, %p66
    %p68 = scmp.ne.s32.totalorder %s60, %s63
    %p69 = scmp.eq.s32.totalorder %s10, 0
    %p70 = por %p68, %p69
    %p71 = scmp.ne.s32.totalorder %s60, %s63
    %p72 = scmp.eq.s32.totalorder %s15, 3
    %p73 = por %p71, %p72
    %p74 = scmp.ne.s32.totalorder %s63, %s64
    %p75 = scmp.eq.s32.totalorder %s15, 0
    %p76 = por %p74, %p75
    %p77 = scmp.ne.s32.totalorder %s63, %s64
    %p78 = scmp.eq.s32.totalorder %s16, 3
    %p79 = por %p77, %p78
    %p81 = scmp.ne.s32.totalorder %s64, %s80
    %p82 = scmp.eq.s32.totalorder %s16, 0
    %p83 = por %p81, %p82
    %s84 = ssub.s32 %s17, %s29
    %p85 = scmp.eq.s32.totalorder %s84, 0
    %s87 = sadd.s32 %s86, 1
    %s88 = scalar_select %p85, %s86, %s87
    %p91 = pneg %p85
    %p92 = scmp.eq.s32.totalorder %s10, 3
    %p93 = por %p91, %p92
    %p94 = scmp.ne.s32.totalorder %s86, %s89
    %p95 = scmp.eq.s32.totalorder %s10, 0
    %p96 = por %p94, %p95
    %p97 = scmp.ne.s32.totalorder %s86, %s89
    %p98 = scmp.eq.s32.totalorder %s15, 3
    %p99 = por %p97, %p98
    %p100 = scmp.ne.s32.totalorder %s89, %s90
    %p101 = scmp.eq.s32.totalorder %s15, 0
    %p102 = por %p100, %p101
    %p103 = scmp.ne.s32.totalorder %s89, %s90
    %p104 = scmp.eq.s32.totalorder %s16, 3
    %p105 = por %p103, %p104
    %p107 = scmp.ne.s32.totalorder %s90, %s106
    %p108 = scmp.eq.s32.totalorder %s16, 0
    %p109 = por %p107, %p108
    %s110 = ssub.s32 %s17, %s29
    %p111 = scmp.eq.s32.totalorder %s110, 0
    %s113 = sadd.s32 %s112, 1
    %s114 = scalar_select %p111, %s112, %s113
    %p117 = pneg %p111
    %p118 = scmp.eq.s32.totalorder %s10, 3
    %p119 = por %p117, %p118
    %p120 = scmp.ne.s32.totalorder %s112, %s115
    %p121 = scmp.eq.s32.totalorder %s10, 0
    %p122 = por %p120, %p121
    %p123 = scmp.ne.s32.totalorder %s112, %s115
    %p124 = scmp.eq.s32.totalorder %s15, 3
    %p125 = por %p123, %p124
    %p126 = scmp.ne.s32.totalorder %s115, %s116
    %p127 = scmp.eq.s32.totalorder %s15, 0
    %p128 = por %p126, %p127
    %p129 = scmp.ne.s32.totalorder %s115, %s116
    %p130 = scmp.eq.s32.totalorder %s16, 3
    %p131 = por %p129, %p130
    %p133 = scmp.ne.s32.totalorder %s116, %s132
    %p134 = scmp.eq.s32.totalorder %s16, 0
    %p135 = por %p133, %p134
    %s136 = ssub.s32 %s17, %s29
    %s137 = ssub.s32 %s18, %s25
    %s138 = sor.u32 %s136, %s137
    %p139 = scmp.eq.s32.totalorder %s138, 0
    %s141 = sadd.s32 %s140, 1
    %s142 = scalar_select %p139, %s140, %s141
    %p145 = pneg %p139
    %p146 = scmp.eq.s32.totalorder %s10, 3
    %p147 = por %p145, %p146
    %p148 = scmp.ne.s32.totalorder %s140, %s143
    %p149 = scmp.eq.s32.totalorder %s10, 0
    %p150 = por %p148, %p149
    %p151 = scmp.ne.s32.totalorder %s140, %s143
    %p152 = scmp.eq.s32.totalorder %s15, 3
    %p153 = por %p151, %p152
    %p154 = scmp.ne.s32.totalorder %s143, %s144
    %p155 = scmp.eq.s32.totalorder %s15, 0
    %p156 = por %p154, %p155
    %p157 = scmp.ne.s32.totalorder %s143, %s144
    %p158 = scmp.eq.s32.totalorder %s16, 3
    %p159 = por %p157, %p158
    %p161 = scmp.ne.s32.totalorder %s144, %s160
    %p162 = scmp.eq.s32.totalorder %s16, 0
    %p163 = por %p161, %p162
    %p164 = scmp.le.s32.totalorder 1, %s10
    %p165 = scmp.lt.s32.totalorder %s10, 5
    %p166 = pnand %p164, %p165
    %p167 = pneg %p166
    // Predicated region
    $region9: #{_lambda_.5} parent=5 // pred_check
      _
    $region10: #{_lambda_.5} parent=5 // pred_check_branch
      %169 = sbr.rel (%p166) target = $region12
    $region11: #{_lambda_.5} parent=5 // pred_region
      %s170 = ssub.s32 %s10, 1
      // Predicated region
      $region13: #{_lambda_.5} parent=11 // pred_check
        %p171 = pneg %p48
      $region14: #{_lambda_.5} parent=11 // pred_check_branch
        %173 = sbr.rel (%p171) target = $region16
      $region15: #{_lambda_.5} parent=11 // pred_region
        %s174 = smul.u32 2, %s20
        %p175 = scmp.lt.s32.totalorder %s174, 1
        %s176 = scalar_select %p175, %s174, 1
        %s177 = smul.addr %s176, 4
        %s178 = scalar_lea.vmem %s0, %s177
        %s179 = smul.u32 2, %s20
      $region16: #{_lambda_.5} parent=11 // pred_fallthru
        _
    $region12: #{_lambda_.5} parent=5 // pred_fallthru
      _
    %p180 = scmp.lt.s32.totalorder %s10, 4
    // Predicated region
    $region17: #{_lambda_.5} parent=5 // pred_check
      %p181 = pneg %p180
    $region18: #{_lambda_.5} parent=5 // pred_check_branch
      %183 = sbr.rel (%p181) target = $region20
    $region19: #{_lambda_.5} parent=5 // pred_region
      // Predicated region
      $region21: #{_lambda_.5} parent=19 // pred_check
        %p184 = pneg %p70
      $region22: #{_lambda_.5} parent=19 // pred_check_branch
        %186 = sbr.rel (%p184) target = $region24
      $region23: #{_lambda_.5} parent=19 // pred_region
        %s187 = smul.u32 2, %s18
        %p188 = scmp.lt.s32.totalorder %s17, 3
        %s189 = scalar_select %p188, %s17, 3
        %p190 = scmp.lt.s32.totalorder %s187, 1
        %s191 = scalar_select %p190, %s187, 1
        %s192 = smul.addr %s189, 2
        %s193 = sadd.s32 %s191, %s192
        %s194 = scalar_lea.vmem %s1, %s193
        %s195 = smul.u32 2, %s18
      $region24: #{_lambda_.5} parent=19 // pred_fallthru
        _
      // Predicated region
      $region25: #{_lambda_.5} parent=19 // pred_check
        %p196 = pneg %p96
      $region26: #{_lambda_.5} parent=19 // pred_check_branch
        %198 = sbr.rel (%p196) target = $region28
      $region27: #{_lambda_.5} parent=19 // pred_region
        %p199 = scmp.lt.s32.totalorder %s17, 3
        %s200 = scalar_select %p199, %s17, 3
        %s201 = smul.addr %s200, 4
        %s202 = scalar_lea.vmem %s2, %s201
      $region28: #{_lambda_.5} parent=19 // pred_fallthru
        _
      // Predicated region
      $region29: #{_lambda_.5} parent=19 // pred_check
        %p203 = pneg %p122
      $region30: #{_lambda_.5} parent=19 // pred_check_branch
        %205 = sbr.rel (%p203) target = $region32
      $region31: #{_lambda_.5} parent=19 // pred_region
        %p206 = scmp.lt.s32.totalorder %s17, 3
        %s207 = scalar_select %p206, %s17, 3
        %s208 = smul.addr %s207, 4
        %s209 = scalar_lea.vmem %s3, %s208
      $region32: #{_lambda_.5} parent=19 // pred_fallthru
        _
    $region20: #{_lambda_.5} parent=5 // pred_fallthru
      _
    %p210 = scmp.le.s32.totalorder 1, %s10
    %p211 = scmp.lt.s32.totalorder %s10, 5
    %p212 = pnand %p210, %p211
    %p213 = pneg %p212
    // Predicated region
    $region33: #{_lambda_.5} parent=5 // pred_check
      _
    $region34: #{_lambda_.5} parent=5 // pred_check_branch
      %215 = sbr.rel (%p212) target = $region36
    $region35: #{_lambda_.5} parent=5 // pred_region
      %s216 = ssub.s32 %s10, 1
      %s217 = smul.u32 2, %s20
      %p218 = scmp.lt.s32.totalorder %s217, 1
      %s219 = scalar_select %p218, %s217, 1
      %s220 = smul.addr %s219, 4
      %s221 = scalar_lea.vmem %s0, %s220
      %p222 = pneg %p48
      %p223 = pneg %p45
      %s224 = smul.u32 2, %s20
      %p225 = scmp.lt.s32.totalorder %s19, 3
      %s226 = scalar_select %p225, %s19, 3
      %p227 = scmp.lt.s32.totalorder %s224, 1
      %s228 = scalar_select %p227, %s224, 1
      %s229 = smul.addr %s226, 2
      %s230 = sadd.s32 %s228, %s229
      %s231 = scalar_lea.vmem %s1, %s230
      %p232 = pneg %p76
      %p233 = pneg %p73
      %p234 = scmp.lt.s32.totalorder %s19, 3
      %s235 = scalar_select %p234, %s19, 3
      %s236 = smul.addr %s235, 4
      %s237 = scalar_lea.vmem %s2, %s236
      %p238 = pneg %p102
      %p239 = pneg %p99
      %p240 = scmp.lt.s32.totalorder %s19, 3
      %s241 = scalar_select %p240, %s19, 3
      %s242 = smul.addr %s241, 4
      %s243 = scalar_lea.vmem %s3, %s242
      %p244 = pneg %p128
      %p245 = pneg %p125
      %p246 = pneg %p156
      %p247 = pneg %p153
      %s248 = smul.u32 2, %s20
      %p249 = scmp.lt.s32.totalorder %s19, 3
      %s250 = scalar_select %p249, %s19, 3
      %p251 = scmp.lt.s32.totalorder %s248, 1
      %s252 = scalar_select %p251, %s248, 1
      %s253 = smul.addr %s250, 2
      %s254 = sadd.s32 %s252, %s253
      %s255 = smul.addr %s254, 4
      %s256 = scalar_lea.vmem %s4, %s255
      %s257 = smul.u32 2, %s20
      %p258 = scmp.lt.s32.totalorder %s257, 1
      %s259 = scalar_select %p258, %s257, 1
      %s260 = smul.addr %s259, 4
      %s261 = scalar_lea.vmem %s0, %s260
      %s262 = smul.u32 2, %s20
      %s263 = smul.u32 2, %s20
      %p264 = scmp.lt.s32.totalorder %s19, 3
      %s265 = scalar_select %p264, %s19, 3
      %p266 = scmp.lt.s32.totalorder %s263, 1
      %s267 = scalar_select %p266, %s263, 1
      %s268 = smul.addr %s265, 2
      %s269 = sadd.s32 %s267, %s268
      %s270 = scalar_lea.vmem %s1, %s269
      %s271 = smul.u32 2, %s20
      %p272 = scmp.lt.s32.totalorder %s19, 3
      %s273 = scalar_select %p272, %s19, 3
      %s274 = smul.addr %s273, 4
      %s275 = scalar_lea.vmem %s2, %s274
      %p276 = scmp.lt.s32.totalorder %s19, 3
      %s277 = scalar_select %p276, %s19, 3
      %s278 = smul.addr %s277, 4
      %s279 = scalar_lea.vmem %s3, %s278
      %s280 = smul.u32 2, %s20
      %p281 = scmp.lt.s32.totalorder %s19, 3
      %s282 = scalar_select %p281, %s19, 3
      %p283 = scmp.lt.s32.totalorder %s280, 1
      %s284 = scalar_select %p283, %s280, 1
      %s285 = smul.addr %s282, 2
      %s286 = sadd.s32 %s284, %s285
      %s287 = smul.addr %s286, 4
      %s288 = scalar_lea.vmem %s4, %s287
      %s289 = smul.u32 2, %s20
      %v290 = vld [vmem:[%s261] sm:$0x77]
      %v291 = vld [vmem:[%s270] sm:$0x3]
      %v293 = vlaneseq
      %v294 = vshrl.u32 %v293, 7
      %v295 = vsub.s32 0, %v294
      %v296 = vrot.slane %v291, %v295
      %v297 = vlaneseq
      %v298 = vshrl.u32 %v297, 7
      %v299 = vsub.s32 1, %v298
      %v300 = vrot.slane %v291, %v299
      %v301 = vcombine.low %v296, %v300
      %v303 = vmul.f32 %v290, %v301
      %v304 = vld [vmem:[%s275] sm:$0x7]
      %v305 = vld [vmem:[%s279] sm:$0x7]
      %307 = vset.pattern.permute.xlu0 0
      %308 = vperm.xlu0 %307, %v305
      %v309 = vpop.permute.xlu0 %308
      %v312 = vcombine.high %v303, %v303
      %vm313 = vcmask 23552
      %v315 = vsel %vm313, %v304, 0
      %vm317 = vcmask 1042432
      %v318 = vsel %vm317, %v303, 0
      %v320 = vsel %vm317, %v312, 0
      %322 = vmatprep.subr.mxu0 %v320
      %323 = vmatpush1.msra.mxu0 %v318
      %324 = vmatprep.subr.mxu0 0.0
      %325 = vmatpush1.msra.mxu0 0.0
      %326 = vmatprep.subr.mxu0 0.0
      %327 = vmatpush1.msra.mxu0 0.0
      %328 = vmatprep.subr.mxu0 0.0
      %329 = vmatpush1.msra.mxu0 0.0
      %330 = vmatprep.subr.mxu0 0.0
      %331 = vmatpush1.msra.mxu0 0.0
      %332 = vmatprep.subr.mxu0 0.0
      %333 = vmatpush1.msra.mxu0 0.0
      %334 = vmatprep.subr.mxu0 0.0
      %335 = vmatpush1.msra.mxu0 0.0
      %336 = vmatprep.subr.mxu0 0.0
      %337 = vmatpush1.msra.mxu0 0.0
      %338 = vmatprep.subr.mxu0 0.0
      %339 = vmatpush1.msra.mxu0 0.0
      %340 = vmatprep.subr.mxu0 0.0
      %341 = vmatpush1.msra.mxu0 0.0
      %342 = vmatprep.subr.mxu0 0.0
      %343 = vmatpush1.msra.mxu0 0.0
      %344 = vmatprep.subr.mxu0 0.0
      %345 = vmatpush1.msra.mxu0 0.0
      %346 = vmatprep.subr.mxu0 0.0
      %347 = vmatpush1.msra.mxu0 0.0
      %348 = vmatprep.subr.mxu0 0.0
      %349 = vmatpush1.msra.mxu0 0.0
      %350 = vmatprep.subr.mxu0 0.0
      %351 = vmatpush1.msra.mxu0 0.0
      %352 = vmatprep.subr.mxu0 0.0
      %353 = vmatpush1.msra.mxu0 0.0
      %354 = vmatprep.subr.mxu0 0.0
      %355 = vmatpush1.msra.mxu0 0.0
      %356 = vmatprep.subr.mxu0 0.0
      %357 = vmatpush1.msra.mxu0 0.0
      %358 = vmatprep.subr.mxu0 0.0
      %359 = vmatpush1.msra.mxu0 0.0
      %360 = vmatprep.subr.mxu0 0.0
      %361 = vmatpush1.msra.mxu0 0.0
      %362 = vmatprep.subr.mxu0 0.0
      %363 = vmatpush1.msra.mxu0 0.0
      %364 = vmatprep.subr.mxu0 0.0
      %365 = vmatpush1.msra.mxu0 0.0
      %366 = vmatprep.subr.mxu0 0.0
      %367 = vmatpush1.msra.mxu0 0.0
      %368 = vmatprep.subr.mxu0 0.0
      %369 = vmatpush1.msra.mxu0 0.0
      %370 = vmatprep.subr.mxu0 0.0
      %371 = vmatpush1.msra.mxu0 0.0
      %372 = vmatprep.subr.mxu0 0.0
      %373 = vmatpush1.msra.mxu0 0.0
      %374 = vmatprep.subr.mxu0 0.0
      %375 = vmatpush1.msra.mxu0 0.0
      %376 = vmatprep.subr.mxu0 0.0
      %377 = vmatpush1.msra.mxu0 0.0
      %378 = vmatprep.subr.mxu0 0.0
      %379 = vmatpush1.msra.mxu0 0.0
      %380 = vmatprep.subr.mxu0 0.0
      %381 = vmatpush1.msra.mxu0 0.0
      %382 = vmatprep.subr.mxu0 0.0
      %383 = vmatpush1.msra.mxu0 0.0
      %384 = vmatprep.subr.mxu0 0.0
      %385 = vmatpush1.msra.mxu0 0.0
      %386 = vmatprep.mubr.f32.mxu0 0.0
      %387 = vmatmul.mubr.f32.gmra.mrb[0].mxu0 %v315
      %v388 = vpop.f32.mrb[0].mxu0
      %v389 = vadd.f32 %v309, %v388
      %v390 = vpop.f32.mrb[0].mxu0
      %v391 = vadd.f32 %v309, %v390
      %392 = vdwg.mxu0
      %v393 = vand.u32 2147483647, %v389
      %v394 = vand.u32 2147483647, %v391
      %vm395 = vcmp.lt.f32.partialorder %v393, 0.01
      %vm396 = vcmp.lt.f32.partialorder %v394, 0.01
      %v397 = vsel %vm395, 0.01, %v389
      %v398 = vsel %vm396, 0.01, %v391
      %v399 = vlaneseq
      %v400 = vshrl.u32 %v399, 7
      %v401 = vsub.s32 2, %v400
      %v402 = vrot.slane %v397, %v401
      %v403 = vlaneseq
      %v404 = vshrl.u32 %v403, 7
      %v405 = vsub.s32 2, %v404
      %v406 = vrot.slane %v398, %v405
      %v407 = vrcp.pop %v402
      %v408 = vmul.f32 %v389, %v407
      %v409 = vrcp.pop %v406
      %v410 = vmul.f32 %v391, %v409
      %vm411 = vcmp.le.f32.partialorder %v389, 0.01
      %vm412 = vcmp.le.f32.partialorder %v391, 0.01
      %v413 = vsel %vm411, 1, 0
      %v414 = vsel %vm412, 1, 0
      %v415 = vlaneseq
      %v416 = vshrl.u32 %v415, 7
      %v417 = vsub.s32 2, %v416
      %v418 = vrot.slane %v413, %v417
      %v419 = vlaneseq
      %v420 = vshrl.u32 %v419, 7
      %v421 = vsub.s32 2, %v420
      %v422 = vrot.slane %v414, %v421
      %vm423 = vcmp.eq.s32.totalorder %v418, 1
      %vm424 = vcmp.eq.s32.totalorder %v422, 1
      %v425 = vsel %vm423, 1000000.0, %v408
      %v426 = vsel %vm424, 1000000.0, %v410
      %vm427 = vcmask 1041408
      %v428 = vsel %vm427, %v425, %v389
      %v429 = vsel %vm427, %v426, %v391
      %v432 = vcombine.low %v428, %v429
      %434 = vst [vmem:[%s288] sm:$0x77] %v432
      %s435 = smul.u32 2, %s20
      %p436 = scmp.lt.s32.totalorder %s19, 3
      %s437 = scalar_select %p436, %s19, 3
      %p438 = scmp.lt.s32.totalorder %s435, 1
      %s439 = scalar_select %p438, %s435, 1
      %s440 = smul.addr %s437, 2
      %s441 = sadd.s32 %s439, %s440
      %s442 = smul.addr %s441, 4
      %s443 = scalar_lea.vmem %s4, %s442
      // Predicated region
      $region37: #{_lambda_.5} parent=35 // pred_check
        %p444 = pneg %p153
      $region38: #{_lambda_.5} parent=35 // pred_check_branch
        %446 = sbr.rel (%p444) target = $region40
      $region39: #{_lambda_.5} parent=35 // pred_region
        %s447 = smul.u32 2, %s20
      $region40: #{_lambda_.5} parent=35 // pred_fallthru
        _
    $region36: #{_lambda_.5} parent=5 // pred_fallthru
      _
    %p448 = scmp.le.s32.totalorder 2, %s10
    // Predicated region
    $region41: #{_lambda_.5} parent=5 // pred_check
      %p449 = pneg %p448
    $region42: #{_lambda_.5} parent=5 // pred_check_branch
      %451 = sbr.rel (%p449) target = $region44
    $region43: #{_lambda_.5} parent=5 // pred_region
      %s452 = ssub.s32 %s10, 2
      // Predicated region
      $region45: #{_lambda_.5} parent=43 // pred_check
        %p453 = pneg %p159
      $region46: #{_lambda_.5} parent=43 // pred_check_branch
        %455 = sbr.rel (%p453) target = $region48
      $region47: #{_lambda_.5} parent=43 // pred_region
        %s456 = smul.u32 2, %s22
        %p457 = scmp.lt.s32.totalorder %s21, 3
        %s458 = scalar_select %p457, %s21, 3
        %p459 = scmp.lt.s32.totalorder %s456, 1
        %s460 = scalar_select %p459, %s456, 1
        %s461 = smul.addr %s458, 2
        %s462 = sadd.s32 %s460, %s461
        %s463 = smul.addr %s462, 4
        %s464 = scalar_lea.vmem %s4, %s463
      $region48: #{_lambda_.5} parent=43 // pred_fallthru
        _
    $region44: #{_lambda_.5} parent=5 // pred_fallthru
      _
  $region6: #{_lambda_.5} parent=0 // loop_footer
    %s14 = sadd.s32 1, %s10
  $region7: #{_lambda_.5} parent=0 // loop_footer_branch
    %9 = sbr.rel target = $region3
  $region8: #{_lambda_.5} parent=0 // loop_exit
    _

// kernel: _lambda_.4
$region0: #{_lambda_.4}
  #allocation0 [shape = 'u32[]', space=smem, size = 0x4, offset = 0x4, fixed_abs, tag = 'smem constant byte address 0x4 - core index']
  #allocation1 [shape = 'u32[144,128]{1,0:T(1,128)}', space=vmem, size = 0x12000, scoped, tag = 'internal scratch']
  %s0 = inlined_call_operand.vmem [shape: f32[4,3,256], index: 0, kind: input, shape index: {}]
  %s1 = inlined_call_operand.vmem [shape: f32[8,3], index: 1, kind: input, shape index: {}]
  %s2 = inlined_call_operand.vmem [shape: f32[8,1], index: 2, kind: input, shape index: {}]
  %s3 = inlined_call_operand.vmem [shape: f32[4,8,256], index: 3, kind: output, shape index: {}]
  %s4 = sld [smem:[#allocation0]]
  $region45: #{_lambda_.4} parent=0
    _
  %s6 = ssub.s32 1, %s4
  %s7 = scalar_select 0, %s6, %s4
  loop: start=0, step=1, limit=6
  $region2: #{_lambda_.4} parent=0 // loop_pre_header
    _
  $region3: #{_lambda_.4} parent=0 // loop_header
    %s9 = sphi 0, %s13
    %p10 = scmp.ge.s32.totalorder %s9, 6
    %s16 = sphi 0, %s28
    %s17 = sphi 0, %s24
    %s18 = sphi 0, %s16
    %s19 = sphi 0, %s17
    %s20 = sphi 0, %s18
    %s21 = sphi 0, %s19
    %s33 = sphi 0, %s35
    %s36 = sphi 0, %s33
    %s37 = sphi 0, %s36
    %s53 = sphi 0, %s37
    %s57 = sphi 0, %s57
    %s59 = sphi 0, %s57
    %s60 = sphi 0, %s59
    %s74 = sphi 0, %s60
    %s78 = sphi 0, %s78
    %s80 = sphi 0, %s78
    %s81 = sphi 0, %s80
    %s95 = sphi 0, %s81
    %s103 = sphi 0, %s105
    %s106 = sphi 0, %s103
    %s107 = sphi 0, %s106
    %s123 = sphi 0, %s107
  $region4: #{_lambda_.4} parent=0 // loop_header_branch
    %12 = sbr.rel (%p10) target = $region8
  $region5: #{_lambda_.4} parent=0 // loop_body
    %s14 = ssub.s32 %s9, 1
    %s15 = ssub.s32 %s9, 2
    %s22 = sadd.s32 1, %s17
    %p23 = scmp.ge.s32.totalorder %s22, 1
    %s24 = scalar_select %p23, 0, %s22
    %s25 = sadd.s32 1, %s16
    %s26 = scalar_select %p23, %s25, %s16
    %p27 = scmp.ge.s32.totalorder %s26, 4
    %s28 = scalar_select %p27, 0, %s26
    %s29 = ssub.s32 %s16, %s28
    %s30 = ssub.s32 %s17, %s24
    %s31 = sor.u32 %s29, %s30
    %p32 = scmp.eq.s32.totalorder %s31, 0
    %s34 = sadd.s32 %s33, 1
    %s35 = scalar_select %p32, %s33, %s34
    %p38 = pneg %p32
    %p39 = scmp.eq.s32.totalorder %s9, 3
    %p40 = por %p38, %p39
    %p41 = scmp.ne.s32.totalorder %s33, %s36
    %p42 = scmp.eq.s32.totalorder %s9, 0
    %p43 = por %p41, %p42
    %p44 = scmp.ne.s32.totalorder %s33, %s36
    %p45 = scmp.eq.s32.totalorder %s14, 3
    %p46 = por %p44, %p45
    %p47 = scmp.ne.s32.totalorder %s36, %s37
    %p48 = scmp.eq.s32.totalorder %s14, 0
    %p49 = por %p47, %p48
    %p50 = scmp.ne.s32.totalorder %s36, %s37
    %p51 = scmp.eq.s32.totalorder %s15, 3
    %p52 = por %p50, %p51
    %p54 = scmp.ne.s32.totalorder %s37, %s53
    %p55 = scmp.eq.s32.totalorder %s15, 0
    %p56 = por %p54, %p55
    %s58 = sadd.s32 %s57, 1
    %p61 = scmp.eq.s32.totalorder %s9, 3
    %p62 = scmp.ne.s32.totalorder %s57, %s59
    %p63 = scmp.eq.s32.totalorder %s9, 0
    %p64 = por %p62, %p63
    %p65 = scmp.ne.s32.totalorder %s57, %s59
    %p66 = scmp.eq.s32.totalorder %s14, 3
    %p67 = por %p65, %p66
    %p68 = scmp.ne.s32.totalorder %s59, %s60
    %p69 = scmp.eq.s32.totalorder %s14, 0
    %p70 = por %p68, %p69
    %p71 = scmp.ne.s32.totalorder %s59, %s60
    %p72 = scmp.eq.s32.totalorder %s15, 3
    %p73 = por %p71, %p72
    %p75 = scmp.ne.s32.totalorder %s60, %s74
    %p76 = scmp.eq.s32.totalorder %s15, 0
    %p77 = por %p75, %p76
    %s79 = sadd.s32 %s78, 1
    %p82 = scmp.eq.s32.totalorder %s9, 3
    %p83 = scmp.ne.s32.totalorder %s78, %s80
    %p84 = scmp.eq.s32.totalorder %s9, 0
    %p85 = por %p83, %p84
    %p86 = scmp.ne.s32.totalorder %s78, %s80
    %p87 = scmp.eq.s32.totalorder %s14, 3
    %p88 = por %p86, %p87
    %p89 = scmp.ne.s32.totalorder %s80, %s81
    %p90 = scmp.eq.s32.totalorder %s14, 0
    %p91 = por %p89, %p90
    %p92 = scmp.ne.s32.totalorder %s80, %s81
    %p93 = scmp.eq.s32.totalorder %s15, 3
    %p94 = por %p92, %p93
    %p96 = scmp.ne.s32.totalorder %s81, %s95
    %p97 = scmp.eq.s32.totalorder %s15, 0
    %p98 = por %p96, %p97
    %s99 = ssub.s32 %s16, %s28
    %s100 = ssub.s32 %s17, %s24
    %s101 = sor.u32 %s99, %s100
    %p102 = scmp.eq.s32.totalorder %s101, 0
    %s104 = sadd.s32 %s103, 1
    %s105 = scalar_select %p102, %s103, %s104
    %p108 = pneg %p102
    %p109 = scmp.eq.s32.totalorder %s9, 3
    %p110 = por %p108, %p109
    %p111 = scmp.ne.s32.totalorder %s103, %s106
    %p112 = scmp.eq.s32.totalorder %s9, 0
    %p113 = por %p111, %p112
    %p114 = scmp.ne.s32.totalorder %s103, %s106
    %p115 = scmp.eq.s32.totalorder %s14, 3
    %p116 = por %p114, %p115
    %p117 = scmp.ne.s32.totalorder %s106, %s107
    %p118 = scmp.eq.s32.totalorder %s14, 0
    %p119 = por %p117, %p118
    %p120 = scmp.ne.s32.totalorder %s106, %s107
    %p121 = scmp.eq.s32.totalorder %s15, 3
    %p122 = por %p120, %p121
    %p124 = scmp.ne.s32.totalorder %s107, %s123
    %p125 = scmp.eq.s32.totalorder %s15, 0
    %p126 = por %p124, %p125
    %p127 = scmp.le.s32.totalorder 1, %s9
    %p128 = scmp.lt.s32.totalorder %s9, 5
    %p129 = pnand %p127, %p128
    %p130 = pneg %p129
    // Predicated region
    $region9: #{_lambda_.4} parent=5 // pred_check
      _
    $region10: #{_lambda_.4} parent=5 // pred_check_branch
      %132 = sbr.rel (%p129) target = $region12
    $region11: #{_lambda_.4} parent=5 // pred_region
      %s133 = ssub.s32 %s9, 1
      // Predicated region
      $region13: #{_lambda_.4} parent=11 // pred_check
        %p134 = pneg %p70
      $region14: #{_lambda_.4} parent=11 // pred_check_branch
        %136 = sbr.rel (%p134) target = $region16
      $region15: #{_lambda_.4} parent=11 // pred_region
        _
      $region16: #{_lambda_.4} parent=11 // pred_fallthru
        _
      // Predicated region
      $region17: #{_lambda_.4} parent=11 // pred_check
        %p137 = pneg %p91
      $region18: #{_lambda_.4} parent=11 // pred_check_branch
        %139 = sbr.rel (%p137) target = $region20
      $region19: #{_lambda_.4} parent=11 // pred_region
        _
      $region20: #{_lambda_.4} parent=11 // pred_fallthru
        _
    $region12: #{_lambda_.4} parent=5 // pred_fallthru
      _
    %p140 = scmp.lt.s32.totalorder %s9, 4
    // Predicated region
    $region21: #{_lambda_.4} parent=5 // pred_check
      %p141 = pneg %p140
    $region22: #{_lambda_.4} parent=5 // pred_check_branch
      %143 = sbr.rel (%p141) target = $region24
    $region23: #{_lambda_.4} parent=5 // pred_region
      // Predicated region
      $region25: #{_lambda_.4} parent=23 // pred_check
        %p144 = pneg %p43
      $region26: #{_lambda_.4} parent=23 // pred_check_branch
        %146 = sbr.rel (%p144) target = $region28
      $region27: #{_lambda_.4} parent=23 // pred_region
        %s147 = smul.u32 2, %s17
        %p148 = scmp.lt.s32.totalorder %s16, 3
        %s149 = scalar_select %p148, %s16, 3
        %p150 = scmp.lt.s32.totalorder %s147, 1
        %s151 = scalar_select %p150, %s147, 1
        %s152 = smul.addr %s149, 2
        %s153 = sadd.s32 %s151, %s152
        %s154 = smul.addr %s153, 4
        %s155 = scalar_lea.vmem %s0, %s154
        %s156 = smul.u32 2, %s17
      $region28: #{_lambda_.4} parent=23 // pred_fallthru
        _
    $region24: #{_lambda_.4} parent=5 // pred_fallthru
      _
    %p157 = scmp.le.s32.totalorder 1, %s9
    %p158 = scmp.lt.s32.totalorder %s9, 5
    %p159 = pnand %p157, %p158
    %p160 = pneg %p159
    // Predicated region
    $region29: #{_lambda_.4} parent=5 // pred_check
      _
    $region30: #{_lambda_.4} parent=5 // pred_check_branch
      %162 = sbr.rel (%p159) target = $region32
    $region31: #{_lambda_.4} parent=5 // pred_region
      %s163 = ssub.s32 %s9, 1
      %s164 = smul.u32 2, %s19
      %p165 = scmp.lt.s32.totalorder %s18, 3
      %s166 = scalar_select %p165, %s18, 3
      %p167 = scmp.lt.s32.totalorder %s164, 1
      %s168 = scalar_select %p167, %s164, 1
      %s169 = smul.addr %s166, 2
      %s170 = sadd.s32 %s168, %s169
      %s171 = smul.addr %s170, 4
      %s172 = scalar_lea.vmem %s0, %s171
      %p173 = pneg %p49
      %p174 = pneg %p46
      %p175 = pneg %p70
      %p176 = pneg %p67
      %p177 = pneg %p91
      %p178 = pneg %p88
      %p179 = pneg %p119
      %p180 = pneg %p116
      %s181 = smul.u32 2, %s19
      %p182 = scmp.lt.s32.totalorder %s18, 3
      %s183 = scalar_select %p182, %s18, 3
      %p184 = scmp.lt.s32.totalorder %s181, 1
      %s185 = scalar_select %p184, %s181, 1
      %s186 = smul.addr %s183, 2
      %s187 = sadd.s32 %s185, %s186
      %s188 = smul.addr %s187, 8
      %s189 = scalar_lea.vmem %s3, %s188
      %s190 = smul.u32 2, %s19
      %p191 = scmp.lt.s32.totalorder %s18, 3
      %s192 = scalar_select %p191, %s18, 3
      %p193 = scmp.lt.s32.totalorder %s190, 1
      %s194 = scalar_select %p193, %s190, 1
      %s195 = smul.addr %s192, 2
      %s196 = sadd.s32 %s194, %s195
      %s197 = smul.addr %s196, 4
      %s198 = scalar_lea.vmem %s0, %s197
      %s199 = smul.u32 2, %s19
      %s200 = smul.u32 2, %s19
      %p201 = scmp.lt.s32.totalorder %s18, 3
      %s202 = scalar_select %p201, %s18, 3
      %p203 = scmp.lt.s32.totalorder %s200, 1
      %s204 = scalar_select %p203, %s200, 1
      %s205 = smul.addr %s202, 2
      %s206 = sadd.s32 %s204, %s205
      %s207 = smul.addr %s206, 8
      %s208 = scalar_lea.vmem %s3, %s207
      %s209 = smul.u32 2, %s19
      %v210 = vld [vmem:[%s1] sm:$0xff]
      %v211 = vld [vmem:[%s198] sm:$0x77]
      %v212 = vld [vmem:[%s2] sm:$0xff]
      %214 = vset.pattern.permute.xlu0 0
      %215 = vperm.xlu0 %214, %v212
      %v216 = vpop.permute.xlu0 %215
      %v219 = vcombine.high %v211, %v211
      %vm220 = vcmask 23552
      %v222 = vsel %vm220, %v210, 0
      %vm224 = vcmask 1042432
      %v225 = vsel %vm224, %v211, 0
      %v227 = vsel %vm224, %v219, 0
      %229 = vmatprep.subr.mxu0 %v227
      %230 = vmatpush1.msra.mxu0 %v225
      %231 = vmatprep.subr.mxu0 0.0
      %232 = vmatpush1.msra.mxu0 0.0
      %233 = vmatprep.subr.mxu0 0.0
      %234 = vmatpush1.msra.mxu0 0.0
      %235 = vmatprep.subr.mxu0 0.0
      %236 = vmatpush1.msra.mxu0 0.0
      %237 = vmatprep.subr.mxu0 0.0
      %238 = vmatpush1.msra.mxu0 0.0
      %239 = vmatprep.subr.mxu0 0.0
      %240 = vmatpush1.msra.mxu0 0.0
      %241 = vmatprep.subr.mxu0 0.0
      %242 = vmatpush1.msra.mxu0 0.0
      %243 = vmatprep.subr.mxu0 0.0
      %244 = vmatpush1.msra.mxu0 0.0
      %245 = vmatprep.subr.mxu0 0.0
      %246 = vmatpush1.msra.mxu0 0.0
      %247 = vmatprep.subr.mxu0 0.0
      %248 = vmatpush1.msra.mxu0 0.0
      %249 = vmatprep.subr.mxu0 0.0
      %250 = vmatpush1.msra.mxu0 0.0
      %251 = vmatprep.subr.mxu0 0.0
      %252 = vmatpush1.msra.mxu0 0.0
      %253 = vmatprep.subr.mxu0 0.0
      %254 = vmatpush1.msra.mxu0 0.0
      %255 = vmatprep.subr.mxu0 0.0
      %256 = vmatpush1.msra.mxu0 0.0
      %257 = vmatprep.subr.mxu0 0.0
      %258 = vmatpush1.msra.mxu0 0.0
      %259 = vmatprep.subr.mxu0 0.0
      %260 = vmatpush1.msra.mxu0 0.0
      %261 = vmatprep.subr.mxu0 0.0
      %262 = vmatpush1.msra.mxu0 0.0
      %263 = vmatprep.subr.mxu0 0.0
      %264 = vmatpush1.msra.mxu0 0.0
      %265 = vmatprep.subr.mxu0 0.0
      %266 = vmatpush1.msra.mxu0 0.0
      %267 = vmatprep.subr.mxu0 0.0
      %268 = vmatpush1.msra.mxu0 0.0
      %269 = vmatprep.subr.mxu0 0.0
      %270 = vmatpush1.msra.mxu0 0.0
      %271 = vmatprep.subr.mxu0 0.0
      %272 = vmatpush1.msra.mxu0 0.0
      %273 = vmatprep.subr.mxu0 0.0
      %274 = vmatpush1.msra.mxu0 0.0
      %275 = vmatprep.subr.mxu0 0.0
      %276 = vmatpush1.msra.mxu0 0.0
      %277 = vmatprep.subr.mxu0 0.0
      %278 = vmatpush1.msra.mxu0 0.0
      %279 = vmatprep.subr.mxu0 0.0
      %280 = vmatpush1.msra.mxu0 0.0
      %281 = vmatprep.subr.mxu0 0.0
      %282 = vmatpush1.msra.mxu0 0.0
      %283 = vmatprep.subr.mxu0 0.0
      %284 = vmatpush1.msra.mxu0 0.0
      %285 = vmatprep.subr.mxu0 0.0
      %286 = vmatpush1.msra.mxu0 0.0
      %287 = vmatprep.subr.mxu0 0.0
      %288 = vmatpush1.msra.mxu0 0.0
      %289 = vmatprep.subr.mxu0 0.0
      %290 = vmatpush1.msra.mxu0 0.0
      %291 = vmatprep.subr.mxu0 0.0
      %292 = vmatpush1.msra.mxu0 0.0
      %293 = vmatprep.mubr.f32.mxu0 0.0
      %294 = vmatmul.mubr.f32.gmra.mrb[0].mxu0 %v222
      %v295 = vpop.f32.mrb[0].mxu0
      %v296 = vadd.f32 %v216, %v295
      %v297 = vpop.f32.mrb[0].mxu0
      %v298 = vadd.f32 %v216, %v297
      %299 = vdwg.mxu0
      %300 = vst [vmem:[%s208] sm:$0xff] %v296
      %301 = vst [vmem:[%s208 + $0x8] sm:$0xff] %v298
      %s302 = smul.u32 2, %s19
      %p303 = scmp.lt.s32.totalorder %s18, 3
      %s304 = scalar_select %p303, %s18, 3
      %p305 = scmp.lt.s32.totalorder %s302, 1
      %s306 = scalar_select %p305, %s302, 1
      %s307 = smul.addr %s304, 2
      %s308 = sadd.s32 %s306, %s307
      %s309 = smul.addr %s308, 8
      %s310 = scalar_lea.vmem %s3, %s309
      // Predicated region
      $region33: #{_lambda_.4} parent=31 // pred_check
        %p311 = pneg %p116
      $region34: #{_lambda_.4} parent=31 // pred_check_branch
        %313 = sbr.rel (%p311) target = $region36
      $region35: #{_lambda_.4} parent=31 // pred_region
        %s314 = smul.u32 2, %s19
      $region36: #{_lambda_.4} parent=31 // pred_fallthru
        _
    $region32: #{_lambda_.4} parent=5 // pred_fallthru
      _
    %p315 = scmp.le.s32.totalorder 2, %s9
    // Predicated region
    $region37: #{_lambda_.4} parent=5 // pred_check
      %p316 = pneg %p315
    $region38: #{_lambda_.4} parent=5 // pred_check_branch
      %318 = sbr.rel (%p316) target = $region40
    $region39: #{_lambda_.4} parent=5 // pred_region
      %s319 = ssub.s32 %s9, 2
      // Predicated region
      $region41: #{_lambda_.4} parent=39 // pred_check
        %p320 = pneg %p122
      $region42: #{_lambda_.4} parent=39 // pred_check_branch
        %322 = sbr.rel (%p320) target = $region44
      $region43: #{_lambda_.4} parent=39 // pred_region
        %s323 = smul.u32 2, %s21
        %p324 = scmp.lt.s32.totalorder %s20, 3
        %s325 = scalar_select %p324, %s20, 3
        %p326 = scmp.lt.s32.totalorder %s323, 1
        %s327 = scalar_select %p326, %s323, 1
        %s328 = smul.addr %s325, 2
        %s329 = sadd.s32 %s327, %s328
        %s330 = smul.addr %s329, 8
        %s331 = scalar_lea.vmem %s3, %s330
      $region44: #{_lambda_.4} parent=39 // pred_fallthru
        _
    $region40: #{_lambda_.4} parent=5 // pred_fallthru
      _
  $region6: #{_lambda_.4} parent=0 // loop_footer
    %s13 = sadd.s32 1, %s9
  $region7: #{_lambda_.4} parent=0 // loop_footer_branch
    %8 = sbr.rel target = $region3
  $region8: #{_lambda_.4} parent=0 // loop_exit
    _

// kernel: _lambda_.6
$region0: #{_lambda_.6}
  #allocation0 [shape = 'u32[]', space=smem, size = 0x4, offset = 0x4, fixed_abs, tag = 'smem constant byte address 0x4 - core index']
  #allocation1 [shape = 'u32[144,128]{1,0:T(1,128)}', space=vmem, size = 0x12000, scoped, tag = 'internal scratch']
  #allocation2 [shape = 'f32[10,128]{1,0:T(8,128)}', space=vmem, size = 0x2000, scoped, tag = 'scratch operand']
  %s0 = inlined_call_operand.vmem [shape: f32[4,3,256], index: 0, kind: input, shape index: {}]
  %s1 = inlined_call_operand.vmem [shape: f32[4,10,256], index: 1, kind: input, shape index: {}]
  %s2 = inlined_call_operand.vmem [shape: f32[2,256], index: 2, kind: input, shape index: {}]
  %s3 = inlined_call_operand.vmem [shape: f32[4,9,256], index: 3, kind: output, shape index: {}]
  %s4 = sld [smem:[#allocation0]]
  $region125: #{_lambda_.6} parent=0
    _
  %s6 = ssub.s32 1, %s4
  %s7 = scalar_select 0, %s6, %s4
  $region1: #{_lambda_.6} parent=0
    #allocation3 [shape = 'u8[16384]{0}', space=vmem, size = 0x4000, scoped, tag = 'input window, operand 1']
    #allocation4 [shape = 'u8[16384]{0}', space=vmem, size = 0x4000, scoped, tag = 'output window, operand 0']
    loop: start=0, step=1, limit=18
    $region2: #{_lambda_.6} parent=1 // loop_pre_header
      _
    $region3: #{_lambda_.6} parent=1 // loop_header
      %s9 = sphi 0, %s13
      %p10 = scmp.ge.s32.totalorder %s9, 18
      %s16 = sphi 0, %s35
      %s17 = sphi 0, %s31
      %s18 = sphi 0, %s27
      %s19 = sphi 0, %s16
      %s20 = sphi 0, %s17
      %s21 = sphi 0, %s18
      %s22 = sphi 0, %s19
      %s23 = sphi 0, %s20
      %s24 = sphi 0, %s21
      %s40 = sphi 0, %s42
      %s43 = sphi 0, %s40
      %s44 = sphi 0, %s43
      %s60 = sphi 0, %s44
      %s68 = sphi 0, %s70
      %s71 = sphi 0, %s68
      %s72 = sphi 0, %s71
      %s88 = sphi 0, %s72
      %s94 = sphi 0, %s96
      %s97 = sphi 0, %s94
      %s98 = sphi 0, %s97
      %s114 = sphi 0, %s98
      %s122 = sphi 0, %s124
      %s125 = sphi 0, %s122
      %s126 = sphi 0, %s125
      %s142 = sphi 0, %s126
    $region4: #{_lambda_.6} parent=1 // loop_header_branch
      %12 = sbr.rel (%p10) target = $region8
    $region5: #{_lambda_.6} parent=1 // loop_body
      %s14 = ssub.s32 %s9, 1
      %s15 = ssub.s32 %s9, 2
      %s25 = sadd.s32 1, %s18
      %p26 = scmp.ge.s32.totalorder %s25, 2
      %s27 = scalar_select %p26, 0, %s25
      %s28 = sadd.s32 1, %s17
      %s29 = scalar_select %p26, %s28, %s17
      %p30 = scmp.ge.s32.totalorder %s29, 2
      %s31 = scalar_select %p30, 0, %s29
      %s32 = sadd.s32 1, %s16
      %s33 = scalar_select %p30, %s32, %s16
      %p34 = scmp.ge.s32.totalorder %s33, 4
      %s35 = scalar_select %p34, 0, %s33
      %s36 = ssub.s32 %s16, %s35
      %s37 = ssub.s32 %s18, %s27
      %s38 = sor.u32 %s36, %s37
      %p39 = scmp.eq.s32.totalorder %s38, 0
      %s41 = sadd.s32 %s40, 1
      %s42 = scalar_select %p39, %s40, %s41
      %p45 = pneg %p39
      %p46 = scmp.eq.s32.totalorder %s9, 15
      %p47 = por %p45, %p46
      %p48 = scmp.ne.s32.totalorder %s40, %s43
      %p49 = scmp.eq.s32.totalorder %s9, 0
      %p50 = por %p48, %p49
      %p51 = scmp.ne.s32.totalorder %s40, %s43
      %p52 = scmp.eq.s32.totalorder %s14, 15
      %p53 = por %p51, %p52
      %p54 = scmp.ne.s32.totalorder %s43, %s44
      %p55 = scmp.eq.s32.totalorder %s14, 0
      %p56 = por %p54, %p55
      %p57 = scmp.ne.s32.totalorder %s43, %s44
      %p58 = scmp.eq.s32.totalorder %s15, 15
      %p59 = por %p57, %p58
      %p61 = scmp.ne.s32.totalorder %s44, %s60
      %p62 = scmp.eq.s32.totalorder %s15, 0
      %p63 = por %p61, %p62
      %s64 = ssub.s32 %s16, %s35
      %s65 = ssub.s32 %s18, %s27
      %s66 = sor.u32 %s64, %s65
      %p67 = scmp.eq.s32.totalorder %s66, 0
      %s69 = sadd.s32 %s68, 1
      %s70 = scalar_select %p67, %s68, %s69
      %p73 = pneg %p67
      %p74 = scmp.eq.s32.totalorder %s9, 15
      %p75 = por %p73, %p74
      %p76 = scmp.ne.s32.totalorder %s68, %s71
      %p77 = scmp.eq.s32.totalorder %s9, 0
      %p78 = por %p76, %p77
      %p79 = scmp.ne.s32.totalorder %s68, %s71
      %p80 = scmp.eq.s32.totalorder %s14, 15
      %p81 = por %p79, %p80
      %p82 = scmp.ne.s32.totalorder %s71, %s72
      %p83 = scmp.eq.s32.totalorder %s14, 0
      %p84 = por %p82, %p83
      %p85 = scmp.ne.s32.totalorder %s71, %s72
      %p86 = scmp.eq.s32.totalorder %s15, 15
      %p87 = por %p85, %p86
      %p89 = scmp.ne.s32.totalorder %s72, %s88
      %p90 = scmp.eq.s32.totalorder %s15, 0
      %p91 = por %p89, %p90
      %s92 = ssub.s32 %s17, %s31
      %p93 = scmp.eq.s32.totalorder %s92, 0
      %s95 = sadd.s32 %s94, 1
      %s96 = scalar_select %p93, %s94, %s95
      %p99 = pneg %p93
      %p100 = scmp.eq.s32.totalorder %s9, 15
      %p101 = por %p99, %p100
      %p102 = scmp.ne.s32.totalorder %s94, %s97
      %p103 = scmp.eq.s32.totalorder %s9, 0
      %p104 = por %p102, %p103
      %p105 = scmp.ne.s32.totalorder %s94, %s97
      %p106 = scmp.eq.s32.totalorder %s14, 15
      %p107 = por %p105, %p106
      %p108 = scmp.ne.s32.totalorder %s97, %s98
      %p109 = scmp.eq.s32.totalorder %s14, 0
      %p110 = por %p108, %p109
      %p111 = scmp.ne.s32.totalorder %s97, %s98
      %p112 = scmp.eq.s32.totalorder %s15, 15
      %p113 = por %p111, %p112
      %p115 = scmp.ne.s32.totalorder %s98, %s114
      %p116 = scmp.eq.s32.totalorder %s15, 0
      %p117 = por %p115, %p116
      %s118 = ssub.s32 %s16, %s35
      %s119 = ssub.s32 %s17, %s31
      %s120 = sor.u32 %s118, %s119
      %p121 = scmp.eq.s32.totalorder %s120, 0
      %s123 = sadd.s32 %s122, 1
      %s124 = scalar_select %p121, %s122, %s123
      %p127 = pneg %p121
      %p128 = scmp.eq.s32.totalorder %s9, 15
      %p129 = por %p127, %p128
      %p130 = scmp.ne.s32.totalorder %s122, %s125
      %p131 = scmp.eq.s32.totalorder %s9, 0
      %p132 = por %p130, %p131
      %p133 = scmp.ne.s32.totalorder %s122, %s125
      %p134 = scmp.eq.s32.totalorder %s14, 15
      %p135 = por %p133, %p134
      %p136 = scmp.ne.s32.totalorder %s125, %s126
      %p137 = scmp.eq.s32.totalorder %s14, 0
      %p138 = por %p136, %p137
      %p139 = scmp.ne.s32.totalorder %s125, %s126
      %p140 = scmp.eq.s32.totalorder %s15, 15
      %p141 = por %p139, %p140
      %p143 = scmp.ne.s32.totalorder %s126, %s142
      %p144 = scmp.eq.s32.totalorder %s15, 0
      %p145 = por %p143, %p144
      %p146 = scmp.le.s32.totalorder 1, %s9
      %p147 = scmp.lt.s32.totalorder %s9, 17
      %p148 = pnand %p146, %p147
      %p149 = pneg %p148
      // Predicated region
      $region9: #{_lambda_.6} parent=5 // pred_check
        _
      $region10: #{_lambda_.6} parent=5 // pred_check_branch
        %151 = sbr.rel (%p148) target = $region12
      $region11: #{_lambda_.6} parent=5 // pred_region
        %s152 = ssub.s32 %s9, 1
      $region12: #{_lambda_.6} parent=5 // pred_fallthru
        _
      %p153 = scmp.lt.s32.totalorder %s9, 16
      // Predicated region
      $region13: #{_lambda_.6} parent=5 // pred_check
        %p154 = pneg %p153
      $region14: #{_lambda_.6} parent=5 // pred_check_branch
        %156 = sbr.rel (%p154) target = $region16
      $region15: #{_lambda_.6} parent=5 // pred_region
        // Predicated region
        $region17: #{_lambda_.6} parent=15 // pred_check
          %p157 = pneg %p50
        $region18: #{_lambda_.6} parent=15 // pred_check_branch
          %159 = sbr.rel (%p157) target = $region20
        $region19: #{_lambda_.6} parent=15 // pred_region
          %p160 = scmp.lt.s32.totalorder %s16, 3
          %s161 = scalar_select %p160, %s16, 3
          %p162 = scmp.lt.s32.totalorder %s18, 1
          %s163 = scalar_select %p162, %s18, 1
          %s164 = smul.addr %s161, 2
          %s165 = sadd.s32 %s163, %s164
          %s166 = smul.addr %s165, 4
          %s167 = scalar_lea.vmem %s0, %s166
        $region20: #{_lambda_.6} parent=15 // pred_fallthru
          _
        // Predicated region
        $region21: #{_lambda_.6} parent=15 // pred_check
          %p168 = pneg %p78
        $region22: #{_lambda_.6} parent=15 // pred_check_branch
          %170 = sbr.rel (%p168) target = $region24
        $region23: #{_lambda_.6} parent=15 // pred_region
          %s171 = sand.u32 %s68, 1
          %s172 = sand.u32 %s68, 1
          %s173 = smul.addr %s172, 16
          %s174 = scalar_lea.vmem [#allocation3], %s173
          %s175 = smul.addr %s16, 4
          %s176 = sadd.s32 %s18, %s175
          %s177 = smul.addr %s176, 8
          %s178 = scalar_lea.vmem %s1, %s177
          // Predicated region
          $region25: #{_lambda_.6} parent=23 // pred_check
            _
          $region26: #{_lambda_.6} parent=23 // pred_check_branch
            %180 = sbr.rel (0) target = $region28
          $region27: #{_lambda_.6} parent=23 // pred_region
            // Predicated region
            $region29: #{_lambda_.6} parent=27 // pred_check
              _
            $region30: #{_lambda_.6} parent=27 // pred_check_branch
              %182 = sbr.rel (0) target = $region32
            $region31: #{_lambda_.6} parent=27 // pred_region
              // Predicated region
              $region44: #{_lambda_.6} parent=31 // pred_check
                _
              $region45: #{_lambda_.6} parent=31 // pred_check_branch
                %199 = sbr.rel (0) target = $region47
              $region46: #{_lambda_.6} parent=31 // pred_region
                loop: start=0, step=1, limit=1
                $region48: #{_lambda_.6} parent=46 // loop_pre_header
                  _
                $region49: #{_lambda_.6} parent=46 // loop_header
                  %s201 = sphi 0, %s205
                  %p202 = scmp.ge.s32.totalorder %s201, 1
                  %s206 = sphi %s178, %s178
                  %s207 = sphi %s174, %s174
                $region50: #{_lambda_.6} parent=46 // loop_header_branch
                  %204 = sbr.rel (%p202) target = $region54
                $region51: #{_lambda_.6} parent=46 // loop_body
                  %v208 = vld [vmem:[%s206] sm:$0xff]
                  %209 = vst [vmem:[%s207] sm:$0xff] %v208
                  %v210 = vld [vmem:[%s206 + $0x10] sm:$0xff]
                  %211 = vst [vmem:[%s207 + $0x8] sm:$0xff] %v210
                $region52: #{_lambda_.6} parent=46 // loop_footer
                  %s205 = sadd.s32 1, %s201
                $region53: #{_lambda_.6} parent=46 // loop_footer_branch
                  %200 = sbr.rel target = $region49
                $region54: #{_lambda_.6} parent=46 // loop_exit
                  _
              $region47: #{_lambda_.6} parent=31 // pred_fallthru
                _
              // Predicated region
              $region55: #{_lambda_.6} parent=31 // pred_check
                _
              $region56: #{_lambda_.6} parent=31 // pred_check_branch
                %213 = sbr.rel target = $region58
              $region57: #{_lambda_.6} parent=31 // pred_region
                _
              $region58: #{_lambda_.6} parent=31 // pred_fallthru
                _
            $region32: #{_lambda_.6} parent=27 // pred_fallthru
              _
            // Predicated region
            $region33: #{_lambda_.6} parent=27 // pred_check
              _
            $region34: #{_lambda_.6} parent=27 // pred_check_branch
              %184 = sbr.rel target = $region36
            $region35: #{_lambda_.6} parent=27 // pred_region
              loop: start=0, step=1, limit=1
              $region37: #{_lambda_.6} parent=35 // loop_pre_header
                _
              $region38: #{_lambda_.6} parent=35 // loop_header
                %s187 = sphi 0, %s191
                %p188 = scmp.ge.s32.totalorder %s187, 1
                %s192 = sphi %s178, %s178
                %s193 = sphi %s174, %s174
              $region39: #{_lambda_.6} parent=35 // loop_header_branch
                %190 = sbr.rel (%p188) target = $region43
              $region40: #{_lambda_.6} parent=35 // loop_body
                %v194 = vld [vmem:[%s192] sm:$0xff]
                %195 = vst [vmem:[%s193] sm:$0xff] %v194
                %v196 = vld [vmem:[%s192 + $0x10] sm:$0xff]
                %197 = vst [vmem:[%s193 + $0x8] sm:$0xff] %v196
              $region41: #{_lambda_.6} parent=35 // loop_footer
                %s191 = sadd.s32 1, %s187
              $region42: #{_lambda_.6} parent=35 // loop_footer_branch
                %186 = sbr.rel target = $region38
              $region43: #{_lambda_.6} parent=35 // loop_exit
                _
            $region36: #{_lambda_.6} parent=27 // pred_fallthru
              _
          $region28: #{_lambda_.6} parent=23 // pred_fallthru
            _
          %214 = vnop
        $region24: #{_lambda_.6} parent=15 // pred_fallthru
          _
        // Predicated region
        $region59: #{_lambda_.6} parent=15 // pred_check
          %p215 = pneg %p104
        $region60: #{_lambda_.6} parent=15 // pred_check_branch
          %217 = sbr.rel (%p215) target = $region62
        $region61: #{_lambda_.6} parent=15 // pred_region
          %p218 = scmp.lt.s32.totalorder %s17, 1
          %s219 = scalar_select %p218, %s17, 1
          %s220 = smul.addr %s219, 2
          %s221 = scalar_lea.vmem %s2, %s220
        $region62: #{_lambda_.6} parent=15 // pred_fallthru
          _
      $region16: #{_lambda_.6} parent=5 // pred_fallthru
        _
      %p222 = scmp.le.s32.totalorder 1, %s9
      %p223 = scmp.lt.s32.totalorder %s9, 17
      %p224 = pnand %p222, %p223
      %p225 = pneg %p224
      // Predicated region
      $region63: #{_lambda_.6} parent=5 // pred_check
        _
      $region64: #{_lambda_.6} parent=5 // pred_check_branch
        %227 = sbr.rel (%p224) target = $region66
      $region65: #{_lambda_.6} parent=5 // pred_region
        %s228 = ssub.s32 %s9, 1
        %s229 = sand.u32 %s71, 1
        %s230 = sand.u32 %s71, 1
        %s231 = smul.addr %s230, 16
        %s232 = scalar_lea.vmem [#allocation3], %s231
        // Predicated region
        $region67: #{_lambda_.6} parent=65 // pred_check
          %p233 = pneg %p84
        $region68: #{_lambda_.6} parent=65 // pred_check_branch
          %235 = sbr.rel (%p233) target = $region70
        $region69: #{_lambda_.6} parent=65 // pred_region
          _
        $region70: #{_lambda_.6} parent=65 // pred_fallthru
          _
        %p236 = scmp.lt.s32.totalorder %s19, 3
        %s237 = scalar_select %p236, %s19, 3
        %p238 = scmp.lt.s32.totalorder %s21, 1
        %s239 = scalar_select %p238, %s21, 1
        %s240 = smul.addr %s237, 2
        %s241 = sadd.s32 %s239, %s240
        %s242 = smul.addr %s241, 4
        %s243 = scalar_lea.vmem %s0, %s242
        %p244 = pneg %p56
        %p245 = pneg %p53
        %s246 = sand.u32 %s71, 1
        %s247 = sand.u32 %s71, 1
        %s248 = smul.addr %s247, 16
        %s249 = scalar_lea.vmem [#allocation3], %s248
        %p250 = pneg %p84
        %p251 = pneg %p81
        %p252 = scmp.lt.s32.totalorder %s20, 1
        %s253 = scalar_select %p252, %s20, 1
        %s254 = smul.addr %s253, 2
        %s255 = scalar_lea.vmem %s2, %s254
        %p256 = pneg %p110
        %p257 = pneg %p107
        %p258 = pneg %p138
        %p259 = pneg %p135
        %s260 = sand.u32 %s125, 1
        %s261 = sand.u32 %s125, 1
        %s262 = smul.addr %s261, 16
        %s263 = scalar_lea.vmem [#allocation4], %s262
        %p264 = scmp.lt.s32.totalorder %s19, 3
        %s265 = scalar_select %p264, %s19, 3
        %p266 = scmp.lt.s32.totalorder %s21, 1
        %s267 = scalar_select %p266, %s21, 1
        %s268 = smul.addr %s265, 2
        %s269 = sadd.s32 %s267, %s268
        %s270 = smul.addr %s269, 4
        %s271 = scalar_lea.vmem %s0, %s270
        %p272 = scmp.lt.s32.totalorder %s20, 1
        %s273 = scalar_select %p272, %s20, 1
        %s274 = smul.addr %s273, 2
        %s275 = scalar_lea.vmem %s2, %s274
        %p276 = scmp.eq.s32.totalorder %s21, 0
        // Predicated region
        $region71: #{_lambda_.6} parent=65 // pred_check
          %p277 = pneg %p276
        $region72: #{_lambda_.6} parent=65 // pred_check_branch
          %279 = sbr.rel (%p277) target = $region74
        $region73: #{_lambda_.6} parent=65 // pred_region
          %280 = vst [vmem:[#allocation2] sm:$0xff] 0.0
          %281 = vst [vmem:[#allocation2 + $0x8] sm:$0x3] 0.0
        $region74: #{_lambda_.6} parent=65 // pred_fallthru
          _
        %v282 = vld [vmem:[%s271] sm:$0x7]
        %283 = vxpose.xlu0.b32.start [1/16] %v282, 128
        %284 = vxpose.xlu0.b32.cont [2/16] 0.0, 128
        %285 = vxpose.xlu0.b32.cont [3/16] 0.0, 128
        %286 = vxpose.xlu0.b32.cont [4/16] 0.0, 128
        %287 = vxpose.xlu0.b32.cont [5/16] 0.0, 128
        %288 = vxpose.xlu0.b32.cont [6/16] 0.0, 128
        %289 = vxpose.xlu0.b32.cont [7/16] 0.0, 128
        %290 = vxpose.xlu0.b32.cont [8/16] 0.0, 128
        %291 = vxpose.xlu0.b32.cont [9/16] 0.0, 128
        %292 = vxpose.xlu0.b32.cont [10/16] 0.0, 128
        %293 = vxpose.xlu0.b32.cont [11/16] 0.0, 128
        %294 = vxpose.xlu0.b32.cont [12/16] 0.0, 128
        %295 = vxpose.xlu0.b32.cont [13/16] 0.0, 128
        %296 = vxpose.xlu0.b32.cont [14/16] 0.0, 128
        %297 = vxpose.xlu0.b32.cont [15/16] 0.0, 128
        %298 = vxpose.xlu0.b32.end [16/16] 0.0, 128
        %v299 = vpop.trf.xlu0
        %v300 = vpop.trf.xlu0
        %v301 = vpop.trf.xlu0
        %v302 = vpop.trf.xlu0
        %v303 = vpop.trf.xlu0
        %v304 = vpop.trf.xlu0
        %v305 = vpop.trf.xlu0
        %v306 = vpop.trf.xlu0
        %v307 = vpop.trf.xlu0
        %v308 = vpop.trf.xlu0
        %v309 = vpop.trf.xlu0
        %v310 = vpop.trf.xlu0
        %v311 = vpop.trf.xlu0
        %v312 = vpop.trf.xlu0
        %v313 = vpop.trf.xlu0
        %v314 = vpop.trf.xlu0
        %v315 = vmul.f32 %v299, 4.0
        %v316 = vmul.f32 %v300, 4.0
        %v317 = vmul.f32 %v301, 4.0
        %v318 = vmul.f32 %v302, 4.0
        %v319 = vmul.f32 %v303, 4.0
        %v320 = vmul.f32 %v304, 4.0
        %v321 = vmul.f32 %v305, 4.0
        %v322 = vmul.f32 %v306, 4.0
        %v323 = vmul.f32 %v307, 4.0
        %v324 = vmul.f32 %v308, 4.0
        %v325 = vmul.f32 %v309, 4.0
        %v326 = vmul.f32 %v310, 4.0
        %v327 = vmul.f32 %v311, 4.0
        %v328 = vmul.f32 %v312, 4.0
        %v329 = vmul.f32 %v313, 4.0
        %v330 = vmul.f32 %v314, 4.0
        %v332 = vrot.slane %v282, 1
        %334 = vxpose.xlu0.b32.start [1/16] %v332, 128
        %335 = vxpose.xlu0.b32.cont [2/16] 0.0, 128
        %336 = vxpose.xlu0.b32.cont [3/16] 0.0, 128
        %337 = vxpose.xlu0.b32.cont [4/16] 0.0, 128
        %338 = vxpose.xlu0.b32.cont [5/16] 0.0, 128
        %339 = vxpose.xlu0.b32.cont [6/16] 0.0, 128
        %340 = vxpose.xlu0.b32.cont [7/16] 0.0, 128
        %341 = vxpose.xlu0.b32.cont [8/16] 0.0, 128
        %342 = vxpose.xlu0.b32.cont [9/16] 0.0, 128
        %343 = vxpose.xlu0.b32.cont [10/16] 0.0, 128
        %344 = vxpose.xlu0.b32.cont [11/16] 0.0, 128
        %345 = vxpose.xlu0.b32.cont [12/16] 0.0, 128
        %346 = vxpose.xlu0.b32.cont [13/16] 0.0, 128
        %347 = vxpose.xlu0.b32.cont [14/16] 0.0, 128
        %348 = vxpose.xlu0.b32.cont [15/16] 0.0, 128
        %349 = vxpose.xlu0.b32.end [16/16] 0.0, 128
        %v350 = vpop.trf.xlu0
        %v351 = vpop.trf.xlu0
        %v352 = vpop.trf.xlu0
        %v353 = vpop.trf.xlu0
        %v354 = vpop.trf.xlu0
        %v355 = vpop.trf.xlu0
        %v356 = vpop.trf.xlu0
        %v357 = vpop.trf.xlu0
        %v358 = vpop.trf.xlu0
        %v359 = vpop.trf.xlu0
        %v360 = vpop.trf.xlu0
        %v361 = vpop.trf.xlu0
        %v362 = vpop.trf.xlu0
        %v363 = vpop.trf.xlu0
        %v364 = vpop.trf.xlu0
        %v365 = vpop.trf.xlu0
        %v366 = vmul.f32 %v350, 4.0
        %v367 = vmul.f32 %v351, 4.0
        %v368 = vmul.f32 %v352, 4.0
        %v369 = vmul.f32 %v353, 4.0
        %v370 = vmul.f32 %v354, 4.0
        %v371 = vmul.f32 %v355, 4.0
        %v372 = vmul.f32 %v356, 4.0
        %v373 = vmul.f32 %v357, 4.0
        %v374 = vmul.f32 %v358, 4.0
        %v375 = vmul.f32 %v359, 4.0
        %v376 = vmul.f32 %v360, 4.0
        %v377 = vmul.f32 %v361, 4.0
        %v378 = vmul.f32 %v362, 4.0
        %v379 = vmul.f32 %v363, 4.0
        %v380 = vmul.f32 %v364, 4.0
        %v381 = vmul.f32 %v365, 4.0
        %v382 = vld [vmem:[%s275] sm:$0x1]
        %v383 = vld [vmem:[%s275 + $0x1] sm:$0x1]
        %385 = vset.pattern.permute.xlu0 0
        %386 = vperm.xlu0 %385, %v315
        %v387 = vpop.permute.xlu0 %386
        %390 = vset.pattern.permute.xlu0 0
        %391 = vperm.xlu0 %390, %v316
        %v392 = vpop.permute.xlu0 %391
        %395 = vset.pattern.permute.xlu0 0
        %396 = vperm.xlu0 %395, %v317
        %v397 = vpop.permute.xlu0 %396
        %400 = vset.pattern.permute.xlu0 0
        %401 = vperm.xlu0 %400, %v318
        %v402 = vpop.permute.xlu0 %401
        %405 = vset.pattern.permute.xlu0 0
        %406 = vperm.xlu0 %405, %v319
        %v407 = vpop.permute.xlu0 %406
        %410 = vset.pattern.permute.xlu0 0
        %411 = vperm.xlu0 %410, %v320
        %v412 = vpop.permute.xlu0 %411
        %415 = vset.pattern.permute.xlu0 0
        %416 = vperm.xlu0 %415, %v321
        %v417 = vpop.permute.xlu0 %416
        %420 = vset.pattern.permute.xlu0 0
        %421 = vperm.xlu0 %420, %v322
        %v422 = vpop.permute.xlu0 %421
        %425 = vset.pattern.permute.xlu0 0
        %426 = vperm.xlu0 %425, %v323
        %v427 = vpop.permute.xlu0 %426
        %430 = vset.pattern.permute.xlu0 0
        %431 = vperm.xlu0 %430, %v324
        %v432 = vpop.permute.xlu0 %431
        %435 = vset.pattern.permute.xlu0 0
        %436 = vperm.xlu0 %435, %v325
        %v437 = vpop.permute.xlu0 %436
        %440 = vset.pattern.permute.xlu0 0
        %441 = vperm.xlu0 %440, %v326
        %v442 = vpop.permute.xlu0 %441
        %445 = vset.pattern.permute.xlu0 0
        %446 = vperm.xlu0 %445, %v327
        %v447 = vpop.permute.xlu0 %446
        %450 = vset.pattern.permute.xlu0 0
        %451 = vperm.xlu0 %450, %v328
        %v452 = vpop.permute.xlu0 %451
        %455 = vset.pattern.permute.xlu0 0
        %456 = vperm.xlu0 %455, %v329
        %v457 = vpop.permute.xlu0 %456
        %460 = vset.pattern.permute.xlu0 0
        %461 = vperm.xlu0 %460, %v330
        %v462 = vpop.permute.xlu0 %461
        %v464 = vlaneseq
        %v465 = vshrl.u32 %v464, 7
        %v466 = vsub.s32 0, %v465
        %v467 = vrot.slane %v382, %v466
        %v468 = vsub.f32 %v387, %v467
        %v469 = vsub.f32 %v392, %v467
        %v470 = vsub.f32 %v397, %v467
        %v471 = vsub.f32 %v402, %v467
        %v472 = vsub.f32 %v407, %v467
        %v473 = vsub.f32 %v412, %v467
        %v474 = vsub.f32 %v417, %v467
        %v475 = vsub.f32 %v422, %v467
        %v476 = vsub.f32 %v427, %v467
        %v477 = vsub.f32 %v432, %v467
        %v478 = vsub.f32 %v437, %v467
        %v479 = vsub.f32 %v442, %v467
        %v480 = vsub.f32 %v447, %v467
        %v481 = vsub.f32 %v452, %v467
        %v482 = vsub.f32 %v457, %v467
        %v483 = vsub.f32 %v462, %v467
        %485 = vset.pattern.permute.xlu0 0
        %486 = vperm.xlu0 %485, %v366
        %v487 = vpop.permute.xlu0 %486
        %490 = vset.pattern.permute.xlu0 0
        %491 = vperm.xlu0 %490, %v367
        %v492 = vpop.permute.xlu0 %491
        %495 = vset.pattern.permute.xlu0 0
        %496 = vperm.xlu0 %495, %v368
        %v497 = vpop.permute.xlu0 %496
        %500 = vset.pattern.permute.xlu0 0
        %501 = vperm.xlu0 %500, %v369
        %v502 = vpop.permute.xlu0 %501
        %505 = vset.pattern.permute.xlu0 0
        %506 = vperm.xlu0 %505, %v370
        %v507 = vpop.permute.xlu0 %506
        %510 = vset.pattern.permute.xlu0 0
        %511 = vperm.xlu0 %510, %v371
        %v512 = vpop.permute.xlu0 %511
        %515 = vset.pattern.permute.xlu0 0
        %516 = vperm.xlu0 %515, %v372
        %v517 = vpop.permute.xlu0 %516
        %520 = vset.pattern.permute.xlu0 0
        %521 = vperm.xlu0 %520, %v373
        %v522 = vpop.permute.xlu0 %521
        %525 = vset.pattern.permute.xlu0 0
        %526 = vperm.xlu0 %525, %v374
        %v527 = vpop.permute.xlu0 %526
        %530 = vset.pattern.permute.xlu0 0
        %531 = vperm.xlu0 %530, %v375
        %v532 = vpop.permute.xlu0 %531
        %535 = vset.pattern.permute.xlu0 0
        %536 = vperm.xlu0 %535, %v376
        %v537 = vpop.permute.xlu0 %536
        %540 = vset.pattern.permute.xlu0 0
        %541 = vperm.xlu0 %540, %v377
        %v542 = vpop.permute.xlu0 %541
        %545 = vset.pattern.permute.xlu0 0
        %546 = vperm.xlu0 %545, %v378
        %v547 = vpop.permute.xlu0 %546
        %550 = vset.pattern.permute.xlu0 0
        %551 = vperm.xlu0 %550, %v379
        %v552 = vpop.permute.xlu0 %551
        %555 = vset.pattern.permute.xlu0 0
        %556 = vperm.xlu0 %555, %v380
        %v557 = vpop.permute.xlu0 %556
        %560 = vset.pattern.permute.xlu0 0
        %561 = vperm.xlu0 %560, %v381
        %v562 = vpop.permute.xlu0 %561
        %v564 = vlaneseq
        %v565 = vshrl.u32 %v564, 7
        %v566 = vsub.s32 0, %v565
        %v567 = vrot.slane %v383, %v566
        %v568 = vsub.f32 %v487, %v567
        %v569 = vsub.f32 %v492, %v567
        %v570 = vsub.f32 %v497, %v567
        %v571 = vsub.f32 %v502, %v567
        %v572 = vsub.f32 %v507, %v567
        %v573 = vsub.f32 %v512, %v567
        %v574 = vsub.f32 %v517, %v567
        %v575 = vsub.f32 %v522, %v567
        %v576 = vsub.f32 %v527, %v567
        %v577 = vsub.f32 %v532, %v567
        %v578 = vsub.f32 %v537, %v567
        %v579 = vsub.f32 %v542, %v567
        %v580 = vsub.f32 %v547, %v567
        %v581 = vsub.f32 %v552, %v567
        %v582 = vsub.f32 %v557, %v567
        %v583 = vsub.f32 %v562, %v567
        %v584 = vmul.f32 %v468, %v468
        %v585 = vmul.f32 %v469, %v469
        %v586 = vmul.f32 %v470, %v470
        %v587 = vmul.f32 %v471, %v471
        %v588 = vmul.f32 %v472, %v472
        %v589 = vmul.f32 %v473, %v473
        %v590 = vmul.f32 %v474, %v474
        %v591 = vmul.f32 %v475, %v475
        %v592 = vmul.f32 %v476, %v476
        %v593 = vmul.f32 %v477, %v477
        %v594 = vmul.f32 %v478, %v478
        %v595 = vmul.f32 %v479, %v479
        %v596 = vmul.f32 %v480, %v480
        %v597 = vmul.f32 %v481, %v481
        %v598 = vmul.f32 %v482, %v482
        %v599 = vmul.f32 %v483, %v483
        %v600 = vmul.f32 %v568, %v568
        %v601 = vmul.f32 %v569, %v569
        %v602 = vmul.f32 %v570, %v570
        %v603 = vmul.f32 %v571, %v571
        %v604 = vmul.f32 %v572, %v572
        %v605 = vmul.f32 %v573, %v573
        %v606 = vmul.f32 %v574, %v574
        %v607 = vmul.f32 %v575, %v575
        %v608 = vmul.f32 %v576, %v576
        %v609 = vmul.f32 %v577, %v577
        %v610 = vmul.f32 %v578, %v578
        %v611 = vmul.f32 %v579, %v579
        %v612 = vmul.f32 %v580, %v580
        %v613 = vmul.f32 %v581, %v581
        %v614 = vmul.f32 %v582, %v582
        %v615 = vmul.f32 %v583, %v583
        %v616 = vadd.f32 %v584, %v600
        %v617 = vadd.f32 %v585, %v601
        %v618 = vadd.f32 %v586, %v602
        %v619 = vadd.f32 %v587, %v603
        %v620 = vadd.f32 %v588, %v604
        %v621 = vadd.f32 %v589, %v605
        %v622 = vadd.f32 %v590, %v606
        %v623 = vadd.f32 %v591, %v607
        %v624 = vadd.f32 %v592, %v608
        %v625 = vadd.f32 %v593, %v609
        %v626 = vadd.f32 %v594, %v610
        %v627 = vadd.f32 %v595, %v611
        %v628 = vadd.f32 %v596, %v612
        %v629 = vadd.f32 %v597, %v613
        %v630 = vadd.f32 %v598, %v614
        %v631 = vadd.f32 %v599, %v615
        %v632 = vsub.f32 1.0, %v616
        %v633 = vsub.f32 1.0, %v617
        %v634 = vsub.f32 1.0, %v618
        %v635 = vsub.f32 1.0, %v619
        %v636 = vsub.f32 1.0, %v620
        %v637 = vsub.f32 1.0, %v621
        %v638 = vsub.f32 1.0, %v622
        %v639 = vsub.f32 1.0, %v623
        %v640 = vsub.f32 1.0, %v624
        %v641 = vsub.f32 1.0, %v625
        %v642 = vsub.f32 1.0, %v626
        %v643 = vsub.f32 1.0, %v627
        %v644 = vsub.f32 1.0, %v628
        %v645 = vsub.f32 1.0, %v629
        %v646 = vsub.f32 1.0, %v630
        %v647 = vsub.f32 1.0, %v631
        %v648 = vmax.f32 %v632, 0.0
        %v649 = vmax.f32 %v633, 0.0
        %v650 = vmax.f32 %v634, 0.0
        %v651 = vmax.f32 %v635, 0.0
        %v652 = vmax.f32 %v636, 0.0
        %v653 = vmax.f32 %v637, 0.0
        %v654 = vmax.f32 %v638, 0.0
        %v655 = vmax.f32 %v639, 0.0
        %v656 = vmax.f32 %v640, 0.0
        %v657 = vmax.f32 %v641, 0.0
        %v658 = vmax.f32 %v642, 0.0
        %v659 = vmax.f32 %v643, 0.0
        %v660 = vmax.f32 %v644, 0.0
        %v661 = vmax.f32 %v645, 0.0
        %v662 = vmax.f32 %v646, 0.0
        %v663 = vmax.f32 %v647, 0.0
        %v664 = vmul.f32 %v648, %v648
        %v665 = vmul.f32 %v649, %v649
        %v666 = vmul.f32 %v650, %v650
        %v667 = vmul.f32 %v651, %v651
        %v668 = vmul.f32 %v652, %v652
        %v669 = vmul.f32 %v653, %v653
        %v670 = vmul.f32 %v654, %v654
        %v671 = vmul.f32 %v655, %v655
        %v672 = vmul.f32 %v656, %v656
        %v673 = vmul.f32 %v657, %v657
        %v674 = vmul.f32 %v658, %v658
        %v675 = vmul.f32 %v659, %v659
        %v676 = vmul.f32 %v660, %v660
        %v677 = vmul.f32 %v661, %v661
        %v678 = vmul.f32 %v662, %v662
        %v679 = vmul.f32 %v663, %v663
        %v680 = vld [vmem:[#allocation2] sm:$0xff]
        %v681 = vld [vmem:[#allocation2 + $0x8] sm:$0x3]
        %v682 = vld [vmem:[%s232] sm:$0xff]
        %v683 = vld [vmem:[%s232 + $0x8] sm:$0x3]
        %684 = vmatprep.subr.mxu0 0.0
        %685 = vmatpush1.msra.mxu0 %v664
        %686 = vmatprep.subr.mxu0 0.0
        %687 = vmatpush1.msra.mxu0 %v665
        %688 = vmatprep.subr.mxu0 0.0
        %689 = vmatpush1.msra.mxu0 %v666
        %690 = vmatprep.subr.mxu0 0.0
        %691 = vmatpush1.msra.mxu0 %v667
        %692 = vmatprep.subr.mxu0 0.0
        %693 = vmatpush1.msra.mxu0 %v668
        %694 = vmatprep.subr.mxu0 0.0
        %695 = vmatpush1.msra.mxu0 %v669
        %696 = vmatprep.subr.mxu0 0.0
        %697 = vmatpush1.msra.mxu0 %v670
        %698 = vmatprep.subr.mxu0 0.0
        %699 = vmatpush1.msra.mxu0 %v671
        %700 = vmatprep.subr.mxu0 0.0
        %701 = vmatpush1.msra.mxu0 %v672
        %702 = vmatprep.subr.mxu0 0.0
        %703 = vmatpush1.msra.mxu0 %v673
        %704 = vmatprep.subr.mxu0 0.0
        %705 = vmatpush1.msra.mxu0 %v674
        %706 = vmatprep.subr.mxu0 0.0
        %707 = vmatpush1.msra.mxu0 %v675
        %708 = vmatprep.subr.mxu0 0.0
        %709 = vmatpush1.msra.mxu0 %v676
        %710 = vmatprep.subr.mxu0 0.0
        %711 = vmatpush1.msra.mxu0 %v677
        %712 = vmatprep.subr.mxu0 0.0
        %713 = vmatpush1.msra.mxu0 %v678
        %714 = vmatprep.subr.mxu0 0.0
        %715 = vmatpush1.msra.mxu0 %v679
        %716 = vmatprep.subr.mxu0 0.0
        %717 = vmatpush1.msra.mxu0 0.0
        %718 = vmatprep.subr.mxu0 0.0
        %719 = vmatpush1.msra.mxu0 0.0
        %720 = vmatprep.subr.mxu0 0.0
        %721 = vmatpush1.msra.mxu0 0.0
        %722 = vmatprep.subr.mxu0 0.0
        %723 = vmatpush1.msra.mxu0 0.0
        %724 = vmatprep.subr.mxu0 0.0
        %725 = vmatpush1.msra.mxu0 0.0
        %726 = vmatprep.subr.mxu0 0.0
        %727 = vmatpush1.msra.mxu0 0.0
        %728 = vmatprep.subr.mxu0 0.0
        %729 = vmatpush1.msra.mxu0 0.0
        %730 = vmatprep.subr.mxu0 0.0
        %731 = vmatpush1.msra.mxu0 0.0
        %732 = vmatprep.subr.mxu0 0.0
        %733 = vmatpush1.msra.mxu0 0.0
        %734 = vmatprep.subr.mxu0 0.0
        %735 = vmatpush1.msra.mxu0 0.0
        %736 = vmatprep.subr.mxu0 0.0
        %737 = vmatpush1.msra.mxu0 0.0
        %738 = vmatprep.subr.mxu0 0.0
        %739 = vmatpush1.msra.mxu0 0.0
        %740 = vmatprep.subr.mxu0 0.0
        %741 = vmatpush1.msra.mxu0 0.0
        %742 = vmatprep.subr.mxu0 0.0
        %743 = vmatpush1.msra.mxu0 0.0
        %744 = vmatprep.subr.mxu0 0.0
        %745 = vmatpush1.msra.mxu0 0.0
        %746 = vmatprep.subr.mxu0 0.0
        %747 = vmatpush1.msra.mxu0 0.0
        %748 = vmatprep.mubr.f32.mxu0 0.0
        %749 = vmatmul.mubr.f32.gmra.mrb[0].mxu0 %v682
        %v750 = vpop.f32.mrb[0].mxu0
        %v751 = vadd.f32 0.0, %v750
        %v752 = vpop.f32.mrb[0].mxu0
        %753 = vmatprep.mubr.f32.mxu0 0.0
        %754 = vmatmul.mubr.f32.gmra.mrb[0].mxu0 %v683
        %v755 = vpop.f32.mrb[0].mxu0
        %v756 = vadd.f32 0.0, %v755
        %v757 = vpop.f32.mrb[0].mxu0
        %758 = vdwg.mxu0
        %v759 = vadd.f32 %v680, %v751
        %v760 = vadd.f32 %v681, %v756
        %761 = vst [vmem:[#allocation2] sm:$0xff] %v759
        %762 = vst [vmem:[#allocation2 + $0x8] sm:$0x3] %v760
        %p763 = scmp.eq.s32.totalorder %s21, 1
        // Predicated region
        $region75: #{_lambda_.6} parent=65 // pred_check
          %p764 = pneg %p763
        $region76: #{_lambda_.6} parent=65 // pred_check_branch
          %766 = sbr.rel (%p764) target = $region78
        $region77: #{_lambda_.6} parent=65 // pred_region
          %v767 = vld [vmem:[#allocation2] sm:$0xff]
          %v768 = vld [vmem:[#allocation2 + $0x8] sm:$0x3]
          %v769 = vadd.f32 %v768, 1e-08
          %v770 = vrcp.pop %v769
          %v771 = vlaneseq
          %v772 = vshrl.u32 %v771, 7
          %v773 = vsub.s32 1, %v772
          %v774 = vrot.slane %v770, %v773
          %v775 = vmul.f32 %v767, %v774
          %v776 = vmul.f32 %v768, %v774
          %777 = vst [vmem:[%s263] sm:$0xff] %v775
          %778 = vst [vmem:[%s263 + $0x8] sm:$0x1] %v776
        $region78: #{_lambda_.6} parent=65 // pred_fallthru
          _
        %s779 = sand.u32 %s125, 1
        %s780 = sand.u32 %s125, 1
        %s781 = smul.addr %s780, 16
        %s782 = scalar_lea.vmem [#allocation4], %s781
        // Predicated region
        $region79: #{_lambda_.6} parent=65 // pred_check
          %p783 = pneg %p135
        $region80: #{_lambda_.6} parent=65 // pred_check_branch
          %785 = sbr.rel (%p783) target = $region82
        $region81: #{_lambda_.6} parent=65 // pred_region
          %s786 = smul.addr %s19, 4
          %s787 = sadd.s32 %s20, %s786
          %s788 = smul.addr %s787, 8
          %s789 = scalar_lea.vmem %s3, %s788
          // Predicated region
          $region83: #{_lambda_.6} parent=81 // pred_check
            _
          $region84: #{_lambda_.6} parent=81 // pred_check_branch
            %791 = sbr.rel (0) target = $region86
          $region85: #{_lambda_.6} parent=81 // pred_region
            // Predicated region
            $region87: #{_lambda_.6} parent=85 // pred_check
              _
            $region88: #{_lambda_.6} parent=85 // pred_check_branch
              %793 = sbr.rel (0) target = $region90
            $region89: #{_lambda_.6} parent=85 // pred_region
              // Predicated region
              $region102: #{_lambda_.6} parent=89 // pred_check
                _
              $region103: #{_lambda_.6} parent=89 // pred_check_branch
                %810 = sbr.rel (0) target = $region105
              $region104: #{_lambda_.6} parent=89 // pred_region
                loop: start=0, step=1, limit=1
                $region106: #{_lambda_.6} parent=104 // loop_pre_header
                  _
                $region107: #{_lambda_.6} parent=104 // loop_header
                  %s812 = sphi 0, %s816
                  %p813 = scmp.ge.s32.totalorder %s812, 1
                  %s817 = sphi %s782, %s782
                  %s818 = sphi %s789, %s789
                $region108: #{_lambda_.6} parent=104 // loop_header_branch
                  %815 = sbr.rel (%p813) target = $region112
                $region109: #{_lambda_.6} parent=104 // loop_body
                  %v819 = vld [vmem:[%s817] sm:$0xff]
                  %820 = vst [vmem:[%s818] sm:$0xff] %v819
                  %v821 = vld [vmem:[%s817 + $0x8] sm:$0xff]
                  %822 = vst [vmem:[%s818 + $0x10] sm:$0xff] %v821
                $region110: #{_lambda_.6} parent=104 // loop_footer
                  %s816 = sadd.s32 1, %s812
                $region111: #{_lambda_.6} parent=104 // loop_footer_branch
                  %811 = sbr.rel target = $region107
                $region112: #{_lambda_.6} parent=104 // loop_exit
                  _
              $region105: #{_lambda_.6} parent=89 // pred_fallthru
                _
              // Predicated region
              $region113: #{_lambda_.6} parent=89 // pred_check
                _
              $region114: #{_lambda_.6} parent=89 // pred_check_branch
                %824 = sbr.rel target = $region116
              $region115: #{_lambda_.6} parent=89 // pred_region
                _
              $region116: #{_lambda_.6} parent=89 // pred_fallthru
                _
            $region90: #{_lambda_.6} parent=85 // pred_fallthru
              _
            // Predicated region
            $region91: #{_lambda_.6} parent=85 // pred_check
              _
            $region92: #{_lambda_.6} parent=85 // pred_check_branch
              %795 = sbr.rel target = $region94
            $region93: #{_lambda_.6} parent=85 // pred_region
              loop: start=0, step=1, limit=1
              $region95: #{_lambda_.6} parent=93 // loop_pre_header
                _
              $region96: #{_lambda_.6} parent=93 // loop_header
                %s798 = sphi 0, %s802
                %p799 = scmp.ge.s32.totalorder %s798, 1
                %s803 = sphi %s782, %s782
                %s804 = sphi %s789, %s789
              $region97: #{_lambda_.6} parent=93 // loop_header_branch
                %801 = sbr.rel (%p799) target = $region101
              $region98: #{_lambda_.6} parent=93 // loop_body
                %v805 = vld [vmem:[%s803] sm:$0xff]
                %806 = vst [vmem:[%s804] sm:$0xff] %v805
                %v807 = vld [vmem:[%s803 + $0x8] sm:$0xff]
                %808 = vst [vmem:[%s804 + $0x10] sm:$0xff] %v807
              $region99: #{_lambda_.6} parent=93 // loop_footer
                %s802 = sadd.s32 1, %s798
              $region100: #{_lambda_.6} parent=93 // loop_footer_branch
                %797 = sbr.rel target = $region96
              $region101: #{_lambda_.6} parent=93 // loop_exit
                _
            $region94: #{_lambda_.6} parent=85 // pred_fallthru
              _
          $region86: #{_lambda_.6} parent=81 // pred_fallthru
            _
          %825 = vnop
        $region82: #{_lambda_.6} parent=65 // pred_fallthru
          _
      $region66: #{_lambda_.6} parent=5 // pred_fallthru
        _
      %p826 = scmp.le.s32.totalorder 2, %s9
      // Predicated region
      $region117: #{_lambda_.6} parent=5 // pred_check
        %p827 = pneg %p826
      $region118: #{_lambda_.6} parent=5 // pred_check_branch
        %829 = sbr.rel (%p827) target = $region120
      $region119: #{_lambda_.6} parent=5 // pred_region
        %s830 = ssub.s32 %s9, 2
        // Predicated region
        $region121: #{_lambda_.6} parent=119 // pred_check
          %p831 = pneg %p141
        $region122: #{_lambda_.6} parent=119 // pred_check_branch
          %833 = sbr.rel (%p831) target = $region124
        $region123: #{_lambda_.6} parent=119 // pred_region
          %s834 = sand.u32 %s126, 1
          %s835 = sand.u32 %s126, 1
          %s836 = smul.addr %s835, 16
          %s837 = scalar_lea.vmem [#allocation4], %s836
        $region124: #{_lambda_.6} parent=119 // pred_fallthru
          _
      $region120: #{_lambda_.6} parent=5 // pred_fallthru
        _
    $region6: #{_lambda_.6} parent=1 // loop_footer
      %s13 = sadd.s32 1, %s9
    $region7: #{_lambda_.6} parent=1 // loop_footer_branch
      %8 = sbr.rel target = $region3
    $region8: #{_lambda_.6} parent=1 // loop_exit
      _

// kernel: _lambda_.7
$region0: #{_lambda_.7}
  #allocation0 [shape = 'u32[]', space=smem, size = 0x4, offset = 0x4, fixed_abs, tag = 'smem constant byte address 0x4 - core index']
  #allocation1 [shape = 'u32[144,128]{1,0:T(1,128)}', space=vmem, size = 0x12000, scoped, tag = 'internal scratch']
  %s0 = inlined_call_operand.vmem [shape: f32[2,8,256], index: 0, kind: input, shape index: {}]
  %s1 = inlined_call_operand.vmem [shape: f32[3,8], index: 1, kind: input, shape index: {}]
  %s2 = inlined_call_operand.vmem [shape: f32[3,1], index: 2, kind: input, shape index: {}]
  %s3 = inlined_call_operand.vmem [shape: f32[2,3,256], index: 3, kind: output, shape index: {}]
  %s4 = sld [smem:[#allocation0]]
  $region45: #{_lambda_.7} parent=0
    _
  %s6 = ssub.s32 1, %s4
  %s7 = scalar_select 0, %s6, %s4
  loop: start=0, step=1, limit=4
  $region2: #{_lambda_.7} parent=0 // loop_pre_header
    _
  $region3: #{_lambda_.7} parent=0 // loop_header
    %s9 = sphi 0, %s13
    %p10 = scmp.ge.s32.totalorder %s9, 4
    %s16 = sphi 0, %s28
    %s17 = sphi 0, %s24
    %s18 = sphi 0, %s16
    %s19 = sphi 0, %s17
    %s20 = sphi 0, %s18
    %s21 = sphi 0, %s19
    %s33 = sphi 0, %s35
    %s36 = sphi 0, %s33
    %s37 = sphi 0, %s36
    %s53 = sphi 0, %s37
    %s57 = sphi 0, %s57
    %s59 = sphi 0, %s57
    %s60 = sphi 0, %s59
    %s74 = sphi 0, %s60
    %s78 = sphi 0, %s78
    %s80 = sphi 0, %s78
    %s81 = sphi 0, %s80
    %s95 = sphi 0, %s81
    %s103 = sphi 0, %s105
    %s106 = sphi 0, %s103
    %s107 = sphi 0, %s106
    %s123 = sphi 0, %s107
  $region4: #{_lambda_.7} parent=0 // loop_header_branch
    %12 = sbr.rel (%p10) target = $region8
  $region5: #{_lambda_.7} parent=0 // loop_body
    %s14 = ssub.s32 %s9, 1
    %s15 = ssub.s32 %s9, 2
    %s22 = sadd.s32 1, %s17
    %p23 = scmp.ge.s32.totalorder %s22, 1
    %s24 = scalar_select %p23, 0, %s22
    %s25 = sadd.s32 1, %s16
    %s26 = scalar_select %p23, %s25, %s16
    %p27 = scmp.ge.s32.totalorder %s26, 2
    %s28 = scalar_select %p27, 0, %s26
    %s29 = ssub.s32 %s16, %s28
    %s30 = ssub.s32 %s17, %s24
    %s31 = sor.u32 %s29, %s30
    %p32 = scmp.eq.s32.totalorder %s31, 0
    %s34 = sadd.s32 %s33, 1
    %s35 = scalar_select %p32, %s33, %s34
    %p38 = pneg %p32
    %p39 = scmp.eq.s32.totalorder %s9, 1
    %p40 = por %p38, %p39
    %p41 = scmp.ne.s32.totalorder %s33, %s36
    %p42 = scmp.eq.s32.totalorder %s9, 0
    %p43 = por %p41, %p42
    %p44 = scmp.ne.s32.totalorder %s33, %s36
    %p45 = scmp.eq.s32.totalorder %s14, 1
    %p46 = por %p44, %p45
    %p47 = scmp.ne.s32.totalorder %s36, %s37
    %p48 = scmp.eq.s32.totalorder %s14, 0
    %p49 = por %p47, %p48
    %p50 = scmp.ne.s32.totalorder %s36, %s37
    %p51 = scmp.eq.s32.totalorder %s15, 1
    %p52 = por %p50, %p51
    %p54 = scmp.ne.s32.totalorder %s37, %s53
    %p55 = scmp.eq.s32.totalorder %s15, 0
    %p56 = por %p54, %p55
    %s58 = sadd.s32 %s57, 1
    %p61 = scmp.eq.s32.totalorder %s9, 1
    %p62 = scmp.ne.s32.totalorder %s57, %s59
    %p63 = scmp.eq.s32.totalorder %s9, 0
    %p64 = por %p62, %p63
    %p65 = scmp.ne.s32.totalorder %s57, %s59
    %p66 = scmp.eq.s32.totalorder %s14, 1
    %p67 = por %p65, %p66
    %p68 = scmp.ne.s32.totalorder %s59, %s60
    %p69 = scmp.eq.s32.totalorder %s14, 0
    %p70 = por %p68, %p69
    %p71 = scmp.ne.s32.totalorder %s59, %s60
    %p72 = scmp.eq.s32.totalorder %s15, 1
    %p73 = por %p71, %p72
    %p75 = scmp.ne.s32.totalorder %s60, %s74
    %p76 = scmp.eq.s32.totalorder %s15, 0
    %p77 = por %p75, %p76
    %s79 = sadd.s32 %s78, 1
    %p82 = scmp.eq.s32.totalorder %s9, 1
    %p83 = scmp.ne.s32.totalorder %s78, %s80
    %p84 = scmp.eq.s32.totalorder %s9, 0
    %p85 = por %p83, %p84
    %p86 = scmp.ne.s32.totalorder %s78, %s80
    %p87 = scmp.eq.s32.totalorder %s14, 1
    %p88 = por %p86, %p87
    %p89 = scmp.ne.s32.totalorder %s80, %s81
    %p90 = scmp.eq.s32.totalorder %s14, 0
    %p91 = por %p89, %p90
    %p92 = scmp.ne.s32.totalorder %s80, %s81
    %p93 = scmp.eq.s32.totalorder %s15, 1
    %p94 = por %p92, %p93
    %p96 = scmp.ne.s32.totalorder %s81, %s95
    %p97 = scmp.eq.s32.totalorder %s15, 0
    %p98 = por %p96, %p97
    %s99 = ssub.s32 %s16, %s28
    %s100 = ssub.s32 %s17, %s24
    %s101 = sor.u32 %s99, %s100
    %p102 = scmp.eq.s32.totalorder %s101, 0
    %s104 = sadd.s32 %s103, 1
    %s105 = scalar_select %p102, %s103, %s104
    %p108 = pneg %p102
    %p109 = scmp.eq.s32.totalorder %s9, 1
    %p110 = por %p108, %p109
    %p111 = scmp.ne.s32.totalorder %s103, %s106
    %p112 = scmp.eq.s32.totalorder %s9, 0
    %p113 = por %p111, %p112
    %p114 = scmp.ne.s32.totalorder %s103, %s106
    %p115 = scmp.eq.s32.totalorder %s14, 1
    %p116 = por %p114, %p115
    %p117 = scmp.ne.s32.totalorder %s106, %s107
    %p118 = scmp.eq.s32.totalorder %s14, 0
    %p119 = por %p117, %p118
    %p120 = scmp.ne.s32.totalorder %s106, %s107
    %p121 = scmp.eq.s32.totalorder %s15, 1
    %p122 = por %p120, %p121
    %p124 = scmp.ne.s32.totalorder %s107, %s123
    %p125 = scmp.eq.s32.totalorder %s15, 0
    %p126 = por %p124, %p125
    %p127 = scmp.le.s32.totalorder 1, %s9
    %p128 = scmp.lt.s32.totalorder %s9, 3
    %p129 = pnand %p127, %p128
    %p130 = pneg %p129
    // Predicated region
    $region9: #{_lambda_.7} parent=5 // pred_check
      _
    $region10: #{_lambda_.7} parent=5 // pred_check_branch
      %132 = sbr.rel (%p129) target = $region12
    $region11: #{_lambda_.7} parent=5 // pred_region
      %s133 = ssub.s32 %s9, 1
      // Predicated region
      $region13: #{_lambda_.7} parent=11 // pred_check
        %p134 = pneg %p70
      $region14: #{_lambda_.7} parent=11 // pred_check_branch
        %136 = sbr.rel (%p134) target = $region16
      $region15: #{_lambda_.7} parent=11 // pred_region
        _
      $region16: #{_lambda_.7} parent=11 // pred_fallthru
        _
      // Predicated region
      $region17: #{_lambda_.7} parent=11 // pred_check
        %p137 = pneg %p91
      $region18: #{_lambda_.7} parent=11 // pred_check_branch
        %139 = sbr.rel (%p137) target = $region20
      $region19: #{_lambda_.7} parent=11 // pred_region
        _
      $region20: #{_lambda_.7} parent=11 // pred_fallthru
        _
    $region12: #{_lambda_.7} parent=5 // pred_fallthru
      _
    %p140 = scmp.lt.s32.totalorder %s9, 2
    // Predicated region
    $region21: #{_lambda_.7} parent=5 // pred_check
      %p141 = pneg %p140
    $region22: #{_lambda_.7} parent=5 // pred_check_branch
      %143 = sbr.rel (%p141) target = $region24
    $region23: #{_lambda_.7} parent=5 // pred_region
      // Predicated region
      $region25: #{_lambda_.7} parent=23 // pred_check
        %p144 = pneg %p43
      $region26: #{_lambda_.7} parent=23 // pred_check_branch
        %146 = sbr.rel (%p144) target = $region28
      $region27: #{_lambda_.7} parent=23 // pred_region
        %s147 = smul.u32 2, %s17
        %p148 = scmp.lt.s32.totalorder %s16, 1
        %s149 = scalar_select %p148, %s16, 1
        %p150 = scmp.lt.s32.totalorder %s147, 1
        %s151 = scalar_select %p150, %s147, 1
        %s152 = smul.addr %s149, 2
        %s153 = sadd.s32 %s151, %s152
        %s154 = smul.addr %s153, 8
        %s155 = scalar_lea.vmem %s0, %s154
        %s156 = smul.u32 2, %s17
      $region28: #{_lambda_.7} parent=23 // pred_fallthru
        _
    $region24: #{_lambda_.7} parent=5 // pred_fallthru
      _
    %p157 = scmp.le.s32.totalorder 1, %s9
    %p158 = scmp.lt.s32.totalorder %s9, 3
    %p159 = pnand %p157, %p158
    %p160 = pneg %p159
    // Predicated region
    $region29: #{_lambda_.7} parent=5 // pred_check
      _
    $region30: #{_lambda_.7} parent=5 // pred_check_branch
      %162 = sbr.rel (%p159) target = $region32
    $region31: #{_lambda_.7} parent=5 // pred_region
      %s163 = ssub.s32 %s9, 1
      %s164 = smul.u32 2, %s19
      %p165 = scmp.lt.s32.totalorder %s18, 1
      %s166 = scalar_select %p165, %s18, 1
      %p167 = scmp.lt.s32.totalorder %s164, 1
      %s168 = scalar_select %p167, %s164, 1
      %s169 = smul.addr %s166, 2
      %s170 = sadd.s32 %s168, %s169
      %s171 = smul.addr %s170, 8
      %s172 = scalar_lea.vmem %s0, %s171
      %p173 = pneg %p49
      %p174 = pneg %p46
      %p175 = pneg %p70
      %p176 = pneg %p67
      %p177 = pneg %p91
      %p178 = pneg %p88
      %p179 = pneg %p119
      %p180 = pneg %p116
      %s181 = smul.u32 2, %s19
      %p182 = scmp.lt.s32.totalorder %s18, 1
      %s183 = scalar_select %p182, %s18, 1
      %p184 = scmp.lt.s32.totalorder %s181, 1
      %s185 = scalar_select %p184, %s181, 1
      %s186 = smul.addr %s183, 2
      %s187 = sadd.s32 %s185, %s186
      %s188 = smul.addr %s187, 4
      %s189 = scalar_lea.vmem %s3, %s188
      %s190 = smul.u32 2, %s19
      %p191 = scmp.lt.s32.totalorder %s18, 1
      %s192 = scalar_select %p191, %s18, 1
      %p193 = scmp.lt.s32.totalorder %s190, 1
      %s194 = scalar_select %p193, %s190, 1
      %s195 = smul.addr %s192, 2
      %s196 = sadd.s32 %s194, %s195
      %s197 = smul.addr %s196, 8
      %s198 = scalar_lea.vmem %s0, %s197
      %s199 = smul.u32 2, %s19
      %s200 = smul.u32 2, %s19
      %p201 = scmp.lt.s32.totalorder %s18, 1
      %s202 = scalar_select %p201, %s18, 1
      %p203 = scmp.lt.s32.totalorder %s200, 1
      %s204 = scalar_select %p203, %s200, 1
      %s205 = smul.addr %s202, 2
      %s206 = sadd.s32 %s204, %s205
      %s207 = smul.addr %s206, 4
      %s208 = scalar_lea.vmem %s3, %s207
      %s209 = smul.u32 2, %s19
      %v210 = vld [vmem:[%s1] sm:$0x7]
      %v211 = vld [vmem:[%s198] sm:$0xff]
      %v212 = vld [vmem:[%s198 + $0x8] sm:$0xff]
      %v213 = vld [vmem:[%s2] sm:$0x7]
      %215 = vset.pattern.permute.xlu0 0
      %216 = vperm.xlu0 %215, %v213
      %v217 = vpop.permute.xlu0 %216
      %vm219 = vcmask 64512
      %v221 = vsel %vm219, %v210, 0
      %223 = vmatprep.subr.mxu0 %v212
      %224 = vmatpush1.msra.mxu0 %v211
      %225 = vmatprep.subr.mxu0 0.0
      %226 = vmatpush1.msra.mxu0 0.0
      %227 = vmatprep.subr.mxu0 0.0
      %228 = vmatpush1.msra.mxu0 0.0
      %229 = vmatprep.subr.mxu0 0.0
      %230 = vmatpush1.msra.mxu0 0.0
      %231 = vmatprep.subr.mxu0 0.0
      %232 = vmatpush1.msra.mxu0 0.0
      %233 = vmatprep.subr.mxu0 0.0
      %234 = vmatpush1.msra.mxu0 0.0
      %235 = vmatprep.subr.mxu0 0.0
      %236 = vmatpush1.msra.mxu0 0.0
      %237 = vmatprep.subr.mxu0 0.0
      %238 = vmatpush1.msra.mxu0 0.0
      %239 = vmatprep.subr.mxu0 0.0
      %240 = vmatpush1.msra.mxu0 0.0
      %241 = vmatprep.subr.mxu0 0.0
      %242 = vmatpush1.msra.mxu0 0.0
      %243 = vmatprep.subr.mxu0 0.0
      %244 = vmatpush1.msra.mxu0 0.0
      %245 = vmatprep.subr.mxu0 0.0
      %246 = vmatpush1.msra.mxu0 0.0
      %247 = vmatprep.subr.mxu0 0.0
      %248 = vmatpush1.msra.mxu0 0.0
      %249 = vmatprep.subr.mxu0 0.0
      %250 = vmatpush1.msra.mxu0 0.0
      %251 = vmatprep.subr.mxu0 0.0
      %252 = vmatpush1.msra.mxu0 0.0
      %253 = vmatprep.subr.mxu0 0.0
      %254 = vmatpush1.msra.mxu0 0.0
      %255 = vmatprep.subr.mxu0 0.0
      %256 = vmatpush1.msra.mxu0 0.0
      %257 = vmatprep.subr.mxu0 0.0
      %258 = vmatpush1.msra.mxu0 0.0
      %259 = vmatprep.subr.mxu0 0.0
      %260 = vmatpush1.msra.mxu0 0.0
      %261 = vmatprep.subr.mxu0 0.0
      %262 = vmatpush1.msra.mxu0 0.0
      %263 = vmatprep.subr.mxu0 0.0
      %264 = vmatpush1.msra.mxu0 0.0
      %265 = vmatprep.subr.mxu0 0.0
      %266 = vmatpush1.msra.mxu0 0.0
      %267 = vmatprep.subr.mxu0 0.0
      %268 = vmatpush1.msra.mxu0 0.0
      %269 = vmatprep.subr.mxu0 0.0
      %270 = vmatpush1.msra.mxu0 0.0
      %271 = vmatprep.subr.mxu0 0.0
      %272 = vmatpush1.msra.mxu0 0.0
      %273 = vmatprep.subr.mxu0 0.0
      %274 = vmatpush1.msra.mxu0 0.0
      %275 = vmatprep.subr.mxu0 0.0
      %276 = vmatpush1.msra.mxu0 0.0
      %277 = vmatprep.subr.mxu0 0.0
      %278 = vmatpush1.msra.mxu0 0.0
      %279 = vmatprep.subr.mxu0 0.0
      %280 = vmatpush1.msra.mxu0 0.0
      %281 = vmatprep.subr.mxu0 0.0
      %282 = vmatpush1.msra.mxu0 0.0
      %283 = vmatprep.subr.mxu0 0.0
      %284 = vmatpush1.msra.mxu0 0.0
      %285 = vmatprep.subr.mxu0 0.0
      %286 = vmatpush1.msra.mxu0 0.0
      %287 = vmatprep.mubr.f32.mxu0 0.0
      %288 = vmatmul.mubr.f32.gmra.mrb[0].mxu0 %v221
      %v289 = vpop.f32.mrb[0].mxu0
      %v290 = vadd.f32 %v217, %v289
      %v291 = vpop.f32.mrb[0].mxu0
      %v292 = vadd.f32 %v217, %v291
      %293 = vdwg.mxu0
      %v296 = vcombine.low %v290, %v292
      %298 = vst [vmem:[%s208] sm:$0x77] %v296
      %s299 = smul.u32 2, %s19
      %p300 = scmp.lt.s32.totalorder %s18, 1
      %s301 = scalar_select %p300, %s18, 1
      %p302 = scmp.lt.s32.totalorder %s299, 1
      %s303 = scalar_select %p302, %s299, 1
      %s304 = smul.addr %s301, 2
      %s305 = sadd.s32 %s303, %s304
      %s306 = smul.addr %s305, 4
      %s307 = scalar_lea.vmem %s3, %s306
      // Predicated region
      $region33: #{_lambda_.7} parent=31 // pred_check
        %p308 = pneg %p116
      $region34: #{_lambda_.7} parent=31 // pred_check_branch
        %310 = sbr.rel (%p308) target = $region36
      $region35: #{_lambda_.7} parent=31 // pred_region
        %s311 = smul.u32 2, %s19
      $region36: #{_lambda_.7} parent=31 // pred_fallthru
        _
    $region32: #{_lambda_.7} parent=5 // pred_fallthru
      _
    %p312 = scmp.le.s32.totalorder 2, %s9
    // Predicated region
    $region37: #{_lambda_.7} parent=5 // pred_check
      %p313 = pneg %p312
    $region38: #{_lambda_.7} parent=5 // pred_check_branch
      %315 = sbr.rel (%p313) target = $region40
    $region39: #{_lambda_.7} parent=5 // pred_region
      %s316 = ssub.s32 %s9, 2
      // Predicated region
      $region41: #{_lambda_.7} parent=39 // pred_check
        %p317 = pneg %p122
      $region42: #{_lambda_.7} parent=39 // pred_check_branch
        %319 = sbr.rel (%p317) target = $region44
      $region43: #{_lambda_.7} parent=39 // pred_region
        %s320 = smul.u32 2, %s21
        %p321 = scmp.lt.s32.totalorder %s20, 1
        %s322 = scalar_select %p321, %s20, 1
        %p323 = scmp.lt.s32.totalorder %s320, 1
        %s324 = scalar_select %p323, %s320, 1
        %s325 = smul.addr %s322, 2
        %s326 = sadd.s32 %s324, %s325
        %s327 = smul.addr %s326, 4
        %s328 = scalar_lea.vmem %s3, %s327
      $region44: #{_lambda_.7} parent=39 // pred_fallthru
        _
    $region40: #{_lambda_.7} parent=5 // pred_fallthru
      _
  $region6: #{_lambda_.7} parent=0 // loop_footer
    %s13 = sadd.s32 1, %s9
  $region7: #{_lambda_.7} parent=0 // loop_footer_branch
    %8 = sbr.rel target = $region3
  $region8: #{_lambda_.7} parent=0 // loop_exit
    _

</llo_original>
